<compile_context>
chip_gen: v7x
topology: tpu7x:2x2x1
jax: 0.10.0
libtpu: 0.0.40
codegen_flags: <defaults>
</compile_context>

<pallas_src>
import functools

import jax
import jax.numpy as jnp
from jax.experimental import pallas as pl
from jax.experimental.pallas import tpu as pltpu


# -----------------------------------------------------------------------------
# Parameter-slab layout (shared between packer and kernel)
# -----------------------------------------------------------------------------
def _round_up(v, m):
    return (v + m - 1) // m * m


def _slab_layout(d, c):
    """Row offsets inside the packed (rows, 128) parameter slab."""
    r_w1 = 0                              # (3*d, c)   conv1 fused weight
    r_w2 = _round_up(3 * d, 8)            # (3*c, c)   conv2 fused weight
    r_w3 = r_w2 + _round_up(3 * c, 8)     # (3*c, 2)   conv3 fused weight + value col
    r_b = r_w3 + _round_up(3 * c, 8)      # bias rows: b1 | b2 | [b3, ba]
    rows = r_b + 8
    return r_w1, r_w2, r_w3, r_b, rows


# -----------------------------------------------------------------------------
# Pallas kernel: one block = TB graphs
# -----------------------------------------------------------------------------
def _gnn_kernel(x_ref, L_ref, p_ref, drop_ref, out_ref):
    """Fused batched GNN forward.

    x_ref    : (TB, N, D)   node features
    L_ref    : (TB, N, N)   scaled Laplacian  L_hat = -A_norm  (lambda_max = 2)
    p_ref    : (rows, 128)  packed parameter slab (see _slab_layout)
    drop_ref : (TB, N, C)   inverted-dropout mask applied after conv1+relu
    out_ref  : (TB, 128)    [ choice (N lanes) | value (1 lane) | zero pad ]
    """
    x = x_ref[...]                        # (TB, N, D)
    L = L_ref[...]                        # (TB, N, N)
    drop = drop_ref[...]                  # (TB, N, C)

    TB, N, D = x.shape
    C = drop.shape[-1]
    r_w1, r_w2, r_w3, r_b, _ = _slab_layout(D, C)

    # ---- unpack parameters (static slices of the resident VMEM slab) --------
    w1 = p_ref[r_w1:r_w1 + 3 * D, 0:C]    # (3D, C)
    w2 = p_ref[r_w2:r_w2 + 3 * C, 0:C]    # (3C, C)
    w3 = p_ref[r_w3:r_w3 + 3 * C, 0:2]    # (3C, 2): col0 = conv3, col1 = value head
    bias = p_ref[r_b:r_b + 4, :]          # (4, 128)
    b1 = bias[0:1, 0:C]                   # (1, C)
    b2 = bias[1:2, 0:C]                   # (1, C)
    b3 = bias[2:3, 0:1]                   # (1, 1)
    ba = bias[2:3, 1:2]                   # (1, 1)

    def cheb_features(inp):
        """[T0, T1, T2](L_hat) applied to inp, stacked on the feature axis.

        inp: (TB, N, F) -> (TB*N, 3F), ready for one fused weight matmul.
        """
        tx1 = jnp.einsum('bnm,bmf->bnf', L, inp,
                         preferred_element_type=jnp.float32)
        tx2 = 2.0 * jnp.einsum('bnm,bmf->bnf', L, tx1,
                               preferred_element_type=jnp.float32) - inp
        cat = jnp.concatenate([inp, tx1, tx2], axis=-1)
        return cat.reshape(TB * N, 3 * inp.shape[-1])

    # ---- conv1 -> relu -> dropout -------------------------------------------
    h1 = jnp.dot(cheb_features(x), w1, preferred_element_type=jnp.float32) + b1
    h1 = jnp.maximum(h1, 0.0).reshape(TB, N, C) * drop

    # ---- conv2 -> relu -------------------------------------------------------
    h2 = jnp.dot(cheb_features(h1), w2, preferred_element_type=jnp.float32) + b2
    h2 = jnp.maximum(h2, 0.0).reshape(TB, N, C)

    # ---- conv3 (col 0) + value head ride-along (col 1) -----------------------
    o3 = jnp.dot(cheb_features(h2), w3,
                 preferred_element_type=jnp.float32).reshape(TB, N, 2)

    logits = o3[:, :, 0] + b3                           # (TB, N)
    m = jnp.max(logits, axis=-1, keepdims=True)
    e = jnp.exp(logits - m)
    choice = e / jnp.sum(e, axis=-1, keepdims=True)     # softmax over nodes

    # col1 == h2 @ wa per node; mean over nodes == global_mean_pool(h2) @ wa
    value = jnp.mean(o3[:, :, 1], axis=-1, keepdims=True) + ba   # (TB, 1)

    # ---- lane-dense 128-wide output slab -------------------------------------
    pad = jnp.zeros((TB, 128 - N - 1), jnp.float32)
    out_ref[...] = jnp.concatenate([choice, value, pad], axis=-1)


# -----------------------------------------------------------------------------
# Glue: dense scaled Laplacian (PyG ChebConv sym norm, lambda_max = 2)
# -----------------------------------------------------------------------------
def build_scaled_laplacian(edge_index, edge_weight, num_nodes):
    row, col = edge_index[0], edge_index[1]
    w = edge_weight.astype(jnp.float32)
    keep = (row != col).astype(jnp.float32)   # ChebConv drops self loops
    w = w * keep
    deg = jnp.zeros((num_nodes,), jnp.float32).at[row].add(w)
    deg_inv_sqrt = jnp.where(deg > 0, 1.0 / jnp.sqrt(deg), 0.0)
    norm = deg_inv_sqrt[row] * w * deg_inv_sqrt[col]
    a_norm = jnp.zeros((num_nodes, num_nodes), jnp.float32).at[row, col].add(norm)
    # L_hat = 2/lambda_max * (I - A_norm) - I = -A_norm   (lambda_max = 2)
    return -a_norm


# -----------------------------------------------------------------------------
# Parameter init / packing
# -----------------------------------------------------------------------------
def init_params(key, d, num_nodes, K=3, c=16):
    ks = jax.random.split(key, 8)

    def glorot(k, shape):
        fan_in, fan_out = shape[-2], shape[-1]
        lim = jnp.sqrt(6.0 / (fan_in + fan_out))
        return jax.random.uniform(k, shape, jnp.float32, -lim, lim)

    return {
        "w1": glorot(ks[0], (K, d, c)),
        "b1": jax.random.uniform(ks[1], (c,), jnp.float32, -0.1, 0.1),
        "w2": glorot(ks[2], (K, c, c)),
        "b2": jax.random.uniform(ks[3], (c,), jnp.float32, -0.1, 0.1),
        "w3": glorot(ks[4], (K, c, 1)),
        "b3": jax.random.uniform(ks[5], (1,), jnp.float32, -0.5, 0.5),
        # nn.Linear(16, 1): weight (1,16) stored transposed as (16,1)
        "wa": glorot(ks[6], (c, 1)),
        "ba": jax.random.uniform(ks[7], (1,), jnp.float32, -0.5, 0.5),
        # NOTE: self.activ1 = nn.Linear(16, num_nodes) is unused in forward().
    }


def pack_params(params):
    """Pack all weights/biases into one padded (rows, 128) f32 slab."""
    K, d, c = params["w1"].shape
    r_w1, r_w2, r_w3, r_b, rows = _slab_layout(d, c)

    w1 = params["w1"].reshape(K * d, c)           # rows ordered k=0,1,2 blocks
    w2 = params["w2"].reshape(K * c, c)
    w3 = params["w3"].reshape(K * c, 1)
    # value-head column: wa applied only to the T0 (= h2) block
    wa_col = jnp.zeros((K * c, 1), jnp.float32).at[0:c, :].set(params["wa"])
    w3e = jnp.concatenate([w3, wa_col], axis=1)   # (3C, 2)

    slab = jnp.zeros((rows, 128), jnp.float32)
    slab = slab.at[r_w1:r_w1 + K * d, 0:c].set(w1)
    slab = slab.at[r_w2:r_w2 + K * c, 0:c].set(w2)
    slab = slab.at[r_w3:r_w3 + K * c, 0:2].set(w3e)
    slab = slab.at[r_b, 0:c].set(params["b1"])
    slab = slab.at[r_b + 1, 0:c].set(params["b2"])
    slab = slab.at[r_b + 2, 0].set(params["b3"][0])
    slab = slab.at[r_b + 2, 1].set(params["ba"][0])
    return slab


# -----------------------------------------------------------------------------
# Wrapper
# -----------------------------------------------------------------------------
@functools.partial(jax.jit, static_argnames=("tb",))
def gnn_forward(x, L_hat, param_slab, drop_mask, *, tb=8):
    """Batched forward: x (B,N,D), L_hat (B,N,N), drop_mask (B,N,C).

    Returns choice (B, N) and value (B,).
    """
    B, N, D = x.shape
    C = drop_mask.shape[-1]
    rows = param_slab.shape[0]
    assert B % tb == 0, "batch must be a multiple of the batch tile"

    out = pl.pallas_call(
        _gnn_kernel,
        out_shape=jax.ShapeDtypeStruct((B, 128), jnp.float32),
        grid_spec=pltpu.PrefetchScalarGridSpec(
            num_scalar_prefetch=0,
            grid=(B // tb,),
            in_specs=[
                pl.BlockSpec((tb, N, D), lambda b: (b, 0, 0)),
                pl.BlockSpec((tb, N, N), lambda b: (b, 0, 0)),
                pl.BlockSpec((rows, 128), lambda b: (0, 0)),   # resident params
                pl.BlockSpec((tb, N, C), lambda b: (b, 0, 0)),
            ],
            out_specs=pl.BlockSpec((tb, 128), lambda b: (b, 0)),
        ),
        compiler_params=pltpu.CompilerParams(
            dimension_semantics=("parallel",)),
    )(x, L_hat, param_slab, drop_mask)

    choice = out[:, :N]
    value = out[:, N]
    return choice, value


# -----------------------------------------------------------------------------
# Pure-JAX reference (per graph), for correctness checking
# -----------------------------------------------------------------------------
def reference_forward(x, L, params, drop):
    hp = jax.lax.Precision.HIGHEST

    def cheb(inp, w, b):
        tx1 = jnp.dot(L, inp, precision=hp)
        tx2 = 2.0 * jnp.dot(L, tx1, precision=hp) - inp
        return (jnp.dot(inp, w[0], precision=hp)
                + jnp.dot(tx1, w[1], precision=hp)
                + jnp.dot(tx2, w[2], precision=hp)) + b

    h1 = jnp.maximum(cheb(x, params["w1"], params["b1"]), 0.0) * drop
    h2 = jnp.maximum(cheb(h1, params["w2"], params["b2"]), 0.0)
    logits = cheb(h2, params["w3"], params["b3"])[:, 0]
    choice = jax.nn.softmax(logits, axis=0)
    v = jnp.mean(h2, axis=0)
    value = jnp.dot(v, params["wa"][:, 0], precision=hp) + params["ba"][0]
    return choice, value


# -----------------------------------------------------------------------------
# Demo / self-check
# -----------------------------------------------------------------------------
if __name__ == "__main__":
    key = jax.random.PRNGKey(0)
    k_x, k_p, k_w, k_drop = jax.random.split(key, 4)

    B = 64       # graphs per call (batched to amortize launch/DMA overhead)
    N = 8        # args.n_nodes
    D = 4        # args.n_node_features
    C = 16       # hidden channels
    TB = 8       # graphs per grid step

    # node features
    x = jax.random.normal(k_x, (B, N, D), jnp.float32)

    # ring-graph topology shared by all graphs; per-graph symmetric edge weights
    src = jnp.arange(N, dtype=jnp.int32)
    dst = (src + 1) % N
    edge_index = jnp.stack([jnp.concatenate([src, dst]),
                            jnp.concatenate([dst, src])], axis=0)
    ew_half = jax.random.uniform(k_w, (B, N), jnp.float32, 0.5, 1.5)
    edge_weight = jnp.concatenate([ew_half, ew_half], axis=-1)      # (B, 2N)

    L_hat = jax.vmap(
        lambda w: build_scaled_laplacian(edge_index, w, N))(edge_weight)

    params = init_params(k_p, D, N, K=3, c=C)
    param_slab = pack_params(params)

    # F.dropout default: p=0.5, training=True -> inverted-dropout mask
    p_drop = 0.5
    keep = jax.random.bernoulli(k_drop, 1.0 - p_drop, (B, N, C))
    drop_mask = keep.astype(jnp.float32) / (1.0 - p_drop)

    choice, value = gnn_forward(x, L_hat, param_slab, drop_mask, tb=TB)
    jax.block_until_ready((choice, value))

    # reference check
    choice_ref, value_ref = jax.vmap(
        lambda xi, Li, di: reference_forward(xi, Li, params, di))(
            x, L_hat, drop_mask)

    assert choice.shape == (B, N) and value.shape == (B,)
    assert jnp.isfinite(choice).all() and jnp.isfinite(value).all()
    assert jnp.allclose(jnp.sum(choice, axis=-1), 1.0, atol=1e-4)
    assert float(jnp.max(jnp.abs(choice - choice_ref))) < 2e-2
    assert float(jnp.max(jnp.abs(value - value_ref))) < 1e-1
    print("KERNEL_OK")
</pallas_src>

<mosaic_0001>
module attributes {stable_mosaic.version = 11 : i64} {
  func.func @_gnn_kernel(%arg0: i32, %arg1: memref<8x8x4xf32, #tpu.memory_space<vmem>>, %arg2: memref<8x8x8xf32, #tpu.memory_space<vmem>>, %arg3: memref<120x128xf32, #tpu.memory_space<vmem>>, %arg4: memref<8x8x16xf32, #tpu.memory_space<vmem>>, %arg5: memref<8x128xf32, #tpu.memory_space<vmem>>) attributes {dimension_semantics = [#tpu.dimension_semantics<parallel>], iteration_bounds = array<i64: 8>, scalar_prefetch = 0 : i64, scratch_operands = 0 : i64, tpu.core_type = #tpu.core_type<tc>, window_params = [{transform_indices = @transform_0, window_bounds = array<i64: 8, 8, 4>}, {transform_indices = @transform_1, window_bounds = array<i64: 8, 8, 8>}, {pipeline_mode = #tpu.pipeline_mode<synchronous>, transform_indices = @transform_2, window_bounds = array<i64: 120, 128>}, {transform_indices = @transform_3, window_bounds = array<i64: 8, 8, 16>}, {transform_indices = @transform_4, window_bounds = array<i64: 8, 128>}]} {
    %c0 = arith.constant 0 : index
    %c0_0 = arith.constant 0 : index
    %c0_1 = arith.constant 0 : index
    %0 = vector.load %arg1[%c0, %c0_0, %c0_1] : memref<8x8x4xf32, #tpu.memory_space<vmem>>, vector<8x8x4xf32>
    %c0_2 = arith.constant 0 : index
    %c0_3 = arith.constant 0 : index
    %c0_4 = arith.constant 0 : index
    %1 = vector.load %arg2[%c0_2, %c0_3, %c0_4] : memref<8x8x8xf32, #tpu.memory_space<vmem>>, vector<8x8x8xf32>
    %c0_5 = arith.constant 0 : index
    %c0_6 = arith.constant 0 : index
    %c0_7 = arith.constant 0 : index
    %2 = vector.load %arg4[%c0_5, %c0_6, %c0_7] : memref<8x8x16xf32, #tpu.memory_space<vmem>>, vector<8x8x16xf32>
    %c0_8 = arith.constant 0 : index
    %c0_9 = arith.constant 0 : index
    %3 = vector.load %arg3[%c0_8, %c0_9] : memref<120x128xf32, #tpu.memory_space<vmem>>, vector<12x16xf32>
    %c16 = arith.constant 16 : index
    %c0_10 = arith.constant 0 : index
    %4 = vector.load %arg3[%c16, %c0_10] : memref<120x128xf32, #tpu.memory_space<vmem>>, vector<48x16xf32>
    %c64 = arith.constant 64 : index
    %c0_11 = arith.constant 0 : index
    %5 = vector.load %arg3[%c64, %c0_11] : memref<120x128xf32, #tpu.memory_space<vmem>>, vector<48x2xf32>
    %c112 = arith.constant 112 : index
    %c0_12 = arith.constant 0 : index
    %6 = vector.load %arg3[%c112, %c0_12] : memref<120x128xf32, #tpu.memory_space<vmem>>, vector<4x128xf32>
    %7 = vector.extract_strided_slice %6 {offsets = [0, 0], sizes = [1, 16], strides = [1, 1]} : vector<4x128xf32> to vector<1x16xf32>
    %8 = vector.extract_strided_slice %6 {offsets = [1, 0], sizes = [1, 16], strides = [1, 1]} : vector<4x128xf32> to vector<1x16xf32>
    %9 = vector.extract_strided_slice %6 {offsets = [2, 0], sizes = [1, 1], strides = [1, 1]} : vector<4x128xf32> to vector<1x1xf32>
    %10 = vector.extract_strided_slice %6 {offsets = [2, 1], sizes = [1, 1], strides = [1, 1]} : vector<4x128xf32> to vector<1x1xf32>
    "tpu.trace_start"() <{level = 10 : i32, message = "bnm,bmf->bnf"}> : () -> ()
    %cst = arith.constant dense<0.000000e+00> : vector<8x8x4xf32>
    %11 = tpu.matmul %1, %0, %cst {dimension_numbers = #tpu.dot_dimension_numbers<[2], [1], [1], [2], [0, 0, 0, 1, 1, 2], [0], [0]>} : vector<8x8x8xf32>, vector<8x8x4xf32>, vector<8x8x4xf32> -> vector<8x8x4xf32>
    %cst_13 = arith.constant dense<0.000000e+00> : vector<8x8x4xf32>
    %12 = tpu.matmul %1, %11, %cst_13 {dimension_numbers = #tpu.dot_dimension_numbers<[2], [1], [1], [2], [0, 0, 0, 1, 1, 2], [0], [0]>} : vector<8x8x8xf32>, vector<8x8x4xf32>, vector<8x8x4xf32> -> vector<8x8x4xf32>
    "tpu.trace_stop"() : () -> ()
    %cst_14 = arith.constant 2.000000e+00 : f32
    %13 = vector.broadcast %cst_14 : f32 to vector<8x8x4xf32>
    %14 = arith.mulf %13, %12 : vector<8x8x4xf32>
    %15 = arith.subf %14, %0 : vector<8x8x4xf32>
    %16 = tpu.concatenate %0, %11, %15 in 2 : vector<8x8x4xf32>, vector<8x8x4xf32>, vector<8x8x4xf32> -> vector<8x8x12xf32>
    %17 = vector.shape_cast %16 : vector<8x8x12xf32> to vector<64x12xf32>
    %cst_15 = arith.constant dense<0.000000e+00> : vector<64x16xf32>
    %18 = tpu.matmul %17, %3, %cst_15 {dimension_numbers = #tpu.dot_dimension_numbers<[1], [0], [0], [1], [0, 0, 1, 1], [], []>} : vector<64x12xf32>, vector<12x16xf32>, vector<64x16xf32> -> vector<64x16xf32>
    %19 = vector.broadcast %7 : vector<1x16xf32> to vector<64x16xf32>
    %20 = arith.addf %18, %19 : vector<64x16xf32>
    %cst_16 = arith.constant 0.000000e+00 : f32
    %21 = vector.broadcast %cst_16 : f32 to vector<64x16xf32>
    %22 = arith.maximumf %20, %21 : vector<64x16xf32>
    %23 = vector.shape_cast %22 : vector<64x16xf32> to vector<8x8x16xf32>
    %24 = arith.mulf %23, %2 : vector<8x8x16xf32>
    "tpu.trace_start"() <{level = 10 : i32, message = "bnm,bmf->bnf"}> : () -> ()
    %cst_17 = arith.constant dense<0.000000e+00> : vector<8x8x16xf32>
    %25 = tpu.matmul %1, %24, %cst_17 {dimension_numbers = #tpu.dot_dimension_numbers<[2], [1], [1], [2], [0, 0, 0, 1, 1, 2], [0], [0]>} : vector<8x8x8xf32>, vector<8x8x16xf32>, vector<8x8x16xf32> -> vector<8x8x16xf32>
    %cst_18 = arith.constant dense<0.000000e+00> : vector<8x8x16xf32>
    %26 = tpu.matmul %1, %25, %cst_18 {dimension_numbers = #tpu.dot_dimension_numbers<[2], [1], [1], [2], [0, 0, 0, 1, 1, 2], [0], [0]>} : vector<8x8x8xf32>, vector<8x8x16xf32>, vector<8x8x16xf32> -> vector<8x8x16xf32>
    "tpu.trace_stop"() : () -> ()
    %cst_19 = arith.constant 2.000000e+00 : f32
    %27 = vector.broadcast %cst_19 : f32 to vector<8x8x16xf32>
    %28 = arith.mulf %27, %26 : vector<8x8x16xf32>
    %29 = arith.subf %28, %24 : vector<8x8x16xf32>
    %30 = tpu.concatenate %24, %25, %29 in 2 : vector<8x8x16xf32>, vector<8x8x16xf32>, vector<8x8x16xf32> -> vector<8x8x48xf32>
    %31 = vector.shape_cast %30 : vector<8x8x48xf32> to vector<64x48xf32>
    %cst_20 = arith.constant dense<0.000000e+00> : vector<64x16xf32>
    %32 = tpu.matmul %31, %4, %cst_20 {dimension_numbers = #tpu.dot_dimension_numbers<[1], [0], [0], [1], [0, 0, 1, 1], [], []>} : vector<64x48xf32>, vector<48x16xf32>, vector<64x16xf32> -> vector<64x16xf32>
    %33 = vector.broadcast %8 : vector<1x16xf32> to vector<64x16xf32>
    %34 = arith.addf %32, %33 : vector<64x16xf32>
    %cst_21 = arith.constant 0.000000e+00 : f32
    %35 = vector.broadcast %cst_21 : f32 to vector<64x16xf32>
    %36 = arith.maximumf %34, %35 : vector<64x16xf32>
    %37 = vector.shape_cast %36 : vector<64x16xf32> to vector<8x8x16xf32>
    "tpu.trace_start"() <{level = 10 : i32, message = "bnm,bmf->bnf"}> : () -> ()
    %cst_22 = arith.constant dense<0.000000e+00> : vector<8x8x16xf32>
    %38 = tpu.matmul %1, %37, %cst_22 {dimension_numbers = #tpu.dot_dimension_numbers<[2], [1], [1], [2], [0, 0, 0, 1, 1, 2], [0], [0]>} : vector<8x8x8xf32>, vector<8x8x16xf32>, vector<8x8x16xf32> -> vector<8x8x16xf32>
    %cst_23 = arith.constant dense<0.000000e+00> : vector<8x8x16xf32>
    %39 = tpu.matmul %1, %38, %cst_23 {dimension_numbers = #tpu.dot_dimension_numbers<[2], [1], [1], [2], [0, 0, 0, 1, 1, 2], [0], [0]>} : vector<8x8x8xf32>, vector<8x8x16xf32>, vector<8x8x16xf32> -> vector<8x8x16xf32>
    "tpu.trace_stop"() : () -> ()
    %cst_24 = arith.constant 2.000000e+00 : f32
    %40 = vector.broadcast %cst_24 : f32 to vector<8x8x16xf32>
    %41 = arith.mulf %40, %39 : vector<8x8x16xf32>
    %42 = arith.subf %41, %37 : vector<8x8x16xf32>
    %43 = tpu.concatenate %37, %38, %42 in 2 : vector<8x8x16xf32>, vector<8x8x16xf32>, vector<8x8x16xf32> -> vector<8x8x48xf32>
    %44 = vector.shape_cast %43 : vector<8x8x48xf32> to vector<64x48xf32>
    %cst_25 = arith.constant dense<0.000000e+00> : vector<64x2xf32>
    %45 = tpu.matmul %44, %5, %cst_25 {dimension_numbers = #tpu.dot_dimension_numbers<[1], [0], [0], [1], [0, 0, 1, 1], [], []>} : vector<64x48xf32>, vector<48x2xf32>, vector<64x2xf32> -> vector<64x2xf32>
    %46 = vector.shape_cast %45 : vector<64x2xf32> to vector<8x8x2xf32>
    %47 = vector.extract_strided_slice %46 {offsets = [0, 0, 0], sizes = [8, 8, 1], strides = [1, 1, 1]} : vector<8x8x2xf32> to vector<8x8x1xf32>
    %48 = vector.shape_cast %47 : vector<8x8x1xf32> to vector<8x8xf32>
    %49 = vector.broadcast %9 : vector<1x1xf32> to vector<8x8xf32>
    %50 = arith.addf %48, %49 : vector<8x8xf32>
    %cst_26 = arith.constant dense<0xFF800000> : vector<8xf32>
    %51 = vector.multi_reduction <maximumf>, %50, %cst_26 [1] : vector<8x8xf32> to vector<8xf32>
    %52 = vector.shape_cast %51 : vector<8xf32> to vector<8x1xf32>
    %53 = vector.broadcast %52 : vector<8x1xf32> to vector<8x8xf32>
    %54 = arith.subf %50, %53 : vector<8x8xf32>
    %55 = math.exp %54 : vector<8x8xf32>
    %cst_27 = arith.constant dense<0.000000e+00> : vector<8xf32>
    %56 = vector.multi_reduction <add>, %55, %cst_27 [1] : vector<8x8xf32> to vector<8xf32>
    %57 = vector.shape_cast %56 : vector<8xf32> to vector<8x1xf32>
    %58 = vector.broadcast %57 : vector<8x1xf32> to vector<8x8xf32>
    %59 = arith.divf %55, %58 : vector<8x8xf32>
    %60 = vector.extract_strided_slice %46 {offsets = [0, 0, 1], sizes = [8, 8, 1], strides = [1, 1, 1]} : vector<8x8x2xf32> to vector<8x8x1xf32>
    %61 = vector.shape_cast %60 : vector<8x8x1xf32> to vector<8x8xf32>
    %cst_28 = arith.constant dense<0.000000e+00> : vector<8xf32>
    %62 = vector.multi_reduction <add>, %61, %cst_28 [1] : vector<8x8xf32> to vector<8xf32>
    %63 = vector.shape_cast %62 : vector<8xf32> to vector<8x1xf32>
    %cst_29 = arith.constant 8.000000e+00 : f32
    %64 = vector.broadcast %cst_29 : f32 to vector<8x1xf32>
    %65 = arith.divf %63, %64 : vector<8x1xf32>
    %66 = vector.broadcast %10 : vector<1x1xf32> to vector<8x1xf32>
    %67 = arith.addf %65, %66 : vector<8x1xf32>
    %cst_30 = arith.constant 0.000000e+00 : f32
    %68 = vector.broadcast %cst_30 : f32 to vector<8x119xf32>
    %69 = tpu.concatenate %59, %67, %68 in 1 : vector<8x8xf32>, vector<8x1xf32>, vector<8x119xf32> -> vector<8x128xf32>
    %c0_31 = arith.constant 0 : index
    %c0_32 = arith.constant 0 : index
    %70 = vector.load %arg5[%c0_31, %c0_32] : memref<8x128xf32, #tpu.memory_space<vmem>>, vector<8x128xf32>
    tpu.vector_store %arg5[%c0_31, %c0_32], %69 {strides = array<i32>} : memref<8x128xf32, #tpu.memory_space<vmem>>, vector<8x128xf32>,
    return
  }
  func.func @transform_0(%arg0: i32) -> (i32, i32, i32) {
    %c0_i32 = arith.constant 0 : i32
    %c0_i32_0 = arith.constant 0 : i32
    %c0_i32_1 = arith.constant 0 : i32
    return %arg0, %c0_i32, %c0_i32_0 : i32, i32, i32
  }
  func.func @transform_1(%arg0: i32) -> (i32, i32, i32) {
    %c0_i32 = arith.constant 0 : i32
    %c0_i32_0 = arith.constant 0 : i32
    %c0_i32_1 = arith.constant 0 : i32
    return %arg0, %c0_i32, %c0_i32_0 : i32, i32, i32
  }
  func.func @transform_2(%arg0: i32) -> (i32, i32) {
    %c0_i32 = arith.constant 0 : i32
    %c0_i32_0 = arith.constant 0 : i32
    %c0_i32_1 = arith.constant 0 : i32
    return %c0_i32, %c0_i32_0 : i32, i32
  }
  func.func @transform_3(%arg0: i32) -> (i32, i32, i32) {
    %c0_i32 = arith.constant 0 : i32
    %c0_i32_0 = arith.constant 0 : i32
    %c0_i32_1 = arith.constant 0 : i32
    return %arg0, %c0_i32, %c0_i32_0 : i32, i32, i32
  }
  func.func @transform_4(%arg0: i32) -> (i32, i32) {
    %c0_i32 = arith.constant 0 : i32
    %c0_i32_0 = arith.constant 0 : i32
    return %arg0, %c0_i32 : i32, i32
  }
}

</mosaic_0001>

<llo_original>
// kernel: gnn_forward.1
$region0: #{gnn_forward.1}
  #allocation0 [shape = 'u32[]', space=smem, size = 0x4, offset = 0x4, fixed_abs, tag = 'smem constant byte address 0x4 - core index']
  #allocation1 [shape = 'u32[144,128]{1,0:T(1,128)}', space=vmem, size = 0x12000, scoped, tag = 'internal scratch']
  %s0 = inlined_call_operand.vmem [shape: f32[64,8,4], index: 0, kind: input, shape index: {}]
  %s1 = inlined_call_operand.vmem [shape: f32[64,8,8], index: 1, kind: input, shape index: {}]
  %s2 = inlined_call_operand.vmem [shape: f32[120,128], index: 2, kind: input, shape index: {}]
  %s3 = inlined_call_operand.vmem [shape: f32[64,8,16], index: 3, kind: input, shape index: {}]
  %s4 = inlined_call_operand.vmem [shape: f32[64,128], index: 4, kind: output, shape index: {}]
  %s5 = sld [smem:[#allocation0]]
  $region49: #{gnn_forward.1} parent=0
    _
  %s7 = ssub.s32 1, %s5
  %s8 = scalar_select 0, %s7, %s5
  loop: start=0, step=1, limit=10
  $region2: #{gnn_forward.1} parent=0 // loop_pre_header
    _
  $region3: #{gnn_forward.1} parent=0 // loop_header
    %s10 = sphi 0, %s14
    %p11 = scmp.ge.s32.totalorder %s10, 10
    %s20 = sphi 0, %s22
    %s23 = sphi 0, %s20
    %s24 = sphi 0, %s23
    %s40 = sphi 0, %s24
    %s46 = sphi 0, %s48
    %s49 = sphi 0, %s46
    %s50 = sphi 0, %s49
    %s66 = sphi 0, %s50
    %s70 = sphi 0, %s70
    %s72 = sphi 0, %s70
    %s73 = sphi 0, %s72
    %s87 = sphi 0, %s73
    %s93 = sphi 0, %s95
    %s96 = sphi 0, %s93
    %s97 = sphi 0, %s96
    %s113 = sphi 0, %s97
    %s119 = sphi 0, %s121
    %s122 = sphi 0, %s119
    %s123 = sphi 0, %s122
    %s139 = sphi 0, %s123
  $region4: #{gnn_forward.1} parent=0 // loop_header_branch
    %13 = sbr.rel (%p11) target = $region8
  $region5: #{gnn_forward.1} parent=0 // loop_body
    %s15 = ssub.s32 %s10, 1
    %s16 = ssub.s32 %s10, 2
    %s17 = sadd.s32 %s10, 1
    %s18 = ssub.s32 %s10, %s17
    %p19 = scmp.eq.s32.totalorder %s18, 0
    %s21 = sadd.s32 %s20, 1
    %s22 = scalar_select %p19, %s20, %s21
    %p25 = pneg %p19
    %p26 = scmp.eq.s32.totalorder %s10, 7
    %p27 = por %p25, %p26
    %p28 = scmp.ne.s32.totalorder %s20, %s23
    %p29 = scmp.eq.s32.totalorder %s10, 0
    %p30 = por %p28, %p29
    %p31 = scmp.ne.s32.totalorder %s20, %s23
    %p32 = scmp.eq.s32.totalorder %s15, 7
    %p33 = por %p31, %p32
    %p34 = scmp.ne.s32.totalorder %s23, %s24
    %p35 = scmp.eq.s32.totalorder %s15, 0
    %p36 = por %p34, %p35
    %p37 = scmp.ne.s32.totalorder %s23, %s24
    %p38 = scmp.eq.s32.totalorder %s16, 7
    %p39 = por %p37, %p38
    %p41 = scmp.ne.s32.totalorder %s24, %s40
    %p42 = scmp.eq.s32.totalorder %s16, 0
    %p43 = por %p41, %p42
    %s44 = ssub.s32 %s10, %s17
    %p45 = scmp.eq.s32.totalorder %s44, 0
    %s47 = sadd.s32 %s46, 1
    %s48 = scalar_select %p45, %s46, %s47
    %p51 = pneg %p45
    %p52 = scmp.eq.s32.totalorder %s10, 7
    %p53 = por %p51, %p52
    %p54 = scmp.ne.s32.totalorder %s46, %s49
    %p55 = scmp.eq.s32.totalorder %s10, 0
    %p56 = por %p54, %p55
    %p57 = scmp.ne.s32.totalorder %s46, %s49
    %p58 = scmp.eq.s32.totalorder %s15, 7
    %p59 = por %p57, %p58
    %p60 = scmp.ne.s32.totalorder %s49, %s50
    %p61 = scmp.eq.s32.totalorder %s15, 0
    %p62 = por %p60, %p61
    %p63 = scmp.ne.s32.totalorder %s49, %s50
    %p64 = scmp.eq.s32.totalorder %s16, 7
    %p65 = por %p63, %p64
    %p67 = scmp.ne.s32.totalorder %s50, %s66
    %p68 = scmp.eq.s32.totalorder %s16, 0
    %p69 = por %p67, %p68
    %s71 = sadd.s32 %s70, 1
    %p74 = scmp.eq.s32.totalorder %s10, 7
    %p75 = scmp.ne.s32.totalorder %s70, %s72
    %p76 = scmp.eq.s32.totalorder %s10, 0
    %p77 = por %p75, %p76
    %p78 = scmp.ne.s32.totalorder %s70, %s72
    %p79 = scmp.eq.s32.totalorder %s15, 7
    %p80 = por %p78, %p79
    %p81 = scmp.ne.s32.totalorder %s72, %s73
    %p82 = scmp.eq.s32.totalorder %s15, 0
    %p83 = por %p81, %p82
    %p84 = scmp.ne.s32.totalorder %s72, %s73
    %p85 = scmp.eq.s32.totalorder %s16, 7
    %p86 = por %p84, %p85
    %p88 = scmp.ne.s32.totalorder %s73, %s87
    %p89 = scmp.eq.s32.totalorder %s16, 0
    %p90 = por %p88, %p89
    %s91 = ssub.s32 %s10, %s17
    %p92 = scmp.eq.s32.totalorder %s91, 0
    %s94 = sadd.s32 %s93, 1
    %s95 = scalar_select %p92, %s93, %s94
    %p98 = pneg %p92
    %p99 = scmp.eq.s32.totalorder %s10, 7
    %p100 = por %p98, %p99
    %p101 = scmp.ne.s32.totalorder %s93, %s96
    %p102 = scmp.eq.s32.totalorder %s10, 0
    %p103 = por %p101, %p102
    %p104 = scmp.ne.s32.totalorder %s93, %s96
    %p105 = scmp.eq.s32.totalorder %s15, 7
    %p106 = por %p104, %p105
    %p107 = scmp.ne.s32.totalorder %s96, %s97
    %p108 = scmp.eq.s32.totalorder %s15, 0
    %p109 = por %p107, %p108
    %p110 = scmp.ne.s32.totalorder %s96, %s97
    %p111 = scmp.eq.s32.totalorder %s16, 7
    %p112 = por %p110, %p111
    %p114 = scmp.ne.s32.totalorder %s97, %s113
    %p115 = scmp.eq.s32.totalorder %s16, 0
    %p116 = por %p114, %p115
    %s117 = ssub.s32 %s10, %s17
    %p118 = scmp.eq.s32.totalorder %s117, 0
    %s120 = sadd.s32 %s119, 1
    %s121 = scalar_select %p118, %s119, %s120
    %p124 = pneg %p118
    %p125 = scmp.eq.s32.totalorder %s10, 7
    %p126 = por %p124, %p125
    %p127 = scmp.ne.s32.totalorder %s119, %s122
    %p128 = scmp.eq.s32.totalorder %s10, 0
    %p129 = por %p127, %p128
    %p130 = scmp.ne.s32.totalorder %s119, %s122
    %p131 = scmp.eq.s32.totalorder %s15, 7
    %p132 = por %p130, %p131
    %p133 = scmp.ne.s32.totalorder %s122, %s123
    %p134 = scmp.eq.s32.totalorder %s15, 0
    %p135 = por %p133, %p134
    %p136 = scmp.ne.s32.totalorder %s122, %s123
    %p137 = scmp.eq.s32.totalorder %s16, 7
    %p138 = por %p136, %p137
    %p140 = scmp.ne.s32.totalorder %s123, %s139
    %p141 = scmp.eq.s32.totalorder %s16, 0
    %p142 = por %p140, %p141
    %p143 = scmp.le.s32.totalorder 1, %s10
    %p144 = scmp.lt.s32.totalorder %s10, 9
    %p145 = pnand %p143, %p144
    %p146 = pneg %p145
    // Predicated region
    $region9: #{gnn_forward.1} parent=5 // pred_check
      _
    $region10: #{gnn_forward.1} parent=5 // pred_check_branch
      %148 = sbr.rel (%p145) target = $region12
    $region11: #{gnn_forward.1} parent=5 // pred_region
      %s149 = ssub.s32 %s10, 1
      // Predicated region
      $region13: #{gnn_forward.1} parent=11 // pred_check
        %p150 = pneg %p83
      $region14: #{gnn_forward.1} parent=11 // pred_check_branch
        %152 = sbr.rel (%p150) target = $region16
      $region15: #{gnn_forward.1} parent=11 // pred_region
        _
      $region16: #{gnn_forward.1} parent=11 // pred_fallthru
        _
    $region12: #{gnn_forward.1} parent=5 // pred_fallthru
      _
    %p153 = scmp.lt.s32.totalorder %s10, 8
    // Predicated region
    $region17: #{gnn_forward.1} parent=5 // pred_check
      %p154 = pneg %p153
    $region18: #{gnn_forward.1} parent=5 // pred_check_branch
      %156 = sbr.rel (%p154) target = $region20
    $region19: #{gnn_forward.1} parent=5 // pred_region
      // Predicated region
      $region21: #{gnn_forward.1} parent=19 // pred_check
        %p157 = pneg %p30
      $region22: #{gnn_forward.1} parent=19 // pred_check_branch
        %159 = sbr.rel (%p157) target = $region24
      $region23: #{gnn_forward.1} parent=19 // pred_region
        %s160 = smul.u32 8, %s10
        %p161 = scmp.lt.s32.totalorder %s160, 63
        %s162 = scalar_select %p161, %s160, 63
        %s163 = smul.addr %s162, 8
        %s164 = scalar_lea.vmem %s0, %s163
        %s165 = smul.u32 8, %s10
      $region24: #{gnn_forward.1} parent=19 // pred_fallthru
        _
      // Predicated region
      $region25: #{gnn_forward.1} parent=19 // pred_check
        %p166 = pneg %p56
      $region26: #{gnn_forward.1} parent=19 // pred_check_branch
        %168 = sbr.rel (%p166) target = $region28
      $region27: #{gnn_forward.1} parent=19 // pred_region
        %s169 = smul.u32 8, %s10
        %p170 = scmp.lt.s32.totalorder %s169, 63
        %s171 = scalar_select %p170, %s169, 63
        %s172 = smul.addr %s171, 8
        %s173 = scalar_lea.vmem %s1, %s172
        %s174 = smul.u32 8, %s10
      $region28: #{gnn_forward.1} parent=19 // pred_fallthru
        _
      // Predicated region
      $region29: #{gnn_forward.1} parent=19 // pred_check
        %p175 = pneg %p103
      $region30: #{gnn_forward.1} parent=19 // pred_check_branch
        %177 = sbr.rel (%p175) target = $region32
      $region31: #{gnn_forward.1} parent=19 // pred_region
        %s178 = smul.u32 8, %s10
        %p179 = scmp.lt.s32.totalorder %s178, 63
        %s180 = scalar_select %p179, %s178, 63
        %s181 = smul.addr %s180, 8
        %s182 = scalar_lea.vmem %s3, %s181
        %s183 = smul.u32 8, %s10
      $region32: #{gnn_forward.1} parent=19 // pred_fallthru
        _
    $region20: #{gnn_forward.1} parent=5 // pred_fallthru
      _
    %p184 = scmp.le.s32.totalorder 1, %s10
    %p185 = scmp.lt.s32.totalorder %s10, 9
    %p186 = pnand %p184, %p185
    %p187 = pneg %p186
    // Predicated region
    $region33: #{gnn_forward.1} parent=5 // pred_check
      _
    $region34: #{gnn_forward.1} parent=5 // pred_check_branch
      %189 = sbr.rel (%p186) target = $region36
    $region35: #{gnn_forward.1} parent=5 // pred_region
      %s190 = ssub.s32 %s10, 1
      %s191 = smul.u32 8, %s15
      %p192 = scmp.lt.s32.totalorder %s191, 63
      %s193 = scalar_select %p192, %s191, 63
      %s194 = smul.addr %s193, 8
      %s195 = scalar_lea.vmem %s0, %s194
      %p196 = pneg %p36
      %p197 = pneg %p33
      %s198 = smul.u32 8, %s15
      %p199 = scmp.lt.s32.totalorder %s198, 63
      %s200 = scalar_select %p199, %s198, 63
      %s201 = smul.addr %s200, 8
      %s202 = scalar_lea.vmem %s1, %s201
      %p203 = pneg %p62
      %p204 = pneg %p59
      %p205 = pneg %p83
      %p206 = pneg %p80
      %s207 = smul.u32 8, %s15
      %p208 = scmp.lt.s32.totalorder %s207, 63
      %s209 = scalar_select %p208, %s207, 63
      %s210 = smul.addr %s209, 8
      %s211 = scalar_lea.vmem %s3, %s210
      %p212 = pneg %p109
      %p213 = pneg %p106
      %p214 = pneg %p135
      %p215 = pneg %p132
      %p216 = scmp.lt.s32.totalorder %s15, 7
      %s217 = scalar_select %p216, %s15, 7
      %s218 = smul.addr %s217, 8
      %s219 = scalar_lea.vmem %s4, %s218
      %s220 = smul.u32 8, %s15
      %p221 = scmp.lt.s32.totalorder %s220, 63
      %s222 = scalar_select %p221, %s220, 63
      %s223 = smul.addr %s222, 8
      %s224 = scalar_lea.vmem %s0, %s223
      %s225 = smul.u32 8, %s15
      %s226 = smul.u32 8, %s15
      %p227 = scmp.lt.s32.totalorder %s226, 63
      %s228 = scalar_select %p227, %s226, 63
      %s229 = smul.addr %s228, 8
      %s230 = scalar_lea.vmem %s1, %s229
      %s231 = smul.u32 8, %s15
      %s232 = smul.u32 8, %s15
      %p233 = scmp.lt.s32.totalorder %s232, 63
      %s234 = scalar_select %p233, %s232, 63
      %s235 = smul.addr %s234, 8
      %s236 = scalar_lea.vmem %s3, %s235
      %s237 = smul.u32 8, %s15
      %p238 = scmp.lt.s32.totalorder %s15, 7
      %s239 = scalar_select %p238, %s15, 7
      %s240 = smul.addr %s239, 8
      %s241 = scalar_lea.vmem %s4, %s240
      %v242 = vld [vmem:[%s224] sm:$0xff]
      %v243 = vld [vmem:[%s224 + $0x8] sm:$0xff]
      %v244 = vld [vmem:[%s224 + $0x10] sm:$0xff]
      %v245 = vld [vmem:[%s224 + $0x18] sm:$0xff]
      %v246 = vld [vmem:[%s224 + $0x20] sm:$0xff]
      %v247 = vld [vmem:[%s224 + $0x28] sm:$0xff]
      %v248 = vld [vmem:[%s224 + $0x30] sm:$0xff]
      %v249 = vld [vmem:[%s224 + $0x38] sm:$0xff]
      %v250 = vld [vmem:[%s230] sm:$0xff]
      %v251 = vld [vmem:[%s230 + $0x8] sm:$0xff]
      %v252 = vld [vmem:[%s230 + $0x10] sm:$0xff]
      %v253 = vld [vmem:[%s230 + $0x18] sm:$0xff]
      %v254 = vld [vmem:[%s230 + $0x20] sm:$0xff]
      %v255 = vld [vmem:[%s230 + $0x28] sm:$0xff]
      %v256 = vld [vmem:[%s230 + $0x30] sm:$0xff]
      %v257 = vld [vmem:[%s230 + $0x38] sm:$0xff]
      %v258 = vld [vmem:[%s236] sm:$0xff]
      %v259 = vld [vmem:[%s236 + $0x8] sm:$0xff]
      %v260 = vld [vmem:[%s236 + $0x10] sm:$0xff]
      %v261 = vld [vmem:[%s236 + $0x18] sm:$0xff]
      %v262 = vld [vmem:[%s236 + $0x20] sm:$0xff]
      %v263 = vld [vmem:[%s236 + $0x28] sm:$0xff]
      %v264 = vld [vmem:[%s236 + $0x30] sm:$0xff]
      %v265 = vld [vmem:[%s236 + $0x38] sm:$0xff]
      %v266 = vld [vmem:[%s2] sm:$0xff]
      %v267 = vld [vmem:[%s2 + $0x8] sm:$0xf]
      %v268 = vld [vmem:[%s2 + $0x10] sm:$0xff]
      %v269 = vld [vmem:[%s2 + $0x18] sm:$0xff]
      %v270 = vld [vmem:[%s2 + $0x20] sm:$0xff]
      %v271 = vld [vmem:[%s2 + $0x28] sm:$0xff]
      %v272 = vld [vmem:[%s2 + $0x30] sm:$0xff]
      %v273 = vld [vmem:[%s2 + $0x38] sm:$0xff]
      %v274 = vld [vmem:[%s2 + $0x40] sm:$0xff]
      %v275 = vld [vmem:[%s2 + $0x48] sm:$0xff]
      %v276 = vld [vmem:[%s2 + $0x50] sm:$0xff]
      %v277 = vld [vmem:[%s2 + $0x58] sm:$0xff]
      %v278 = vld [vmem:[%s2 + $0x60] sm:$0xff]
      %v279 = vld [vmem:[%s2 + $0x68] sm:$0xff]
      %v280 = vld [vmem:[%s2 + $0x70] sm:$0xf]
      %vm281 = vcmask 64512
      %v283 = vsel %vm281, %v250, 0
      %285 = vmatprep.subr.mxu0 0.0
      %286 = vmatpush1.msra.mxu0 %v242
      %287 = vmatprep.subr.mxu0 0.0
      %288 = vmatpush1.msra.mxu0 0.0
      %289 = vmatprep.subr.mxu0 0.0
      %290 = vmatpush1.msra.mxu0 0.0
      %291 = vmatprep.subr.mxu0 0.0
      %292 = vmatpush1.msra.mxu0 0.0
      %293 = vmatprep.subr.mxu0 0.0
      %294 = vmatpush1.msra.mxu0 0.0
      %295 = vmatprep.subr.mxu0 0.0
      %296 = vmatpush1.msra.mxu0 0.0
      %297 = vmatprep.subr.mxu0 0.0
      %298 = vmatpush1.msra.mxu0 0.0
      %299 = vmatprep.subr.mxu0 0.0
      %300 = vmatpush1.msra.mxu0 0.0
      %301 = vmatprep.subr.mxu0 0.0
      %302 = vmatpush1.msra.mxu0 0.0
      %303 = vmatprep.subr.mxu0 0.0
      %304 = vmatpush1.msra.mxu0 0.0
      %305 = vmatprep.subr.mxu0 0.0
      %306 = vmatpush1.msra.mxu0 0.0
      %307 = vmatprep.subr.mxu0 0.0
      %308 = vmatpush1.msra.mxu0 0.0
      %309 = vmatprep.subr.mxu0 0.0
      %310 = vmatpush1.msra.mxu0 0.0
      %311 = vmatprep.subr.mxu0 0.0
      %312 = vmatpush1.msra.mxu0 0.0
      %313 = vmatprep.subr.mxu0 0.0
      %314 = vmatpush1.msra.mxu0 0.0
      %315 = vmatprep.subr.mxu0 0.0
      %316 = vmatpush1.msra.mxu0 0.0
      %317 = vmatprep.subr.mxu0 0.0
      %318 = vmatpush1.msra.mxu0 0.0
      %319 = vmatprep.subr.mxu0 0.0
      %320 = vmatpush1.msra.mxu0 0.0
      %321 = vmatprep.subr.mxu0 0.0
      %322 = vmatpush1.msra.mxu0 0.0
      %323 = vmatprep.subr.mxu0 0.0
      %324 = vmatpush1.msra.mxu0 0.0
      %325 = vmatprep.subr.mxu0 0.0
      %326 = vmatpush1.msra.mxu0 0.0
      %327 = vmatprep.subr.mxu0 0.0
      %328 = vmatpush1.msra.mxu0 0.0
      %329 = vmatprep.subr.mxu0 0.0
      %330 = vmatpush1.msra.mxu0 0.0
      %331 = vmatprep.subr.mxu0 0.0
      %332 = vmatpush1.msra.mxu0 0.0
      %333 = vmatprep.subr.mxu0 0.0
      %334 = vmatpush1.msra.mxu0 0.0
      %335 = vmatprep.subr.mxu0 0.0
      %336 = vmatpush1.msra.mxu0 0.0
      %337 = vmatprep.subr.mxu0 0.0
      %338 = vmatpush1.msra.mxu0 0.0
      %339 = vmatprep.subr.mxu0 0.0
      %340 = vmatpush1.msra.mxu0 0.0
      %341 = vmatprep.subr.mxu0 0.0
      %342 = vmatpush1.msra.mxu0 0.0
      %343 = vmatprep.subr.mxu0 0.0
      %344 = vmatpush1.msra.mxu0 0.0
      %345 = vmatprep.subr.mxu0 0.0
      %346 = vmatpush1.msra.mxu0 0.0
      %347 = vmatprep.subr.mxu0 0.0
      %348 = vmatpush1.msra.mxu0 0.0
      %349 = vmatprep.mubr.f32.mxu0 0.0
      %350 = vmatmul.mubr.f32.gmra.mrb[0].mxu0 %v283
      %v351 = vpop.f32.mrb[0].mxu0
      %v352 = vadd.f32 0.0, %v351
      %v353 = vpop.f32.mrb[0].mxu0
      %354 = vdwg.mxu0
      %v356 = vsel %vm281, %v251, 0
      %358 = vmatprep.subr.mxu0 0.0
      %359 = vmatpush1.msra.mxu0 %v243
      %360 = vmatprep.subr.mxu0 0.0
      %361 = vmatpush1.msra.mxu0 0.0
      %362 = vmatprep.subr.mxu0 0.0
      %363 = vmatpush1.msra.mxu0 0.0
      %364 = vmatprep.subr.mxu0 0.0
      %365 = vmatpush1.msra.mxu0 0.0
      %366 = vmatprep.subr.mxu0 0.0
      %367 = vmatpush1.msra.mxu0 0.0
      %368 = vmatprep.subr.mxu0 0.0
      %369 = vmatpush1.msra.mxu0 0.0
      %370 = vmatprep.subr.mxu0 0.0
      %371 = vmatpush1.msra.mxu0 0.0
      %372 = vmatprep.subr.mxu0 0.0
      %373 = vmatpush1.msra.mxu0 0.0
      %374 = vmatprep.subr.mxu0 0.0
      %375 = vmatpush1.msra.mxu0 0.0
      %376 = vmatprep.subr.mxu0 0.0
      %377 = vmatpush1.msra.mxu0 0.0
      %378 = vmatprep.subr.mxu0 0.0
      %379 = vmatpush1.msra.mxu0 0.0
      %380 = vmatprep.subr.mxu0 0.0
      %381 = vmatpush1.msra.mxu0 0.0
      %382 = vmatprep.subr.mxu0 0.0
      %383 = vmatpush1.msra.mxu0 0.0
      %384 = vmatprep.subr.mxu0 0.0
      %385 = vmatpush1.msra.mxu0 0.0
      %386 = vmatprep.subr.mxu0 0.0
      %387 = vmatpush1.msra.mxu0 0.0
      %388 = vmatprep.subr.mxu0 0.0
      %389 = vmatpush1.msra.mxu0 0.0
      %390 = vmatprep.subr.mxu0 0.0
      %391 = vmatpush1.msra.mxu0 0.0
      %392 = vmatprep.subr.mxu0 0.0
      %393 = vmatpush1.msra.mxu0 0.0
      %394 = vmatprep.subr.mxu0 0.0
      %395 = vmatpush1.msra.mxu0 0.0
      %396 = vmatprep.subr.mxu0 0.0
      %397 = vmatpush1.msra.mxu0 0.0
      %398 = vmatprep.subr.mxu0 0.0
      %399 = vmatpush1.msra.mxu0 0.0
      %400 = vmatprep.subr.mxu0 0.0
      %401 = vmatpush1.msra.mxu0 0.0
      %402 = vmatprep.subr.mxu0 0.0
      %403 = vmatpush1.msra.mxu0 0.0
      %404 = vmatprep.subr.mxu0 0.0
      %405 = vmatpush1.msra.mxu0 0.0
      %406 = vmatprep.subr.mxu0 0.0
      %407 = vmatpush1.msra.mxu0 0.0
      %408 = vmatprep.subr.mxu0 0.0
      %409 = vmatpush1.msra.mxu0 0.0
      %410 = vmatprep.subr.mxu0 0.0
      %411 = vmatpush1.msra.mxu0 0.0
      %412 = vmatprep.subr.mxu0 0.0
      %413 = vmatpush1.msra.mxu0 0.0
      %414 = vmatprep.subr.mxu0 0.0
      %415 = vmatpush1.msra.mxu0 0.0
      %416 = vmatprep.subr.mxu0 0.0
      %417 = vmatpush1.msra.mxu0 0.0
      %418 = vmatprep.subr.mxu0 0.0
      %419 = vmatpush1.msra.mxu0 0.0
      %420 = vmatprep.subr.mxu0 0.0
      %421 = vmatpush1.msra.mxu0 0.0
      %422 = vmatprep.mubr.f32.mxu0 0.0
      %423 = vmatmul.mubr.f32.gmra.mrb[0].mxu0 %v356
      %v424 = vpop.f32.mrb[0].mxu0
      %v425 = vadd.f32 0.0, %v424
      %v426 = vpop.f32.mrb[0].mxu0
      %427 = vdwg.mxu0
      %v429 = vsel %vm281, %v252, 0
      %431 = vmatprep.subr.mxu0 0.0
      %432 = vmatpush1.msra.mxu0 %v244
      %433 = vmatprep.subr.mxu0 0.0
      %434 = vmatpush1.msra.mxu0 0.0
      %435 = vmatprep.subr.mxu0 0.0
      %436 = vmatpush1.msra.mxu0 0.0
      %437 = vmatprep.subr.mxu0 0.0
      %438 = vmatpush1.msra.mxu0 0.0
      %439 = vmatprep.subr.mxu0 0.0
      %440 = vmatpush1.msra.mxu0 0.0
      %441 = vmatprep.subr.mxu0 0.0
      %442 = vmatpush1.msra.mxu0 0.0
      %443 = vmatprep.subr.mxu0 0.0
      %444 = vmatpush1.msra.mxu0 0.0
      %445 = vmatprep.subr.mxu0 0.0
      %446 = vmatpush1.msra.mxu0 0.0
      %447 = vmatprep.subr.mxu0 0.0
      %448 = vmatpush1.msra.mxu0 0.0
      %449 = vmatprep.subr.mxu0 0.0
      %450 = vmatpush1.msra.mxu0 0.0
      %451 = vmatprep.subr.mxu0 0.0
      %452 = vmatpush1.msra.mxu0 0.0
      %453 = vmatprep.subr.mxu0 0.0
      %454 = vmatpush1.msra.mxu0 0.0
      %455 = vmatprep.subr.mxu0 0.0
      %456 = vmatpush1.msra.mxu0 0.0
      %457 = vmatprep.subr.mxu0 0.0
      %458 = vmatpush1.msra.mxu0 0.0
      %459 = vmatprep.subr.mxu0 0.0
      %460 = vmatpush1.msra.mxu0 0.0
      %461 = vmatprep.subr.mxu0 0.0
      %462 = vmatpush1.msra.mxu0 0.0
      %463 = vmatprep.subr.mxu0 0.0
      %464 = vmatpush1.msra.mxu0 0.0
      %465 = vmatprep.subr.mxu0 0.0
      %466 = vmatpush1.msra.mxu0 0.0
      %467 = vmatprep.subr.mxu0 0.0
      %468 = vmatpush1.msra.mxu0 0.0
      %469 = vmatprep.subr.mxu0 0.0
      %470 = vmatpush1.msra.mxu0 0.0
      %471 = vmatprep.subr.mxu0 0.0
      %472 = vmatpush1.msra.mxu0 0.0
      %473 = vmatprep.subr.mxu0 0.0
      %474 = vmatpush1.msra.mxu0 0.0
      %475 = vmatprep.subr.mxu0 0.0
      %476 = vmatpush1.msra.mxu0 0.0
      %477 = vmatprep.subr.mxu0 0.0
      %478 = vmatpush1.msra.mxu0 0.0
      %479 = vmatprep.subr.mxu0 0.0
      %480 = vmatpush1.msra.mxu0 0.0
      %481 = vmatprep.subr.mxu0 0.0
      %482 = vmatpush1.msra.mxu0 0.0
      %483 = vmatprep.subr.mxu0 0.0
      %484 = vmatpush1.msra.mxu0 0.0
      %485 = vmatprep.subr.mxu0 0.0
      %486 = vmatpush1.msra.mxu0 0.0
      %487 = vmatprep.subr.mxu0 0.0
      %488 = vmatpush1.msra.mxu0 0.0
      %489 = vmatprep.subr.mxu0 0.0
      %490 = vmatpush1.msra.mxu0 0.0
      %491 = vmatprep.subr.mxu0 0.0
      %492 = vmatpush1.msra.mxu0 0.0
      %493 = vmatprep.subr.mxu0 0.0
      %494 = vmatpush1.msra.mxu0 0.0
      %495 = vmatprep.mubr.f32.mxu0 0.0
      %496 = vmatmul.mubr.f32.gmra.mrb[0].mxu0 %v429
      %v497 = vpop.f32.mrb[0].mxu0
      %v498 = vadd.f32 0.0, %v497
      %v499 = vpop.f32.mrb[0].mxu0
      %500 = vdwg.mxu0
      %v502 = vsel %vm281, %v253, 0
      %504 = vmatprep.subr.mxu0 0.0
      %505 = vmatpush1.msra.mxu0 %v245
      %506 = vmatprep.subr.mxu0 0.0
      %507 = vmatpush1.msra.mxu0 0.0
      %508 = vmatprep.subr.mxu0 0.0
      %509 = vmatpush1.msra.mxu0 0.0
      %510 = vmatprep.subr.mxu0 0.0
      %511 = vmatpush1.msra.mxu0 0.0
      %512 = vmatprep.subr.mxu0 0.0
      %513 = vmatpush1.msra.mxu0 0.0
      %514 = vmatprep.subr.mxu0 0.0
      %515 = vmatpush1.msra.mxu0 0.0
      %516 = vmatprep.subr.mxu0 0.0
      %517 = vmatpush1.msra.mxu0 0.0
      %518 = vmatprep.subr.mxu0 0.0
      %519 = vmatpush1.msra.mxu0 0.0
      %520 = vmatprep.subr.mxu0 0.0
      %521 = vmatpush1.msra.mxu0 0.0
      %522 = vmatprep.subr.mxu0 0.0
      %523 = vmatpush1.msra.mxu0 0.0
      %524 = vmatprep.subr.mxu0 0.0
      %525 = vmatpush1.msra.mxu0 0.0
      %526 = vmatprep.subr.mxu0 0.0
      %527 = vmatpush1.msra.mxu0 0.0
      %528 = vmatprep.subr.mxu0 0.0
      %529 = vmatpush1.msra.mxu0 0.0
      %530 = vmatprep.subr.mxu0 0.0
      %531 = vmatpush1.msra.mxu0 0.0
      %532 = vmatprep.subr.mxu0 0.0
      %533 = vmatpush1.msra.mxu0 0.0
      %534 = vmatprep.subr.mxu0 0.0
      %535 = vmatpush1.msra.mxu0 0.0
      %536 = vmatprep.subr.mxu0 0.0
      %537 = vmatpush1.msra.mxu0 0.0
      %538 = vmatprep.subr.mxu0 0.0
      %539 = vmatpush1.msra.mxu0 0.0
      %540 = vmatprep.subr.mxu0 0.0
      %541 = vmatpush1.msra.mxu0 0.0
      %542 = vmatprep.subr.mxu0 0.0
      %543 = vmatpush1.msra.mxu0 0.0
      %544 = vmatprep.subr.mxu0 0.0
      %545 = vmatpush1.msra.mxu0 0.0
      %546 = vmatprep.subr.mxu0 0.0
      %547 = vmatpush1.msra.mxu0 0.0
      %548 = vmatprep.subr.mxu0 0.0
      %549 = vmatpush1.msra.mxu0 0.0
      %550 = vmatprep.subr.mxu0 0.0
      %551 = vmatpush1.msra.mxu0 0.0
      %552 = vmatprep.subr.mxu0 0.0
      %553 = vmatpush1.msra.mxu0 0.0
      %554 = vmatprep.subr.mxu0 0.0
      %555 = vmatpush1.msra.mxu0 0.0
      %556 = vmatprep.subr.mxu0 0.0
      %557 = vmatpush1.msra.mxu0 0.0
      %558 = vmatprep.subr.mxu0 0.0
      %559 = vmatpush1.msra.mxu0 0.0
      %560 = vmatprep.subr.mxu0 0.0
      %561 = vmatpush1.msra.mxu0 0.0
      %562 = vmatprep.subr.mxu0 0.0
      %563 = vmatpush1.msra.mxu0 0.0
      %564 = vmatprep.subr.mxu0 0.0
      %565 = vmatpush1.msra.mxu0 0.0
      %566 = vmatprep.subr.mxu0 0.0
      %567 = vmatpush1.msra.mxu0 0.0
      %568 = vmatprep.mubr.f32.mxu0 0.0
      %569 = vmatmul.mubr.f32.gmra.mrb[0].mxu0 %v502
      %v570 = vpop.f32.mrb[0].mxu0
      %v571 = vadd.f32 0.0, %v570
      %v572 = vpop.f32.mrb[0].mxu0
      %573 = vdwg.mxu0
      %v575 = vsel %vm281, %v254, 0
      %577 = vmatprep.subr.mxu0 0.0
      %578 = vmatpush1.msra.mxu0 %v246
      %579 = vmatprep.subr.mxu0 0.0
      %580 = vmatpush1.msra.mxu0 0.0
      %581 = vmatprep.subr.mxu0 0.0
      %582 = vmatpush1.msra.mxu0 0.0
      %583 = vmatprep.subr.mxu0 0.0
      %584 = vmatpush1.msra.mxu0 0.0
      %585 = vmatprep.subr.mxu0 0.0
      %586 = vmatpush1.msra.mxu0 0.0
      %587 = vmatprep.subr.mxu0 0.0
      %588 = vmatpush1.msra.mxu0 0.0
      %589 = vmatprep.subr.mxu0 0.0
      %590 = vmatpush1.msra.mxu0 0.0
      %591 = vmatprep.subr.mxu0 0.0
      %592 = vmatpush1.msra.mxu0 0.0
      %593 = vmatprep.subr.mxu0 0.0
      %594 = vmatpush1.msra.mxu0 0.0
      %595 = vmatprep.subr.mxu0 0.0
      %596 = vmatpush1.msra.mxu0 0.0
      %597 = vmatprep.subr.mxu0 0.0
      %598 = vmatpush1.msra.mxu0 0.0
      %599 = vmatprep.subr.mxu0 0.0
      %600 = vmatpush1.msra.mxu0 0.0
      %601 = vmatprep.subr.mxu0 0.0
      %602 = vmatpush1.msra.mxu0 0.0
      %603 = vmatprep.subr.mxu0 0.0
      %604 = vmatpush1.msra.mxu0 0.0
      %605 = vmatprep.subr.mxu0 0.0
      %606 = vmatpush1.msra.mxu0 0.0
      %607 = vmatprep.subr.mxu0 0.0
      %608 = vmatpush1.msra.mxu0 0.0
      %609 = vmatprep.subr.mxu0 0.0
      %610 = vmatpush1.msra.mxu0 0.0
      %611 = vmatprep.subr.mxu0 0.0
      %612 = vmatpush1.msra.mxu0 0.0
      %613 = vmatprep.subr.mxu0 0.0
      %614 = vmatpush1.msra.mxu0 0.0
      %615 = vmatprep.subr.mxu0 0.0
      %616 = vmatpush1.msra.mxu0 0.0
      %617 = vmatprep.subr.mxu0 0.0
      %618 = vmatpush1.msra.mxu0 0.0
      %619 = vmatprep.subr.mxu0 0.0
      %620 = vmatpush1.msra.mxu0 0.0
      %621 = vmatprep.subr.mxu0 0.0
      %622 = vmatpush1.msra.mxu0 0.0
      %623 = vmatprep.subr.mxu0 0.0
      %624 = vmatpush1.msra.mxu0 0.0
      %625 = vmatprep.subr.mxu0 0.0
      %626 = vmatpush1.msra.mxu0 0.0
      %627 = vmatprep.subr.mxu0 0.0
      %628 = vmatpush1.msra.mxu0 0.0
      %629 = vmatprep.subr.mxu0 0.0
      %630 = vmatpush1.msra.mxu0 0.0
      %631 = vmatprep.subr.mxu0 0.0
      %632 = vmatpush1.msra.mxu0 0.0
      %633 = vmatprep.subr.mxu0 0.0
      %634 = vmatpush1.msra.mxu0 0.0
      %635 = vmatprep.subr.mxu0 0.0
      %636 = vmatpush1.msra.mxu0 0.0
      %637 = vmatprep.subr.mxu0 0.0
      %638 = vmatpush1.msra.mxu0 0.0
      %639 = vmatprep.subr.mxu0 0.0
      %640 = vmatpush1.msra.mxu0 0.0
      %641 = vmatprep.mubr.f32.mxu0 0.0
      %642 = vmatmul.mubr.f32.gmra.mrb[0].mxu0 %v575
      %v643 = vpop.f32.mrb[0].mxu0
      %v644 = vadd.f32 0.0, %v643
      %v645 = vpop.f32.mrb[0].mxu0
      %646 = vdwg.mxu0
      %v648 = vsel %vm281, %v255, 0
      %650 = vmatprep.subr.mxu0 0.0
      %651 = vmatpush1.msra.mxu0 %v247
      %652 = vmatprep.subr.mxu0 0.0
      %653 = vmatpush1.msra.mxu0 0.0
      %654 = vmatprep.subr.mxu0 0.0
      %655 = vmatpush1.msra.mxu0 0.0
      %656 = vmatprep.subr.mxu0 0.0
      %657 = vmatpush1.msra.mxu0 0.0
      %658 = vmatprep.subr.mxu0 0.0
      %659 = vmatpush1.msra.mxu0 0.0
      %660 = vmatprep.subr.mxu0 0.0
      %661 = vmatpush1.msra.mxu0 0.0
      %662 = vmatprep.subr.mxu0 0.0
      %663 = vmatpush1.msra.mxu0 0.0
      %664 = vmatprep.subr.mxu0 0.0
      %665 = vmatpush1.msra.mxu0 0.0
      %666 = vmatprep.subr.mxu0 0.0
      %667 = vmatpush1.msra.mxu0 0.0
      %668 = vmatprep.subr.mxu0 0.0
      %669 = vmatpush1.msra.mxu0 0.0
      %670 = vmatprep.subr.mxu0 0.0
      %671 = vmatpush1.msra.mxu0 0.0
      %672 = vmatprep.subr.mxu0 0.0
      %673 = vmatpush1.msra.mxu0 0.0
      %674 = vmatprep.subr.mxu0 0.0
      %675 = vmatpush1.msra.mxu0 0.0
      %676 = vmatprep.subr.mxu0 0.0
      %677 = vmatpush1.msra.mxu0 0.0
      %678 = vmatprep.subr.mxu0 0.0
      %679 = vmatpush1.msra.mxu0 0.0
      %680 = vmatprep.subr.mxu0 0.0
      %681 = vmatpush1.msra.mxu0 0.0
      %682 = vmatprep.subr.mxu0 0.0
      %683 = vmatpush1.msra.mxu0 0.0
      %684 = vmatprep.subr.mxu0 0.0
      %685 = vmatpush1.msra.mxu0 0.0
      %686 = vmatprep.subr.mxu0 0.0
      %687 = vmatpush1.msra.mxu0 0.0
      %688 = vmatprep.subr.mxu0 0.0
      %689 = vmatpush1.msra.mxu0 0.0
      %690 = vmatprep.subr.mxu0 0.0
      %691 = vmatpush1.msra.mxu0 0.0
      %692 = vmatprep.subr.mxu0 0.0
      %693 = vmatpush1.msra.mxu0 0.0
      %694 = vmatprep.subr.mxu0 0.0
      %695 = vmatpush1.msra.mxu0 0.0
      %696 = vmatprep.subr.mxu0 0.0
      %697 = vmatpush1.msra.mxu0 0.0
      %698 = vmatprep.subr.mxu0 0.0
      %699 = vmatpush1.msra.mxu0 0.0
      %700 = vmatprep.subr.mxu0 0.0
      %701 = vmatpush1.msra.mxu0 0.0
      %702 = vmatprep.subr.mxu0 0.0
      %703 = vmatpush1.msra.mxu0 0.0
      %704 = vmatprep.subr.mxu0 0.0
      %705 = vmatpush1.msra.mxu0 0.0
      %706 = vmatprep.subr.mxu0 0.0
      %707 = vmatpush1.msra.mxu0 0.0
      %708 = vmatprep.subr.mxu0 0.0
      %709 = vmatpush1.msra.mxu0 0.0
      %710 = vmatprep.subr.mxu0 0.0
      %711 = vmatpush1.msra.mxu0 0.0
      %712 = vmatprep.subr.mxu0 0.0
      %713 = vmatpush1.msra.mxu0 0.0
      %714 = vmatprep.mubr.f32.mxu0 0.0
      %715 = vmatmul.mubr.f32.gmra.mrb[0].mxu0 %v648
      %v716 = vpop.f32.mrb[0].mxu0
      %v717 = vadd.f32 0.0, %v716
      %v718 = vpop.f32.mrb[0].mxu0
      %719 = vdwg.mxu0
      %v721 = vsel %vm281, %v256, 0
      %723 = vmatprep.subr.mxu0 0.0
      %724 = vmatpush1.msra.mxu0 %v248
      %725 = vmatprep.subr.mxu0 0.0
      %726 = vmatpush1.msra.mxu0 0.0
      %727 = vmatprep.subr.mxu0 0.0
      %728 = vmatpush1.msra.mxu0 0.0
      %729 = vmatprep.subr.mxu0 0.0
      %730 = vmatpush1.msra.mxu0 0.0
      %731 = vmatprep.subr.mxu0 0.0
      %732 = vmatpush1.msra.mxu0 0.0
      %733 = vmatprep.subr.mxu0 0.0
      %734 = vmatpush1.msra.mxu0 0.0
      %735 = vmatprep.subr.mxu0 0.0
      %736 = vmatpush1.msra.mxu0 0.0
      %737 = vmatprep.subr.mxu0 0.0
      %738 = vmatpush1.msra.mxu0 0.0
      %739 = vmatprep.subr.mxu0 0.0
      %740 = vmatpush1.msra.mxu0 0.0
      %741 = vmatprep.subr.mxu0 0.0
      %742 = vmatpush1.msra.mxu0 0.0
      %743 = vmatprep.subr.mxu0 0.0
      %744 = vmatpush1.msra.mxu0 0.0
      %745 = vmatprep.subr.mxu0 0.0
      %746 = vmatpush1.msra.mxu0 0.0
      %747 = vmatprep.subr.mxu0 0.0
      %748 = vmatpush1.msra.mxu0 0.0
      %749 = vmatprep.subr.mxu0 0.0
      %750 = vmatpush1.msra.mxu0 0.0
      %751 = vmatprep.subr.mxu0 0.0
      %752 = vmatpush1.msra.mxu0 0.0
      %753 = vmatprep.subr.mxu0 0.0
      %754 = vmatpush1.msra.mxu0 0.0
      %755 = vmatprep.subr.mxu0 0.0
      %756 = vmatpush1.msra.mxu0 0.0
      %757 = vmatprep.subr.mxu0 0.0
      %758 = vmatpush1.msra.mxu0 0.0
      %759 = vmatprep.subr.mxu0 0.0
      %760 = vmatpush1.msra.mxu0 0.0
      %761 = vmatprep.subr.mxu0 0.0
      %762 = vmatpush1.msra.mxu0 0.0
      %763 = vmatprep.subr.mxu0 0.0
      %764 = vmatpush1.msra.mxu0 0.0
      %765 = vmatprep.subr.mxu0 0.0
      %766 = vmatpush1.msra.mxu0 0.0
      %767 = vmatprep.subr.mxu0 0.0
      %768 = vmatpush1.msra.mxu0 0.0
      %769 = vmatprep.subr.mxu0 0.0
      %770 = vmatpush1.msra.mxu0 0.0
      %771 = vmatprep.subr.mxu0 0.0
      %772 = vmatpush1.msra.mxu0 0.0
      %773 = vmatprep.subr.mxu0 0.0
      %774 = vmatpush1.msra.mxu0 0.0
      %775 = vmatprep.subr.mxu0 0.0
      %776 = vmatpush1.msra.mxu0 0.0
      %777 = vmatprep.subr.mxu0 0.0
      %778 = vmatpush1.msra.mxu0 0.0
      %779 = vmatprep.subr.mxu0 0.0
      %780 = vmatpush1.msra.mxu0 0.0
      %781 = vmatprep.subr.mxu0 0.0
      %782 = vmatpush1.msra.mxu0 0.0
      %783 = vmatprep.subr.mxu0 0.0
      %784 = vmatpush1.msra.mxu0 0.0
      %785 = vmatprep.subr.mxu0 0.0
      %786 = vmatpush1.msra.mxu0 0.0
      %787 = vmatprep.mubr.f32.mxu0 0.0
      %788 = vmatmul.mubr.f32.gmra.mrb[0].mxu0 %v721
      %v789 = vpop.f32.mrb[0].mxu0
      %v790 = vadd.f32 0.0, %v789
      %v791 = vpop.f32.mrb[0].mxu0
      %792 = vdwg.mxu0
      %v794 = vsel %vm281, %v257, 0
      %796 = vmatprep.subr.mxu0 0.0
      %797 = vmatpush1.msra.mxu0 %v249
      %798 = vmatprep.subr.mxu0 0.0
      %799 = vmatpush1.msra.mxu0 0.0
      %800 = vmatprep.subr.mxu0 0.0
      %801 = vmatpush1.msra.mxu0 0.0
      %802 = vmatprep.subr.mxu0 0.0
      %803 = vmatpush1.msra.mxu0 0.0
      %804 = vmatprep.subr.mxu0 0.0
      %805 = vmatpush1.msra.mxu0 0.0
      %806 = vmatprep.subr.mxu0 0.0
      %807 = vmatpush1.msra.mxu0 0.0
      %808 = vmatprep.subr.mxu0 0.0
      %809 = vmatpush1.msra.mxu0 0.0
      %810 = vmatprep.subr.mxu0 0.0
      %811 = vmatpush1.msra.mxu0 0.0
      %812 = vmatprep.subr.mxu0 0.0
      %813 = vmatpush1.msra.mxu0 0.0
      %814 = vmatprep.subr.mxu0 0.0
      %815 = vmatpush1.msra.mxu0 0.0
      %816 = vmatprep.subr.mxu0 0.0
      %817 = vmatpush1.msra.mxu0 0.0
      %818 = vmatprep.subr.mxu0 0.0
      %819 = vmatpush1.msra.mxu0 0.0
      %820 = vmatprep.subr.mxu0 0.0
      %821 = vmatpush1.msra.mxu0 0.0
      %822 = vmatprep.subr.mxu0 0.0
      %823 = vmatpush1.msra.mxu0 0.0
      %824 = vmatprep.subr.mxu0 0.0
      %825 = vmatpush1.msra.mxu0 0.0
      %826 = vmatprep.subr.mxu0 0.0
      %827 = vmatpush1.msra.mxu0 0.0
      %828 = vmatprep.subr.mxu0 0.0
      %829 = vmatpush1.msra.mxu0 0.0
      %830 = vmatprep.subr.mxu0 0.0
      %831 = vmatpush1.msra.mxu0 0.0
      %832 = vmatprep.subr.mxu0 0.0
      %833 = vmatpush1.msra.mxu0 0.0
      %834 = vmatprep.subr.mxu0 0.0
      %835 = vmatpush1.msra.mxu0 0.0
      %836 = vmatprep.subr.mxu0 0.0
      %837 = vmatpush1.msra.mxu0 0.0
      %838 = vmatprep.subr.mxu0 0.0
      %839 = vmatpush1.msra.mxu0 0.0
      %840 = vmatprep.subr.mxu0 0.0
      %841 = vmatpush1.msra.mxu0 0.0
      %842 = vmatprep.subr.mxu0 0.0
      %843 = vmatpush1.msra.mxu0 0.0
      %844 = vmatprep.subr.mxu0 0.0
      %845 = vmatpush1.msra.mxu0 0.0
      %846 = vmatprep.subr.mxu0 0.0
      %847 = vmatpush1.msra.mxu0 0.0
      %848 = vmatprep.subr.mxu0 0.0
      %849 = vmatpush1.msra.mxu0 0.0
      %850 = vmatprep.subr.mxu0 0.0
      %851 = vmatpush1.msra.mxu0 0.0
      %852 = vmatprep.subr.mxu0 0.0
      %853 = vmatpush1.msra.mxu0 0.0
      %854 = vmatprep.subr.mxu0 0.0
      %855 = vmatpush1.msra.mxu0 0.0
      %856 = vmatprep.subr.mxu0 0.0
      %857 = vmatpush1.msra.mxu0 0.0
      %858 = vmatprep.subr.mxu0 0.0
      %859 = vmatpush1.msra.mxu0 0.0
      %860 = vmatprep.mubr.f32.mxu0 0.0
      %861 = vmatmul.mubr.f32.gmra.mrb[0].mxu0 %v794
      %v862 = vpop.f32.mrb[0].mxu0
      %v863 = vadd.f32 0.0, %v862
      %v864 = vpop.f32.mrb[0].mxu0
      %865 = vdwg.mxu0
      %866 = vmatprep.subr.mxu0 0.0
      %867 = vmatpush1.msra.mxu0 %v352
      %868 = vmatprep.subr.mxu0 0.0
      %869 = vmatpush1.msra.mxu0 0.0
      %870 = vmatprep.subr.mxu0 0.0
      %871 = vmatpush1.msra.mxu0 0.0
      %872 = vmatprep.subr.mxu0 0.0
      %873 = vmatpush1.msra.mxu0 0.0
      %874 = vmatprep.subr.mxu0 0.0
      %875 = vmatpush1.msra.mxu0 0.0
      %876 = vmatprep.subr.mxu0 0.0
      %877 = vmatpush1.msra.mxu0 0.0
      %878 = vmatprep.subr.mxu0 0.0
      %879 = vmatpush1.msra.mxu0 0.0
      %880 = vmatprep.subr.mxu0 0.0
      %881 = vmatpush1.msra.mxu0 0.0
      %882 = vmatprep.subr.mxu0 0.0
      %883 = vmatpush1.msra.mxu0 0.0
      %884 = vmatprep.subr.mxu0 0.0
      %885 = vmatpush1.msra.mxu0 0.0
      %886 = vmatprep.subr.mxu0 0.0
      %887 = vmatpush1.msra.mxu0 0.0
      %888 = vmatprep.subr.mxu0 0.0
      %889 = vmatpush1.msra.mxu0 0.0
      %890 = vmatprep.subr.mxu0 0.0
      %891 = vmatpush1.msra.mxu0 0.0
      %892 = vmatprep.subr.mxu0 0.0
      %893 = vmatpush1.msra.mxu0 0.0
      %894 = vmatprep.subr.mxu0 0.0
      %895 = vmatpush1.msra.mxu0 0.0
      %896 = vmatprep.subr.mxu0 0.0
      %897 = vmatpush1.msra.mxu0 0.0
      %898 = vmatprep.subr.mxu0 0.0
      %899 = vmatpush1.msra.mxu0 0.0
      %900 = vmatprep.subr.mxu0 0.0
      %901 = vmatpush1.msra.mxu0 0.0
      %902 = vmatprep.subr.mxu0 0.0
      %903 = vmatpush1.msra.mxu0 0.0
      %904 = vmatprep.subr.mxu0 0.0
      %905 = vmatpush1.msra.mxu0 0.0
      %906 = vmatprep.subr.mxu0 0.0
      %907 = vmatpush1.msra.mxu0 0.0
      %908 = vmatprep.subr.mxu0 0.0
      %909 = vmatpush1.msra.mxu0 0.0
      %910 = vmatprep.subr.mxu0 0.0
      %911 = vmatpush1.msra.mxu0 0.0
      %912 = vmatprep.subr.mxu0 0.0
      %913 = vmatpush1.msra.mxu0 0.0
      %914 = vmatprep.subr.mxu0 0.0
      %915 = vmatpush1.msra.mxu0 0.0
      %916 = vmatprep.subr.mxu0 0.0
      %917 = vmatpush1.msra.mxu0 0.0
      %918 = vmatprep.subr.mxu0 0.0
      %919 = vmatpush1.msra.mxu0 0.0
      %920 = vmatprep.subr.mxu0 0.0
      %921 = vmatpush1.msra.mxu0 0.0
      %922 = vmatprep.subr.mxu0 0.0
      %923 = vmatpush1.msra.mxu0 0.0
      %924 = vmatprep.subr.mxu0 0.0
      %925 = vmatpush1.msra.mxu0 0.0
      %926 = vmatprep.subr.mxu0 0.0
      %927 = vmatpush1.msra.mxu0 0.0
      %928 = vmatprep.subr.mxu0 0.0
      %929 = vmatpush1.msra.mxu0 0.0
      %930 = vmatprep.mubr.f32.mxu0 0.0
      %931 = vmatmul.mubr.f32.gmra.mrb[0].mxu0 %v283
      %v932 = vpop.f32.mrb[0].mxu0
      %v933 = vadd.f32 0.0, %v932
      %v934 = vpop.f32.mrb[0].mxu0
      %935 = vdwg.mxu0
      %936 = vmatprep.subr.mxu0 0.0
      %937 = vmatpush1.msra.mxu0 %v425
      %938 = vmatprep.subr.mxu0 0.0
      %939 = vmatpush1.msra.mxu0 0.0
      %940 = vmatprep.subr.mxu0 0.0
      %941 = vmatpush1.msra.mxu0 0.0
      %942 = vmatprep.subr.mxu0 0.0
      %943 = vmatpush1.msra.mxu0 0.0
      %944 = vmatprep.subr.mxu0 0.0
      %945 = vmatpush1.msra.mxu0 0.0
      %946 = vmatprep.subr.mxu0 0.0
      %947 = vmatpush1.msra.mxu0 0.0
      %948 = vmatprep.subr.mxu0 0.0
      %949 = vmatpush1.msra.mxu0 0.0
      %950 = vmatprep.subr.mxu0 0.0
      %951 = vmatpush1.msra.mxu0 0.0
      %952 = vmatprep.subr.mxu0 0.0
      %953 = vmatpush1.msra.mxu0 0.0
      %954 = vmatprep.subr.mxu0 0.0
      %955 = vmatpush1.msra.mxu0 0.0
      %956 = vmatprep.subr.mxu0 0.0
      %957 = vmatpush1.msra.mxu0 0.0
      %958 = vmatprep.subr.mxu0 0.0
      %959 = vmatpush1.msra.mxu0 0.0
      %960 = vmatprep.subr.mxu0 0.0
      %961 = vmatpush1.msra.mxu0 0.0
      %962 = vmatprep.subr.mxu0 0.0
      %963 = vmatpush1.msra.mxu0 0.0
      %964 = vmatprep.subr.mxu0 0.0
      %965 = vmatpush1.msra.mxu0 0.0
      %966 = vmatprep.subr.mxu0 0.0
      %967 = vmatpush1.msra.mxu0 0.0
      %968 = vmatprep.subr.mxu0 0.0
      %969 = vmatpush1.msra.mxu0 0.0
      %970 = vmatprep.subr.mxu0 0.0
      %971 = vmatpush1.msra.mxu0 0.0
      %972 = vmatprep.subr.mxu0 0.0
      %973 = vmatpush1.msra.mxu0 0.0
      %974 = vmatprep.subr.mxu0 0.0
      %975 = vmatpush1.msra.mxu0 0.0
      %976 = vmatprep.subr.mxu0 0.0
      %977 = vmatpush1.msra.mxu0 0.0
      %978 = vmatprep.subr.mxu0 0.0
      %979 = vmatpush1.msra.mxu0 0.0
      %980 = vmatprep.subr.mxu0 0.0
      %981 = vmatpush1.msra.mxu0 0.0
      %982 = vmatprep.subr.mxu0 0.0
      %983 = vmatpush1.msra.mxu0 0.0
      %984 = vmatprep.subr.mxu0 0.0
      %985 = vmatpush1.msra.mxu0 0.0
      %986 = vmatprep.subr.mxu0 0.0
      %987 = vmatpush1.msra.mxu0 0.0
      %988 = vmatprep.subr.mxu0 0.0
      %989 = vmatpush1.msra.mxu0 0.0
      %990 = vmatprep.subr.mxu0 0.0
      %991 = vmatpush1.msra.mxu0 0.0
      %992 = vmatprep.subr.mxu0 0.0
      %993 = vmatpush1.msra.mxu0 0.0
      %994 = vmatprep.subr.mxu0 0.0
      %995 = vmatpush1.msra.mxu0 0.0
      %996 = vmatprep.subr.mxu0 0.0
      %997 = vmatpush1.msra.mxu0 0.0
      %998 = vmatprep.subr.mxu0 0.0
      %999 = vmatpush1.msra.mxu0 0.0
      %1000 = vmatprep.mubr.f32.mxu0 0.0
      %1001 = vmatmul.mubr.f32.gmra.mrb[0].mxu0 %v356
      %v1002 = vpop.f32.mrb[0].mxu0
      %v1003 = vadd.f32 0.0, %v1002
      %v1004 = vpop.f32.mrb[0].mxu0
      %1005 = vdwg.mxu0
      %1006 = vmatprep.subr.mxu0 0.0
      %1007 = vmatpush1.msra.mxu0 %v498
      %1008 = vmatprep.subr.mxu0 0.0
      %1009 = vmatpush1.msra.mxu0 0.0
      %1010 = vmatprep.subr.mxu0 0.0
      %1011 = vmatpush1.msra.mxu0 0.0
      %1012 = vmatprep.subr.mxu0 0.0
      %1013 = vmatpush1.msra.mxu0 0.0
      %1014 = vmatprep.subr.mxu0 0.0
      %1015 = vmatpush1.msra.mxu0 0.0
      %1016 = vmatprep.subr.mxu0 0.0
      %1017 = vmatpush1.msra.mxu0 0.0
      %1018 = vmatprep.subr.mxu0 0.0
      %1019 = vmatpush1.msra.mxu0 0.0
      %1020 = vmatprep.subr.mxu0 0.0
      %1021 = vmatpush1.msra.mxu0 0.0
      %1022 = vmatprep.subr.mxu0 0.0
      %1023 = vmatpush1.msra.mxu0 0.0
      %1024 = vmatprep.subr.mxu0 0.0
      %1025 = vmatpush1.msra.mxu0 0.0
      %1026 = vmatprep.subr.mxu0 0.0
      %1027 = vmatpush1.msra.mxu0 0.0
      %1028 = vmatprep.subr.mxu0 0.0
      %1029 = vmatpush1.msra.mxu0 0.0
      %1030 = vmatprep.subr.mxu0 0.0
      %1031 = vmatpush1.msra.mxu0 0.0
      %1032 = vmatprep.subr.mxu0 0.0
      %1033 = vmatpush1.msra.mxu0 0.0
      %1034 = vmatprep.subr.mxu0 0.0
      %1035 = vmatpush1.msra.mxu0 0.0
      %1036 = vmatprep.subr.mxu0 0.0
      %1037 = vmatpush1.msra.mxu0 0.0
      %1038 = vmatprep.subr.mxu0 0.0
      %1039 = vmatpush1.msra.mxu0 0.0
      %1040 = vmatprep.subr.mxu0 0.0
      %1041 = vmatpush1.msra.mxu0 0.0
      %1042 = vmatprep.subr.mxu0 0.0
      %1043 = vmatpush1.msra.mxu0 0.0
      %1044 = vmatprep.subr.mxu0 0.0
      %1045 = vmatpush1.msra.mxu0 0.0
      %1046 = vmatprep.subr.mxu0 0.0
      %1047 = vmatpush1.msra.mxu0 0.0
      %1048 = vmatprep.subr.mxu0 0.0
      %1049 = vmatpush1.msra.mxu0 0.0
      %1050 = vmatprep.subr.mxu0 0.0
      %1051 = vmatpush1.msra.mxu0 0.0
      %1052 = vmatprep.subr.mxu0 0.0
      %1053 = vmatpush1.msra.mxu0 0.0
      %1054 = vmatprep.subr.mxu0 0.0
      %1055 = vmatpush1.msra.mxu0 0.0
      %1056 = vmatprep.subr.mxu0 0.0
      %1057 = vmatpush1.msra.mxu0 0.0
      %1058 = vmatprep.subr.mxu0 0.0
      %1059 = vmatpush1.msra.mxu0 0.0
      %1060 = vmatprep.subr.mxu0 0.0
      %1061 = vmatpush1.msra.mxu0 0.0
      %1062 = vmatprep.subr.mxu0 0.0
      %1063 = vmatpush1.msra.mxu0 0.0
      %1064 = vmatprep.subr.mxu0 0.0
      %1065 = vmatpush1.msra.mxu0 0.0
      %1066 = vmatprep.subr.mxu0 0.0
      %1067 = vmatpush1.msra.mxu0 0.0
      %1068 = vmatprep.subr.mxu0 0.0
      %1069 = vmatpush1.msra.mxu0 0.0
      %1070 = vmatprep.mubr.f32.mxu0 0.0
      %1071 = vmatmul.mubr.f32.gmra.mrb[0].mxu0 %v429
      %v1072 = vpop.f32.mrb[0].mxu0
      %v1073 = vadd.f32 0.0, %v1072
      %v1074 = vpop.f32.mrb[0].mxu0
      %1075 = vdwg.mxu0
      %1076 = vmatprep.subr.mxu0 0.0
      %1077 = vmatpush1.msra.mxu0 %v571
      %1078 = vmatprep.subr.mxu0 0.0
      %1079 = vmatpush1.msra.mxu0 0.0
      %1080 = vmatprep.subr.mxu0 0.0
      %1081 = vmatpush1.msra.mxu0 0.0
      %1082 = vmatprep.subr.mxu0 0.0
      %1083 = vmatpush1.msra.mxu0 0.0
      %1084 = vmatprep.subr.mxu0 0.0
      %1085 = vmatpush1.msra.mxu0 0.0
      %1086 = vmatprep.subr.mxu0 0.0
      %1087 = vmatpush1.msra.mxu0 0.0
      %1088 = vmatprep.subr.mxu0 0.0
      %1089 = vmatpush1.msra.mxu0 0.0
      %1090 = vmatprep.subr.mxu0 0.0
      %1091 = vmatpush1.msra.mxu0 0.0
      %1092 = vmatprep.subr.mxu0 0.0
      %1093 = vmatpush1.msra.mxu0 0.0
      %1094 = vmatprep.subr.mxu0 0.0
      %1095 = vmatpush1.msra.mxu0 0.0
      %1096 = vmatprep.subr.mxu0 0.0
      %1097 = vmatpush1.msra.mxu0 0.0
      %1098 = vmatprep.subr.mxu0 0.0
      %1099 = vmatpush1.msra.mxu0 0.0
      %1100 = vmatprep.subr.mxu0 0.0
      %1101 = vmatpush1.msra.mxu0 0.0
      %1102 = vmatprep.subr.mxu0 0.0
      %1103 = vmatpush1.msra.mxu0 0.0
      %1104 = vmatprep.subr.mxu0 0.0
      %1105 = vmatpush1.msra.mxu0 0.0
      %1106 = vmatprep.subr.mxu0 0.0
      %1107 = vmatpush1.msra.mxu0 0.0
      %1108 = vmatprep.subr.mxu0 0.0
      %1109 = vmatpush1.msra.mxu0 0.0
      %1110 = vmatprep.subr.mxu0 0.0
      %1111 = vmatpush1.msra.mxu0 0.0
      %1112 = vmatprep.subr.mxu0 0.0
      %1113 = vmatpush1.msra.mxu0 0.0
      %1114 = vmatprep.subr.mxu0 0.0
      %1115 = vmatpush1.msra.mxu0 0.0
      %1116 = vmatprep.subr.mxu0 0.0
      %1117 = vmatpush1.msra.mxu0 0.0
      %1118 = vmatprep.subr.mxu0 0.0
      %1119 = vmatpush1.msra.mxu0 0.0
      %1120 = vmatprep.subr.mxu0 0.0
      %1121 = vmatpush1.msra.mxu0 0.0
      %1122 = vmatprep.subr.mxu0 0.0
      %1123 = vmatpush1.msra.mxu0 0.0
      %1124 = vmatprep.subr.mxu0 0.0
      %1125 = vmatpush1.msra.mxu0 0.0
      %1126 = vmatprep.subr.mxu0 0.0
      %1127 = vmatpush1.msra.mxu0 0.0
      %1128 = vmatprep.subr.mxu0 0.0
      %1129 = vmatpush1.msra.mxu0 0.0
      %1130 = vmatprep.subr.mxu0 0.0
      %1131 = vmatpush1.msra.mxu0 0.0
      %1132 = vmatprep.subr.mxu0 0.0
      %1133 = vmatpush1.msra.mxu0 0.0
      %1134 = vmatprep.subr.mxu0 0.0
      %1135 = vmatpush1.msra.mxu0 0.0
      %1136 = vmatprep.subr.mxu0 0.0
      %1137 = vmatpush1.msra.mxu0 0.0
      %1138 = vmatprep.subr.mxu0 0.0
      %1139 = vmatpush1.msra.mxu0 0.0
      %1140 = vmatprep.mubr.f32.mxu0 0.0
      %1141 = vmatmul.mubr.f32.gmra.mrb[0].mxu0 %v502
      %v1142 = vpop.f32.mrb[0].mxu0
      %v1143 = vadd.f32 0.0, %v1142
      %v1144 = vpop.f32.mrb[0].mxu0
      %1145 = vdwg.mxu0
      %1146 = vmatprep.subr.mxu0 0.0
      %1147 = vmatpush1.msra.mxu0 %v644
      %1148 = vmatprep.subr.mxu0 0.0
      %1149 = vmatpush1.msra.mxu0 0.0
      %1150 = vmatprep.subr.mxu0 0.0
      %1151 = vmatpush1.msra.mxu0 0.0
      %1152 = vmatprep.subr.mxu0 0.0
      %1153 = vmatpush1.msra.mxu0 0.0
      %1154 = vmatprep.subr.mxu0 0.0
      %1155 = vmatpush1.msra.mxu0 0.0
      %1156 = vmatprep.subr.mxu0 0.0
      %1157 = vmatpush1.msra.mxu0 0.0
      %1158 = vmatprep.subr.mxu0 0.0
      %1159 = vmatpush1.msra.mxu0 0.0
      %1160 = vmatprep.subr.mxu0 0.0
      %1161 = vmatpush1.msra.mxu0 0.0
      %1162 = vmatprep.subr.mxu0 0.0
      %1163 = vmatpush1.msra.mxu0 0.0
      %1164 = vmatprep.subr.mxu0 0.0
      %1165 = vmatpush1.msra.mxu0 0.0
      %1166 = vmatprep.subr.mxu0 0.0
      %1167 = vmatpush1.msra.mxu0 0.0
      %1168 = vmatprep.subr.mxu0 0.0
      %1169 = vmatpush1.msra.mxu0 0.0
      %1170 = vmatprep.subr.mxu0 0.0
      %1171 = vmatpush1.msra.mxu0 0.0
      %1172 = vmatprep.subr.mxu0 0.0
      %1173 = vmatpush1.msra.mxu0 0.0
      %1174 = vmatprep.subr.mxu0 0.0
      %1175 = vmatpush1.msra.mxu0 0.0
      %1176 = vmatprep.subr.mxu0 0.0
      %1177 = vmatpush1.msra.mxu0 0.0
      %1178 = vmatprep.subr.mxu0 0.0
      %1179 = vmatpush1.msra.mxu0 0.0
      %1180 = vmatprep.subr.mxu0 0.0
      %1181 = vmatpush1.msra.mxu0 0.0
      %1182 = vmatprep.subr.mxu0 0.0
      %1183 = vmatpush1.msra.mxu0 0.0
      %1184 = vmatprep.subr.mxu0 0.0
      %1185 = vmatpush1.msra.mxu0 0.0
      %1186 = vmatprep.subr.mxu0 0.0
      %1187 = vmatpush1.msra.mxu0 0.0
      %1188 = vmatprep.subr.mxu0 0.0
      %1189 = vmatpush1.msra.mxu0 0.0
      %1190 = vmatprep.subr.mxu0 0.0
      %1191 = vmatpush1.msra.mxu0 0.0
      %1192 = vmatprep.subr.mxu0 0.0
      %1193 = vmatpush1.msra.mxu0 0.0
      %1194 = vmatprep.subr.mxu0 0.0
      %1195 = vmatpush1.msra.mxu0 0.0
      %1196 = vmatprep.subr.mxu0 0.0
      %1197 = vmatpush1.msra.mxu0 0.0
      %1198 = vmatprep.subr.mxu0 0.0
      %1199 = vmatpush1.msra.mxu0 0.0
      %1200 = vmatprep.subr.mxu0 0.0
      %1201 = vmatpush1.msra.mxu0 0.0
      %1202 = vmatprep.subr.mxu0 0.0
      %1203 = vmatpush1.msra.mxu0 0.0
      %1204 = vmatprep.subr.mxu0 0.0
      %1205 = vmatpush1.msra.mxu0 0.0
      %1206 = vmatprep.subr.mxu0 0.0
      %1207 = vmatpush1.msra.mxu0 0.0
      %1208 = vmatprep.subr.mxu0 0.0
      %1209 = vmatpush1.msra.mxu0 0.0
      %1210 = vmatprep.mubr.f32.mxu0 0.0
      %1211 = vmatmul.mubr.f32.gmra.mrb[0].mxu0 %v575
      %v1212 = vpop.f32.mrb[0].mxu0
      %v1213 = vadd.f32 0.0, %v1212
      %v1214 = vpop.f32.mrb[0].mxu0
      %1215 = vdwg.mxu0
      %1216 = vmatprep.subr.mxu0 0.0
      %1217 = vmatpush1.msra.mxu0 %v717
      %1218 = vmatprep.subr.mxu0 0.0
      %1219 = vmatpush1.msra.mxu0 0.0
      %1220 = vmatprep.subr.mxu0 0.0
      %1221 = vmatpush1.msra.mxu0 0.0
      %1222 = vmatprep.subr.mxu0 0.0
      %1223 = vmatpush1.msra.mxu0 0.0
      %1224 = vmatprep.subr.mxu0 0.0
      %1225 = vmatpush1.msra.mxu0 0.0
      %1226 = vmatprep.subr.mxu0 0.0
      %1227 = vmatpush1.msra.mxu0 0.0
      %1228 = vmatprep.subr.mxu0 0.0
      %1229 = vmatpush1.msra.mxu0 0.0
      %1230 = vmatprep.subr.mxu0 0.0
      %1231 = vmatpush1.msra.mxu0 0.0
      %1232 = vmatprep.subr.mxu0 0.0
      %1233 = vmatpush1.msra.mxu0 0.0
      %1234 = vmatprep.subr.mxu0 0.0
      %1235 = vmatpush1.msra.mxu0 0.0
      %1236 = vmatprep.subr.mxu0 0.0
      %1237 = vmatpush1.msra.mxu0 0.0
      %1238 = vmatprep.subr.mxu0 0.0
      %1239 = vmatpush1.msra.mxu0 0.0
      %1240 = vmatprep.subr.mxu0 0.0
      %1241 = vmatpush1.msra.mxu0 0.0
      %1242 = vmatprep.subr.mxu0 0.0
      %1243 = vmatpush1.msra.mxu0 0.0
      %1244 = vmatprep.subr.mxu0 0.0
      %1245 = vmatpush1.msra.mxu0 0.0
      %1246 = vmatprep.subr.mxu0 0.0
      %1247 = vmatpush1.msra.mxu0 0.0
      %1248 = vmatprep.subr.mxu0 0.0
      %1249 = vmatpush1.msra.mxu0 0.0
      %1250 = vmatprep.subr.mxu0 0.0
      %1251 = vmatpush1.msra.mxu0 0.0
      %1252 = vmatprep.subr.mxu0 0.0
      %1253 = vmatpush1.msra.mxu0 0.0
      %1254 = vmatprep.subr.mxu0 0.0
      %1255 = vmatpush1.msra.mxu0 0.0
      %1256 = vmatprep.subr.mxu0 0.0
      %1257 = vmatpush1.msra.mxu0 0.0
      %1258 = vmatprep.subr.mxu0 0.0
      %1259 = vmatpush1.msra.mxu0 0.0
      %1260 = vmatprep.subr.mxu0 0.0
      %1261 = vmatpush1.msra.mxu0 0.0
      %1262 = vmatprep.subr.mxu0 0.0
      %1263 = vmatpush1.msra.mxu0 0.0
      %1264 = vmatprep.subr.mxu0 0.0
      %1265 = vmatpush1.msra.mxu0 0.0
      %1266 = vmatprep.subr.mxu0 0.0
      %1267 = vmatpush1.msra.mxu0 0.0
      %1268 = vmatprep.subr.mxu0 0.0
      %1269 = vmatpush1.msra.mxu0 0.0
      %1270 = vmatprep.subr.mxu0 0.0
      %1271 = vmatpush1.msra.mxu0 0.0
      %1272 = vmatprep.subr.mxu0 0.0
      %1273 = vmatpush1.msra.mxu0 0.0
      %1274 = vmatprep.subr.mxu0 0.0
      %1275 = vmatpush1.msra.mxu0 0.0
      %1276 = vmatprep.subr.mxu0 0.0
      %1277 = vmatpush1.msra.mxu0 0.0
      %1278 = vmatprep.subr.mxu0 0.0
      %1279 = vmatpush1.msra.mxu0 0.0
      %1280 = vmatprep.mubr.f32.mxu0 0.0
      %1281 = vmatmul.mubr.f32.gmra.mrb[0].mxu0 %v648
      %v1282 = vpop.f32.mrb[0].mxu0
      %v1283 = vadd.f32 0.0, %v1282
      %v1284 = vpop.f32.mrb[0].mxu0
      %1285 = vdwg.mxu0
      %1286 = vmatprep.subr.mxu0 0.0
      %1287 = vmatpush1.msra.mxu0 %v790
      %1288 = vmatprep.subr.mxu0 0.0
      %1289 = vmatpush1.msra.mxu0 0.0
      %1290 = vmatprep.subr.mxu0 0.0
      %1291 = vmatpush1.msra.mxu0 0.0
      %1292 = vmatprep.subr.mxu0 0.0
      %1293 = vmatpush1.msra.mxu0 0.0
      %1294 = vmatprep.subr.mxu0 0.0
      %1295 = vmatpush1.msra.mxu0 0.0
      %1296 = vmatprep.subr.mxu0 0.0
      %1297 = vmatpush1.msra.mxu0 0.0
      %1298 = vmatprep.subr.mxu0 0.0
      %1299 = vmatpush1.msra.mxu0 0.0
      %1300 = vmatprep.subr.mxu0 0.0
      %1301 = vmatpush1.msra.mxu0 0.0
      %1302 = vmatprep.subr.mxu0 0.0
      %1303 = vmatpush1.msra.mxu0 0.0
      %1304 = vmatprep.subr.mxu0 0.0
      %1305 = vmatpush1.msra.mxu0 0.0
      %1306 = vmatprep.subr.mxu0 0.0
      %1307 = vmatpush1.msra.mxu0 0.0
      %1308 = vmatprep.subr.mxu0 0.0
      %1309 = vmatpush1.msra.mxu0 0.0
      %1310 = vmatprep.subr.mxu0 0.0
      %1311 = vmatpush1.msra.mxu0 0.0
      %1312 = vmatprep.subr.mxu0 0.0
      %1313 = vmatpush1.msra.mxu0 0.0
      %1314 = vmatprep.subr.mxu0 0.0
      %1315 = vmatpush1.msra.mxu0 0.0
      %1316 = vmatprep.subr.mxu0 0.0
      %1317 = vmatpush1.msra.mxu0 0.0
      %1318 = vmatprep.subr.mxu0 0.0
      %1319 = vmatpush1.msra.mxu0 0.0
      %1320 = vmatprep.subr.mxu0 0.0
      %1321 = vmatpush1.msra.mxu0 0.0
      %1322 = vmatprep.subr.mxu0 0.0
      %1323 = vmatpush1.msra.mxu0 0.0
      %1324 = vmatprep.subr.mxu0 0.0
      %1325 = vmatpush1.msra.mxu0 0.0
      %1326 = vmatprep.subr.mxu0 0.0
      %1327 = vmatpush1.msra.mxu0 0.0
      %1328 = vmatprep.subr.mxu0 0.0
      %1329 = vmatpush1.msra.mxu0 0.0
      %1330 = vmatprep.subr.mxu0 0.0
      %1331 = vmatpush1.msra.mxu0 0.0
      %1332 = vmatprep.subr.mxu0 0.0
      %1333 = vmatpush1.msra.mxu0 0.0
      %1334 = vmatprep.subr.mxu0 0.0
      %1335 = vmatpush1.msra.mxu0 0.0
      %1336 = vmatprep.subr.mxu0 0.0
      %1337 = vmatpush1.msra.mxu0 0.0
      %1338 = vmatprep.subr.mxu0 0.0
      %1339 = vmatpush1.msra.mxu0 0.0
      %1340 = vmatprep.subr.mxu0 0.0
      %1341 = vmatpush1.msra.mxu0 0.0
      %1342 = vmatprep.subr.mxu0 0.0
      %1343 = vmatpush1.msra.mxu0 0.0
      %1344 = vmatprep.subr.mxu0 0.0
      %1345 = vmatpush1.msra.mxu0 0.0
      %1346 = vmatprep.subr.mxu0 0.0
      %1347 = vmatpush1.msra.mxu0 0.0
      %1348 = vmatprep.subr.mxu0 0.0
      %1349 = vmatpush1.msra.mxu0 0.0
      %1350 = vmatprep.mubr.f32.mxu0 0.0
      %1351 = vmatmul.mubr.f32.gmra.mrb[0].mxu0 %v721
      %v1352 = vpop.f32.mrb[0].mxu0
      %v1353 = vadd.f32 0.0, %v1352
      %v1354 = vpop.f32.mrb[0].mxu0
      %1355 = vdwg.mxu0
      %1356 = vmatprep.subr.mxu0 0.0
      %1357 = vmatpush1.msra.mxu0 %v863
      %1358 = vmatprep.subr.mxu0 0.0
      %1359 = vmatpush1.msra.mxu0 0.0
      %1360 = vmatprep.subr.mxu0 0.0
      %1361 = vmatpush1.msra.mxu0 0.0
      %1362 = vmatprep.subr.mxu0 0.0
      %1363 = vmatpush1.msra.mxu0 0.0
      %1364 = vmatprep.subr.mxu0 0.0
      %1365 = vmatpush1.msra.mxu0 0.0
      %1366 = vmatprep.subr.mxu0 0.0
      %1367 = vmatpush1.msra.mxu0 0.0
      %1368 = vmatprep.subr.mxu0 0.0
      %1369 = vmatpush1.msra.mxu0 0.0
      %1370 = vmatprep.subr.mxu0 0.0
      %1371 = vmatpush1.msra.mxu0 0.0
      %1372 = vmatprep.subr.mxu0 0.0
      %1373 = vmatpush1.msra.mxu0 0.0
      %1374 = vmatprep.subr.mxu0 0.0
      %1375 = vmatpush1.msra.mxu0 0.0
      %1376 = vmatprep.subr.mxu0 0.0
      %1377 = vmatpush1.msra.mxu0 0.0
      %1378 = vmatprep.subr.mxu0 0.0
      %1379 = vmatpush1.msra.mxu0 0.0
      %1380 = vmatprep.subr.mxu0 0.0
      %1381 = vmatpush1.msra.mxu0 0.0
      %1382 = vmatprep.subr.mxu0 0.0
      %1383 = vmatpush1.msra.mxu0 0.0
      %1384 = vmatprep.subr.mxu0 0.0
      %1385 = vmatpush1.msra.mxu0 0.0
      %1386 = vmatprep.subr.mxu0 0.0
      %1387 = vmatpush1.msra.mxu0 0.0
      %1388 = vmatprep.subr.mxu0 0.0
      %1389 = vmatpush1.msra.mxu0 0.0
      %1390 = vmatprep.subr.mxu0 0.0
      %1391 = vmatpush1.msra.mxu0 0.0
      %1392 = vmatprep.subr.mxu0 0.0
      %1393 = vmatpush1.msra.mxu0 0.0
      %1394 = vmatprep.subr.mxu0 0.0
      %1395 = vmatpush1.msra.mxu0 0.0
      %1396 = vmatprep.subr.mxu0 0.0
      %1397 = vmatpush1.msra.mxu0 0.0
      %1398 = vmatprep.subr.mxu0 0.0
      %1399 = vmatpush1.msra.mxu0 0.0
      %1400 = vmatprep.subr.mxu0 0.0
      %1401 = vmatpush1.msra.mxu0 0.0
      %1402 = vmatprep.subr.mxu0 0.0
      %1403 = vmatpush1.msra.mxu0 0.0
      %1404 = vmatprep.subr.mxu0 0.0
      %1405 = vmatpush1.msra.mxu0 0.0
      %1406 = vmatprep.subr.mxu0 0.0
      %1407 = vmatpush1.msra.mxu0 0.0
      %1408 = vmatprep.subr.mxu0 0.0
      %1409 = vmatpush1.msra.mxu0 0.0
      %1410 = vmatprep.subr.mxu0 0.0
      %1411 = vmatpush1.msra.mxu0 0.0
      %1412 = vmatprep.subr.mxu0 0.0
      %1413 = vmatpush1.msra.mxu0 0.0
      %1414 = vmatprep.subr.mxu0 0.0
      %1415 = vmatpush1.msra.mxu0 0.0
      %1416 = vmatprep.subr.mxu0 0.0
      %1417 = vmatpush1.msra.mxu0 0.0
      %1418 = vmatprep.subr.mxu0 0.0
      %1419 = vmatpush1.msra.mxu0 0.0
      %1420 = vmatprep.mubr.f32.mxu0 0.0
      %1421 = vmatmul.mubr.f32.gmra.mrb[0].mxu0 %v794
      %v1422 = vpop.f32.mrb[0].mxu0
      %v1423 = vadd.f32 0.0, %v1422
      %v1424 = vpop.f32.mrb[0].mxu0
      %1425 = vdwg.mxu0
      %v1426 = vmul.f32 %v933, 2.0
      %v1427 = vmul.f32 %v1003, 2.0
      %v1428 = vmul.f32 %v1073, 2.0
      %v1429 = vmul.f32 %v1143, 2.0
      %v1430 = vmul.f32 %v1213, 2.0
      %v1431 = vmul.f32 %v1283, 2.0
      %v1432 = vmul.f32 %v1353, 2.0
      %v1433 = vmul.f32 %v1423, 2.0
      %v1434 = vsub.f32 %v1426, %v242
      %v1435 = vsub.f32 %v1427, %v243
      %v1436 = vsub.f32 %v1428, %v244
      %v1437 = vsub.f32 %v1429, %v245
      %v1438 = vsub.f32 %v1430, %v246
      %v1439 = vsub.f32 %v1431, %v247
      %v1440 = vsub.f32 %v1432, %v248
      %v1441 = vsub.f32 %v1433, %v249
      %1450 = vrot.lane.b32.xlu0 %v352, 4
      %v1451 = vpop.permute.xlu0 %1450
      %1452 = vrot.lane.b32.xlu0 %v425, 4
      %v1453 = vpop.permute.xlu0 %1452
      %1454 = vrot.lane.b32.xlu0 %v498, 4
      %v1455 = vpop.permute.xlu0 %1454
      %1456 = vrot.lane.b32.xlu0 %v571, 4
      %v1457 = vpop.permute.xlu0 %1456
      %1458 = vrot.lane.b32.xlu0 %v644, 4
      %v1459 = vpop.permute.xlu0 %1458
      %1460 = vrot.lane.b32.xlu0 %v717, 4
      %v1461 = vpop.permute.xlu0 %1460
      %1462 = vrot.lane.b32.xlu0 %v790, 4
      %v1463 = vpop.permute.xlu0 %1462
      %1464 = vrot.lane.b32.xlu0 %v863, 4
      %v1465 = vpop.permute.xlu0 %1464
      %1482 = vrot.lane.b32.xlu0 %v1434, 8
      %v1483 = vpop.permute.xlu0 %1482
      %1484 = vrot.lane.b32.xlu0 %v1435, 8
      %v1485 = vpop.permute.xlu0 %1484
      %1486 = vrot.lane.b32.xlu0 %v1436, 8
      %v1487 = vpop.permute.xlu0 %1486
      %1488 = vrot.lane.b32.xlu0 %v1437, 8
      %v1489 = vpop.permute.xlu0 %1488
      %1490 = vrot.lane.b32.xlu0 %v1438, 8
      %v1491 = vpop.permute.xlu0 %1490
      %1492 = vrot.lane.b32.xlu0 %v1439, 8
      %v1493 = vpop.permute.xlu0 %1492
      %1494 = vrot.lane.b32.xlu0 %v1440, 8
      %v1495 = vpop.permute.xlu0 %1494
      %1496 = vrot.lane.b32.xlu0 %v1441, 8
      %v1497 = vpop.permute.xlu0 %1496
      %vm1506 = vcmask 31744
      %v1507 = vsel %vm1506, %v242, %v1451
      %v1508 = vsel %vm1506, %v243, %v1453
      %v1509 = vsel %vm1506, %v244, %v1455
      %v1510 = vsel %vm1506, %v245, %v1457
      %v1511 = vsel %vm1506, %v246, %v1459
      %v1512 = vsel %vm1506, %v247, %v1461
      %v1513 = vsel %vm1506, %v248, %v1463
      %v1514 = vsel %vm1506, %v249, %v1465
      %v1515 = vsel %vm281, %v1507, %v1483
      %v1516 = vsel %vm281, %v1508, %v1485
      %v1517 = vsel %vm281, %v1509, %v1487
      %v1518 = vsel %vm281, %v1510, %v1489
      %v1519 = vsel %vm281, %v1511, %v1491
      %v1520 = vsel %vm281, %v1512, %v1493
      %v1521 = vsel %vm281, %v1513, %v1495
      %v1522 = vsel %vm281, %v1514, %v1497
      %v1523 = vlaneseq
      %v1524 = vshrl.u32 %v1523, 7
      %v1525 = vsub.s32 0, %v1524
      %v1526 = vrot.slane %v280, %v1525
      %vm1527 = vcmask 97280
      %v1529 = vsel %vm1527, %v1515, 0
      %v1532 = vsel %vm1527, %v1516, 0
      %v1535 = vsel %vm1527, %v1517, 0
      %v1538 = vsel %vm1527, %v1518, 0
      %v1541 = vsel %vm1527, %v1519, 0
      %v1544 = vsel %vm1527, %v1520, 0
      %v1547 = vsel %vm1527, %v1521, 0
      %v1550 = vsel %vm1527, %v1522, 0
      %vm1552 = vcmask 1043456
      %v1554 = vsel %vm1552, %v267, 0
      %1556 = vmatprep.subr.mxu0 0.0
      %1557 = vmatpush1.msra.mxu0 %v266
      %1558 = vmatprep.subr.mxu0 0.0
      %1559 = vmatpush1.msra.mxu0 %v1554
      %1560 = vmatprep.subr.mxu0 0.0
      %1561 = vmatpush1.msra.mxu0 0.0
      %1562 = vmatprep.subr.mxu0 0.0
      %1563 = vmatpush1.msra.mxu0 0.0
      %1564 = vmatprep.subr.mxu0 0.0
      %1565 = vmatpush1.msra.mxu0 0.0
      %1566 = vmatprep.subr.mxu0 0.0
      %1567 = vmatpush1.msra.mxu0 0.0
      %1568 = vmatprep.subr.mxu0 0.0
      %1569 = vmatpush1.msra.mxu0 0.0
      %1570 = vmatprep.subr.mxu0 0.0
      %1571 = vmatpush1.msra.mxu0 0.0
      %1572 = vmatprep.subr.mxu0 0.0
      %1573 = vmatpush1.msra.mxu0 0.0
      %1574 = vmatprep.subr.mxu0 0.0
      %1575 = vmatpush1.msra.mxu0 0.0
      %1576 = vmatprep.subr.mxu0 0.0
      %1577 = vmatpush1.msra.mxu0 0.0
      %1578 = vmatprep.subr.mxu0 0.0
      %1579 = vmatpush1.msra.mxu0 0.0
      %1580 = vmatprep.subr.mxu0 0.0
      %1581 = vmatpush1.msra.mxu0 0.0
      %1582 = vmatprep.subr.mxu0 0.0
      %1583 = vmatpush1.msra.mxu0 0.0
      %1584 = vmatprep.subr.mxu0 0.0
      %1585 = vmatpush1.msra.mxu0 0.0
      %1586 = vmatprep.subr.mxu0 0.0
      %1587 = vmatpush1.msra.mxu0 0.0
      %1588 = vmatprep.subr.mxu0 0.0
      %1589 = vmatpush1.msra.mxu0 0.0
      %1590 = vmatprep.subr.mxu0 0.0
      %1591 = vmatpush1.msra.mxu0 0.0
      %1592 = vmatprep.subr.mxu0 0.0
      %1593 = vmatpush1.msra.mxu0 0.0
      %1594 = vmatprep.subr.mxu0 0.0
      %1595 = vmatpush1.msra.mxu0 0.0
      %1596 = vmatprep.subr.mxu0 0.0
      %1597 = vmatpush1.msra.mxu0 0.0
      %1598 = vmatprep.subr.mxu0 0.0
      %1599 = vmatpush1.msra.mxu0 0.0
      %1600 = vmatprep.subr.mxu0 0.0
      %1601 = vmatpush1.msra.mxu0 0.0
      %1602 = vmatprep.subr.mxu0 0.0
      %1603 = vmatpush1.msra.mxu0 0.0
      %1604 = vmatprep.subr.mxu0 0.0
      %1605 = vmatpush1.msra.mxu0 0.0
      %1606 = vmatprep.subr.mxu0 0.0
      %1607 = vmatpush1.msra.mxu0 0.0
      %1608 = vmatprep.subr.mxu0 0.0
      %1609 = vmatpush1.msra.mxu0 0.0
      %1610 = vmatprep.subr.mxu0 0.0
      %1611 = vmatpush1.msra.mxu0 0.0
      %1612 = vmatprep.subr.mxu0 0.0
      %1613 = vmatpush1.msra.mxu0 0.0
      %1614 = vmatprep.subr.mxu0 0.0
      %1615 = vmatpush1.msra.mxu0 0.0
      %1616 = vmatprep.subr.mxu0 0.0
      %1617 = vmatpush1.msra.mxu0 0.0
      %1618 = vmatprep.subr.mxu0 0.0
      %1619 = vmatpush1.msra.mxu0 0.0
      %1620 = vmatprep.mubr.f32.mxu0 0.0
      %1621 = vmatmul.mubr.f32.gmra.mrb[0].mxu0 %v1529
      %v1622 = vpop.f32.mrb[0].mxu0
      %v1623 = vadd.f32 %v1526, %v1622
      %v1624 = vpop.f32.mrb[0].mxu0
      %1625 = vmatprep.mubr.f32.mxu0 0.0
      %1626 = vmatmul.mubr.f32.gmra.mrb[0].mxu0 %v1532
      %v1627 = vpop.f32.mrb[0].mxu0
      %v1628 = vadd.f32 %v1526, %v1627
      %v1629 = vpop.f32.mrb[0].mxu0
      %1630 = vmatprep.mubr.f32.mxu0 0.0
      %1631 = vmatmul.mubr.f32.gmra.mrb[0].mxu0 %v1535
      %v1632 = vpop.f32.mrb[0].mxu0
      %v1633 = vadd.f32 %v1526, %v1632
      %v1634 = vpop.f32.mrb[0].mxu0
      %1635 = vmatprep.mubr.f32.mxu0 0.0
      %1636 = vmatmul.mubr.f32.gmra.mrb[0].mxu0 %v1538
      %v1637 = vpop.f32.mrb[0].mxu0
      %v1638 = vadd.f32 %v1526, %v1637
      %v1639 = vpop.f32.mrb[0].mxu0
      %1640 = vmatprep.mubr.f32.mxu0 0.0
      %1641 = vmatmul.mubr.f32.gmra.mrb[0].mxu0 %v1541
      %v1642 = vpop.f32.mrb[0].mxu0
      %v1643 = vadd.f32 %v1526, %v1642
      %v1644 = vpop.f32.mrb[0].mxu0
      %1645 = vmatprep.mubr.f32.mxu0 0.0
      %1646 = vmatmul.mubr.f32.gmra.mrb[0].mxu0 %v1544
      %v1647 = vpop.f32.mrb[0].mxu0
      %v1648 = vadd.f32 %v1526, %v1647
      %v1649 = vpop.f32.mrb[0].mxu0
      %1650 = vmatprep.mubr.f32.mxu0 0.0
      %1651 = vmatmul.mubr.f32.gmra.mrb[0].mxu0 %v1547
      %v1652 = vpop.f32.mrb[0].mxu0
      %v1653 = vadd.f32 %v1526, %v1652
      %v1654 = vpop.f32.mrb[0].mxu0
      %1655 = vmatprep.mubr.f32.mxu0 0.0
      %1656 = vmatmul.mubr.f32.gmra.mrb[0].mxu0 %v1550
      %v1657 = vpop.f32.mrb[0].mxu0
      %v1658 = vadd.f32 %v1526, %v1657
      %v1659 = vpop.f32.mrb[0].mxu0
      %1660 = vdwg.mxu0
      %v1661 = vmax.f32 %v1623, 0.0
      %v1662 = vmax.f32 %v1628, 0.0
      %v1663 = vmax.f32 %v1633, 0.0
      %v1664 = vmax.f32 %v1638, 0.0
      %v1665 = vmax.f32 %v1643, 0.0
      %v1666 = vmax.f32 %v1648, 0.0
      %v1667 = vmax.f32 %v1653, 0.0
      %v1668 = vmax.f32 %v1658, 0.0
      %v1669 = vmul.f32 %v1661, %v258
      %v1670 = vmul.f32 %v1662, %v259
      %v1671 = vmul.f32 %v1663, %v260
      %v1672 = vmul.f32 %v1664, %v261
      %v1673 = vmul.f32 %v1665, %v262
      %v1674 = vmul.f32 %v1666, %v263
      %v1675 = vmul.f32 %v1667, %v264
      %v1676 = vmul.f32 %v1668, %v265
      %1677 = vmatprep.subr.mxu0 0.0
      %1678 = vmatpush1.msra.mxu0 %v1669
      %1679 = vmatprep.subr.mxu0 0.0
      %1680 = vmatpush1.msra.mxu0 0.0
      %1681 = vmatprep.subr.mxu0 0.0
      %1682 = vmatpush1.msra.mxu0 0.0
      %1683 = vmatprep.subr.mxu0 0.0
      %1684 = vmatpush1.msra.mxu0 0.0
      %1685 = vmatprep.subr.mxu0 0.0
      %1686 = vmatpush1.msra.mxu0 0.0
      %1687 = vmatprep.subr.mxu0 0.0
      %1688 = vmatpush1.msra.mxu0 0.0
      %1689 = vmatprep.subr.mxu0 0.0
      %1690 = vmatpush1.msra.mxu0 0.0
      %1691 = vmatprep.subr.mxu0 0.0
      %1692 = vmatpush1.msra.mxu0 0.0
      %1693 = vmatprep.subr.mxu0 0.0
      %1694 = vmatpush1.msra.mxu0 0.0
      %1695 = vmatprep.subr.mxu0 0.0
      %1696 = vmatpush1.msra.mxu0 0.0
      %1697 = vmatprep.subr.mxu0 0.0
      %1698 = vmatpush1.msra.mxu0 0.0
      %1699 = vmatprep.subr.mxu0 0.0
      %1700 = vmatpush1.msra.mxu0 0.0
      %1701 = vmatprep.subr.mxu0 0.0
      %1702 = vmatpush1.msra.mxu0 0.0
      %1703 = vmatprep.subr.mxu0 0.0
      %1704 = vmatpush1.msra.mxu0 0.0
      %1705 = vmatprep.subr.mxu0 0.0
      %1706 = vmatpush1.msra.mxu0 0.0
      %1707 = vmatprep.subr.mxu0 0.0
      %1708 = vmatpush1.msra.mxu0 0.0
      %1709 = vmatprep.subr.mxu0 0.0
      %1710 = vmatpush1.msra.mxu0 0.0
      %1711 = vmatprep.subr.mxu0 0.0
      %1712 = vmatpush1.msra.mxu0 0.0
      %1713 = vmatprep.subr.mxu0 0.0
      %1714 = vmatpush1.msra.mxu0 0.0
      %1715 = vmatprep.subr.mxu0 0.0
      %1716 = vmatpush1.msra.mxu0 0.0
      %1717 = vmatprep.subr.mxu0 0.0
      %1718 = vmatpush1.msra.mxu0 0.0
      %1719 = vmatprep.subr.mxu0 0.0
      %1720 = vmatpush1.msra.mxu0 0.0
      %1721 = vmatprep.subr.mxu0 0.0
      %1722 = vmatpush1.msra.mxu0 0.0
      %1723 = vmatprep.subr.mxu0 0.0
      %1724 = vmatpush1.msra.mxu0 0.0
      %1725 = vmatprep.subr.mxu0 0.0
      %1726 = vmatpush1.msra.mxu0 0.0
      %1727 = vmatprep.subr.mxu0 0.0
      %1728 = vmatpush1.msra.mxu0 0.0
      %1729 = vmatprep.subr.mxu0 0.0
      %1730 = vmatpush1.msra.mxu0 0.0
      %1731 = vmatprep.subr.mxu0 0.0
      %1732 = vmatpush1.msra.mxu0 0.0
      %1733 = vmatprep.subr.mxu0 0.0
      %1734 = vmatpush1.msra.mxu0 0.0
      %1735 = vmatprep.subr.mxu0 0.0
      %1736 = vmatpush1.msra.mxu0 0.0
      %1737 = vmatprep.subr.mxu0 0.0
      %1738 = vmatpush1.msra.mxu0 0.0
      %1739 = vmatprep.subr.mxu0 0.0
      %1740 = vmatpush1.msra.mxu0 0.0
      %1741 = vmatprep.mubr.f32.mxu0 0.0
      %1742 = vmatmul.mubr.f32.gmra.mrb[0].mxu0 %v283
      %v1743 = vpop.f32.mrb[0].mxu0
      %v1744 = vadd.f32 0.0, %v1743
      %v1745 = vpop.f32.mrb[0].mxu0
      %1746 = vdwg.mxu0
      %1747 = vmatprep.subr.mxu0 0.0
      %1748 = vmatpush1.msra.mxu0 %v1670
      %1749 = vmatprep.subr.mxu0 0.0
      %1750 = vmatpush1.msra.mxu0 0.0
      %1751 = vmatprep.subr.mxu0 0.0
      %1752 = vmatpush1.msra.mxu0 0.0
      %1753 = vmatprep.subr.mxu0 0.0
      %1754 = vmatpush1.msra.mxu0 0.0
      %1755 = vmatprep.subr.mxu0 0.0
      %1756 = vmatpush1.msra.mxu0 0.0
      %1757 = vmatprep.subr.mxu0 0.0
      %1758 = vmatpush1.msra.mxu0 0.0
      %1759 = vmatprep.subr.mxu0 0.0
      %1760 = vmatpush1.msra.mxu0 0.0
      %1761 = vmatprep.subr.mxu0 0.0
      %1762 = vmatpush1.msra.mxu0 0.0
      %1763 = vmatprep.subr.mxu0 0.0
      %1764 = vmatpush1.msra.mxu0 0.0
      %1765 = vmatprep.subr.mxu0 0.0
      %1766 = vmatpush1.msra.mxu0 0.0
      %1767 = vmatprep.subr.mxu0 0.0
      %1768 = vmatpush1.msra.mxu0 0.0
      %1769 = vmatprep.subr.mxu0 0.0
      %1770 = vmatpush1.msra.mxu0 0.0
      %1771 = vmatprep.subr.mxu0 0.0
      %1772 = vmatpush1.msra.mxu0 0.0
      %1773 = vmatprep.subr.mxu0 0.0
      %1774 = vmatpush1.msra.mxu0 0.0
      %1775 = vmatprep.subr.mxu0 0.0
      %1776 = vmatpush1.msra.mxu0 0.0
      %1777 = vmatprep.subr.mxu0 0.0
      %1778 = vmatpush1.msra.mxu0 0.0
      %1779 = vmatprep.subr.mxu0 0.0
      %1780 = vmatpush1.msra.mxu0 0.0
      %1781 = vmatprep.subr.mxu0 0.0
      %1782 = vmatpush1.msra.mxu0 0.0
      %1783 = vmatprep.subr.mxu0 0.0
      %1784 = vmatpush1.msra.mxu0 0.0
      %1785 = vmatprep.subr.mxu0 0.0
      %1786 = vmatpush1.msra.mxu0 0.0
      %1787 = vmatprep.subr.mxu0 0.0
      %1788 = vmatpush1.msra.mxu0 0.0
      %1789 = vmatprep.subr.mxu0 0.0
      %1790 = vmatpush1.msra.mxu0 0.0
      %1791 = vmatprep.subr.mxu0 0.0
      %1792 = vmatpush1.msra.mxu0 0.0
      %1793 = vmatprep.subr.mxu0 0.0
      %1794 = vmatpush1.msra.mxu0 0.0
      %1795 = vmatprep.subr.mxu0 0.0
      %1796 = vmatpush1.msra.mxu0 0.0
      %1797 = vmatprep.subr.mxu0 0.0
      %1798 = vmatpush1.msra.mxu0 0.0
      %1799 = vmatprep.subr.mxu0 0.0
      %1800 = vmatpush1.msra.mxu0 0.0
      %1801 = vmatprep.subr.mxu0 0.0
      %1802 = vmatpush1.msra.mxu0 0.0
      %1803 = vmatprep.subr.mxu0 0.0
      %1804 = vmatpush1.msra.mxu0 0.0
      %1805 = vmatprep.subr.mxu0 0.0
      %1806 = vmatpush1.msra.mxu0 0.0
      %1807 = vmatprep.subr.mxu0 0.0
      %1808 = vmatpush1.msra.mxu0 0.0
      %1809 = vmatprep.subr.mxu0 0.0
      %1810 = vmatpush1.msra.mxu0 0.0
      %1811 = vmatprep.mubr.f32.mxu0 0.0
      %1812 = vmatmul.mubr.f32.gmra.mrb[0].mxu0 %v356
      %v1813 = vpop.f32.mrb[0].mxu0
      %v1814 = vadd.f32 0.0, %v1813
      %v1815 = vpop.f32.mrb[0].mxu0
      %1816 = vdwg.mxu0
      %1817 = vmatprep.subr.mxu0 0.0
      %1818 = vmatpush1.msra.mxu0 %v1671
      %1819 = vmatprep.subr.mxu0 0.0
      %1820 = vmatpush1.msra.mxu0 0.0
      %1821 = vmatprep.subr.mxu0 0.0
      %1822 = vmatpush1.msra.mxu0 0.0
      %1823 = vmatprep.subr.mxu0 0.0
      %1824 = vmatpush1.msra.mxu0 0.0
      %1825 = vmatprep.subr.mxu0 0.0
      %1826 = vmatpush1.msra.mxu0 0.0
      %1827 = vmatprep.subr.mxu0 0.0
      %1828 = vmatpush1.msra.mxu0 0.0
      %1829 = vmatprep.subr.mxu0 0.0
      %1830 = vmatpush1.msra.mxu0 0.0
      %1831 = vmatprep.subr.mxu0 0.0
      %1832 = vmatpush1.msra.mxu0 0.0
      %1833 = vmatprep.subr.mxu0 0.0
      %1834 = vmatpush1.msra.mxu0 0.0
      %1835 = vmatprep.subr.mxu0 0.0
      %1836 = vmatpush1.msra.mxu0 0.0
      %1837 = vmatprep.subr.mxu0 0.0
      %1838 = vmatpush1.msra.mxu0 0.0
      %1839 = vmatprep.subr.mxu0 0.0
      %1840 = vmatpush1.msra.mxu0 0.0
      %1841 = vmatprep.subr.mxu0 0.0
      %1842 = vmatpush1.msra.mxu0 0.0
      %1843 = vmatprep.subr.mxu0 0.0
      %1844 = vmatpush1.msra.mxu0 0.0
      %1845 = vmatprep.subr.mxu0 0.0
      %1846 = vmatpush1.msra.mxu0 0.0
      %1847 = vmatprep.subr.mxu0 0.0
      %1848 = vmatpush1.msra.mxu0 0.0
      %1849 = vmatprep.subr.mxu0 0.0
      %1850 = vmatpush1.msra.mxu0 0.0
      %1851 = vmatprep.subr.mxu0 0.0
      %1852 = vmatpush1.msra.mxu0 0.0
      %1853 = vmatprep.subr.mxu0 0.0
      %1854 = vmatpush1.msra.mxu0 0.0
      %1855 = vmatprep.subr.mxu0 0.0
      %1856 = vmatpush1.msra.mxu0 0.0
      %1857 = vmatprep.subr.mxu0 0.0
      %1858 = vmatpush1.msra.mxu0 0.0
      %1859 = vmatprep.subr.mxu0 0.0
      %1860 = vmatpush1.msra.mxu0 0.0
      %1861 = vmatprep.subr.mxu0 0.0
      %1862 = vmatpush1.msra.mxu0 0.0
      %1863 = vmatprep.subr.mxu0 0.0
      %1864 = vmatpush1.msra.mxu0 0.0
      %1865 = vmatprep.subr.mxu0 0.0
      %1866 = vmatpush1.msra.mxu0 0.0
      %1867 = vmatprep.subr.mxu0 0.0
      %1868 = vmatpush1.msra.mxu0 0.0
      %1869 = vmatprep.subr.mxu0 0.0
      %1870 = vmatpush1.msra.mxu0 0.0
      %1871 = vmatprep.subr.mxu0 0.0
      %1872 = vmatpush1.msra.mxu0 0.0
      %1873 = vmatprep.subr.mxu0 0.0
      %1874 = vmatpush1.msra.mxu0 0.0
      %1875 = vmatprep.subr.mxu0 0.0
      %1876 = vmatpush1.msra.mxu0 0.0
      %1877 = vmatprep.subr.mxu0 0.0
      %1878 = vmatpush1.msra.mxu0 0.0
      %1879 = vmatprep.subr.mxu0 0.0
      %1880 = vmatpush1.msra.mxu0 0.0
      %1881 = vmatprep.mubr.f32.mxu0 0.0
      %1882 = vmatmul.mubr.f32.gmra.mrb[0].mxu0 %v429
      %v1883 = vpop.f32.mrb[0].mxu0
      %v1884 = vadd.f32 0.0, %v1883
      %v1885 = vpop.f32.mrb[0].mxu0
      %1886 = vdwg.mxu0
      %1887 = vmatprep.subr.mxu0 0.0
      %1888 = vmatpush1.msra.mxu0 %v1672
      %1889 = vmatprep.subr.mxu0 0.0
      %1890 = vmatpush1.msra.mxu0 0.0
      %1891 = vmatprep.subr.mxu0 0.0
      %1892 = vmatpush1.msra.mxu0 0.0
      %1893 = vmatprep.subr.mxu0 0.0
      %1894 = vmatpush1.msra.mxu0 0.0
      %1895 = vmatprep.subr.mxu0 0.0
      %1896 = vmatpush1.msra.mxu0 0.0
      %1897 = vmatprep.subr.mxu0 0.0
      %1898 = vmatpush1.msra.mxu0 0.0
      %1899 = vmatprep.subr.mxu0 0.0
      %1900 = vmatpush1.msra.mxu0 0.0
      %1901 = vmatprep.subr.mxu0 0.0
      %1902 = vmatpush1.msra.mxu0 0.0
      %1903 = vmatprep.subr.mxu0 0.0
      %1904 = vmatpush1.msra.mxu0 0.0
      %1905 = vmatprep.subr.mxu0 0.0
      %1906 = vmatpush1.msra.mxu0 0.0
      %1907 = vmatprep.subr.mxu0 0.0
      %1908 = vmatpush1.msra.mxu0 0.0
      %1909 = vmatprep.subr.mxu0 0.0
      %1910 = vmatpush1.msra.mxu0 0.0
      %1911 = vmatprep.subr.mxu0 0.0
      %1912 = vmatpush1.msra.mxu0 0.0
      %1913 = vmatprep.subr.mxu0 0.0
      %1914 = vmatpush1.msra.mxu0 0.0
      %1915 = vmatprep.subr.mxu0 0.0
      %1916 = vmatpush1.msra.mxu0 0.0
      %1917 = vmatprep.subr.mxu0 0.0
      %1918 = vmatpush1.msra.mxu0 0.0
      %1919 = vmatprep.subr.mxu0 0.0
      %1920 = vmatpush1.msra.mxu0 0.0
      %1921 = vmatprep.subr.mxu0 0.0
      %1922 = vmatpush1.msra.mxu0 0.0
      %1923 = vmatprep.subr.mxu0 0.0
      %1924 = vmatpush1.msra.mxu0 0.0
      %1925 = vmatprep.subr.mxu0 0.0
      %1926 = vmatpush1.msra.mxu0 0.0
      %1927 = vmatprep.subr.mxu0 0.0
      %1928 = vmatpush1.msra.mxu0 0.0
      %1929 = vmatprep.subr.mxu0 0.0
      %1930 = vmatpush1.msra.mxu0 0.0
      %1931 = vmatprep.subr.mxu0 0.0
      %1932 = vmatpush1.msra.mxu0 0.0
      %1933 = vmatprep.subr.mxu0 0.0
      %1934 = vmatpush1.msra.mxu0 0.0
      %1935 = vmatprep.subr.mxu0 0.0
      %1936 = vmatpush1.msra.mxu0 0.0
      %1937 = vmatprep.subr.mxu0 0.0
      %1938 = vmatpush1.msra.mxu0 0.0
      %1939 = vmatprep.subr.mxu0 0.0
      %1940 = vmatpush1.msra.mxu0 0.0
      %1941 = vmatprep.subr.mxu0 0.0
      %1942 = vmatpush1.msra.mxu0 0.0
      %1943 = vmatprep.subr.mxu0 0.0
      %1944 = vmatpush1.msra.mxu0 0.0
      %1945 = vmatprep.subr.mxu0 0.0
      %1946 = vmatpush1.msra.mxu0 0.0
      %1947 = vmatprep.subr.mxu0 0.0
      %1948 = vmatpush1.msra.mxu0 0.0
      %1949 = vmatprep.subr.mxu0 0.0
      %1950 = vmatpush1.msra.mxu0 0.0
      %1951 = vmatprep.mubr.f32.mxu0 0.0
      %1952 = vmatmul.mubr.f32.gmra.mrb[0].mxu0 %v502
      %v1953 = vpop.f32.mrb[0].mxu0
      %v1954 = vadd.f32 0.0, %v1953
      %v1955 = vpop.f32.mrb[0].mxu0
      %1956 = vdwg.mxu0
      %1957 = vmatprep.subr.mxu0 0.0
      %1958 = vmatpush1.msra.mxu0 %v1673
      %1959 = vmatprep.subr.mxu0 0.0
      %1960 = vmatpush1.msra.mxu0 0.0
      %1961 = vmatprep.subr.mxu0 0.0
      %1962 = vmatpush1.msra.mxu0 0.0
      %1963 = vmatprep.subr.mxu0 0.0
      %1964 = vmatpush1.msra.mxu0 0.0
      %1965 = vmatprep.subr.mxu0 0.0
      %1966 = vmatpush1.msra.mxu0 0.0
      %1967 = vmatprep.subr.mxu0 0.0
      %1968 = vmatpush1.msra.mxu0 0.0
      %1969 = vmatprep.subr.mxu0 0.0
      %1970 = vmatpush1.msra.mxu0 0.0
      %1971 = vmatprep.subr.mxu0 0.0
      %1972 = vmatpush1.msra.mxu0 0.0
      %1973 = vmatprep.subr.mxu0 0.0
      %1974 = vmatpush1.msra.mxu0 0.0
      %1975 = vmatprep.subr.mxu0 0.0
      %1976 = vmatpush1.msra.mxu0 0.0
      %1977 = vmatprep.subr.mxu0 0.0
      %1978 = vmatpush1.msra.mxu0 0.0
      %1979 = vmatprep.subr.mxu0 0.0
      %1980 = vmatpush1.msra.mxu0 0.0
      %1981 = vmatprep.subr.mxu0 0.0
      %1982 = vmatpush1.msra.mxu0 0.0
      %1983 = vmatprep.subr.mxu0 0.0
      %1984 = vmatpush1.msra.mxu0 0.0
      %1985 = vmatprep.subr.mxu0 0.0
      %1986 = vmatpush1.msra.mxu0 0.0
      %1987 = vmatprep.subr.mxu0 0.0
      %1988 = vmatpush1.msra.mxu0 0.0
      %1989 = vmatprep.subr.mxu0 0.0
      %1990 = vmatpush1.msra.mxu0 0.0
      %1991 = vmatprep.subr.mxu0 0.0
      %1992 = vmatpush1.msra.mxu0 0.0
      %1993 = vmatprep.subr.mxu0 0.0
      %1994 = vmatpush1.msra.mxu0 0.0
      %1995 = vmatprep.subr.mxu0 0.0
      %1996 = vmatpush1.msra.mxu0 0.0
      %1997 = vmatprep.subr.mxu0 0.0
      %1998 = vmatpush1.msra.mxu0 0.0
      %1999 = vmatprep.subr.mxu0 0.0
      %2000 = vmatpush1.msra.mxu0 0.0
      %2001 = vmatprep.subr.mxu0 0.0
      %2002 = vmatpush1.msra.mxu0 0.0
      %2003 = vmatprep.subr.mxu0 0.0
      %2004 = vmatpush1.msra.mxu0 0.0
      %2005 = vmatprep.subr.mxu0 0.0
      %2006 = vmatpush1.msra.mxu0 0.0
      %2007 = vmatprep.subr.mxu0 0.0
      %2008 = vmatpush1.msra.mxu0 0.0
      %2009 = vmatprep.subr.mxu0 0.0
      %2010 = vmatpush1.msra.mxu0 0.0
      %2011 = vmatprep.subr.mxu0 0.0
      %2012 = vmatpush1.msra.mxu0 0.0
      %2013 = vmatprep.subr.mxu0 0.0
      %2014 = vmatpush1.msra.mxu0 0.0
      %2015 = vmatprep.subr.mxu0 0.0
      %2016 = vmatpush1.msra.mxu0 0.0
      %2017 = vmatprep.subr.mxu0 0.0
      %2018 = vmatpush1.msra.mxu0 0.0
      %2019 = vmatprep.subr.mxu0 0.0
      %2020 = vmatpush1.msra.mxu0 0.0
      %2021 = vmatprep.mubr.f32.mxu0 0.0
      %2022 = vmatmul.mubr.f32.gmra.mrb[0].mxu0 %v575
      %v2023 = vpop.f32.mrb[0].mxu0
      %v2024 = vadd.f32 0.0, %v2023
      %v2025 = vpop.f32.mrb[0].mxu0
      %2026 = vdwg.mxu0
      %2027 = vmatprep.subr.mxu0 0.0
      %2028 = vmatpush1.msra.mxu0 %v1674
      %2029 = vmatprep.subr.mxu0 0.0
      %2030 = vmatpush1.msra.mxu0 0.0
      %2031 = vmatprep.subr.mxu0 0.0
      %2032 = vmatpush1.msra.mxu0 0.0
      %2033 = vmatprep.subr.mxu0 0.0
      %2034 = vmatpush1.msra.mxu0 0.0
      %2035 = vmatprep.subr.mxu0 0.0
      %2036 = vmatpush1.msra.mxu0 0.0
      %2037 = vmatprep.subr.mxu0 0.0
      %2038 = vmatpush1.msra.mxu0 0.0
      %2039 = vmatprep.subr.mxu0 0.0
      %2040 = vmatpush1.msra.mxu0 0.0
      %2041 = vmatprep.subr.mxu0 0.0
      %2042 = vmatpush1.msra.mxu0 0.0
      %2043 = vmatprep.subr.mxu0 0.0
      %2044 = vmatpush1.msra.mxu0 0.0
      %2045 = vmatprep.subr.mxu0 0.0
      %2046 = vmatpush1.msra.mxu0 0.0
      %2047 = vmatprep.subr.mxu0 0.0
      %2048 = vmatpush1.msra.mxu0 0.0
      %2049 = vmatprep.subr.mxu0 0.0
      %2050 = vmatpush1.msra.mxu0 0.0
      %2051 = vmatprep.subr.mxu0 0.0
      %2052 = vmatpush1.msra.mxu0 0.0
      %2053 = vmatprep.subr.mxu0 0.0
      %2054 = vmatpush1.msra.mxu0 0.0
      %2055 = vmatprep.subr.mxu0 0.0
      %2056 = vmatpush1.msra.mxu0 0.0
      %2057 = vmatprep.subr.mxu0 0.0
      %2058 = vmatpush1.msra.mxu0 0.0
      %2059 = vmatprep.subr.mxu0 0.0
      %2060 = vmatpush1.msra.mxu0 0.0
      %2061 = vmatprep.subr.mxu0 0.0
      %2062 = vmatpush1.msra.mxu0 0.0
      %2063 = vmatprep.subr.mxu0 0.0
      %2064 = vmatpush1.msra.mxu0 0.0
      %2065 = vmatprep.subr.mxu0 0.0
      %2066 = vmatpush1.msra.mxu0 0.0
      %2067 = vmatprep.subr.mxu0 0.0
      %2068 = vmatpush1.msra.mxu0 0.0
      %2069 = vmatprep.subr.mxu0 0.0
      %2070 = vmatpush1.msra.mxu0 0.0
      %2071 = vmatprep.subr.mxu0 0.0
      %2072 = vmatpush1.msra.mxu0 0.0
      %2073 = vmatprep.subr.mxu0 0.0
      %2074 = vmatpush1.msra.mxu0 0.0
      %2075 = vmatprep.subr.mxu0 0.0
      %2076 = vmatpush1.msra.mxu0 0.0
      %2077 = vmatprep.subr.mxu0 0.0
      %2078 = vmatpush1.msra.mxu0 0.0
      %2079 = vmatprep.subr.mxu0 0.0
      %2080 = vmatpush1.msra.mxu0 0.0
      %2081 = vmatprep.subr.mxu0 0.0
      %2082 = vmatpush1.msra.mxu0 0.0
      %2083 = vmatprep.subr.mxu0 0.0
      %2084 = vmatpush1.msra.mxu0 0.0
      %2085 = vmatprep.subr.mxu0 0.0
      %2086 = vmatpush1.msra.mxu0 0.0
      %2087 = vmatprep.subr.mxu0 0.0
      %2088 = vmatpush1.msra.mxu0 0.0
      %2089 = vmatprep.subr.mxu0 0.0
      %2090 = vmatpush1.msra.mxu0 0.0
      %2091 = vmatprep.mubr.f32.mxu0 0.0
      %2092 = vmatmul.mubr.f32.gmra.mrb[0].mxu0 %v648
      %v2093 = vpop.f32.mrb[0].mxu0
      %v2094 = vadd.f32 0.0, %v2093
      %v2095 = vpop.f32.mrb[0].mxu0
      %2096 = vdwg.mxu0
      %2097 = vmatprep.subr.mxu0 0.0
      %2098 = vmatpush1.msra.mxu0 %v1675
      %2099 = vmatprep.subr.mxu0 0.0
      %2100 = vmatpush1.msra.mxu0 0.0
      %2101 = vmatprep.subr.mxu0 0.0
      %2102 = vmatpush1.msra.mxu0 0.0
      %2103 = vmatprep.subr.mxu0 0.0
      %2104 = vmatpush1.msra.mxu0 0.0
      %2105 = vmatprep.subr.mxu0 0.0
      %2106 = vmatpush1.msra.mxu0 0.0
      %2107 = vmatprep.subr.mxu0 0.0
      %2108 = vmatpush1.msra.mxu0 0.0
      %2109 = vmatprep.subr.mxu0 0.0
      %2110 = vmatpush1.msra.mxu0 0.0
      %2111 = vmatprep.subr.mxu0 0.0
      %2112 = vmatpush1.msra.mxu0 0.0
      %2113 = vmatprep.subr.mxu0 0.0
      %2114 = vmatpush1.msra.mxu0 0.0
      %2115 = vmatprep.subr.mxu0 0.0
      %2116 = vmatpush1.msra.mxu0 0.0
      %2117 = vmatprep.subr.mxu0 0.0
      %2118 = vmatpush1.msra.mxu0 0.0
      %2119 = vmatprep.subr.mxu0 0.0
      %2120 = vmatpush1.msra.mxu0 0.0
      %2121 = vmatprep.subr.mxu0 0.0
      %2122 = vmatpush1.msra.mxu0 0.0
      %2123 = vmatprep.subr.mxu0 0.0
      %2124 = vmatpush1.msra.mxu0 0.0
      %2125 = vmatprep.subr.mxu0 0.0
      %2126 = vmatpush1.msra.mxu0 0.0
      %2127 = vmatprep.subr.mxu0 0.0
      %2128 = vmatpush1.msra.mxu0 0.0
      %2129 = vmatprep.subr.mxu0 0.0
      %2130 = vmatpush1.msra.mxu0 0.0
      %2131 = vmatprep.subr.mxu0 0.0
      %2132 = vmatpush1.msra.mxu0 0.0
      %2133 = vmatprep.subr.mxu0 0.0
      %2134 = vmatpush1.msra.mxu0 0.0
      %2135 = vmatprep.subr.mxu0 0.0
      %2136 = vmatpush1.msra.mxu0 0.0
      %2137 = vmatprep.subr.mxu0 0.0
      %2138 = vmatpush1.msra.mxu0 0.0
      %2139 = vmatprep.subr.mxu0 0.0
      %2140 = vmatpush1.msra.mxu0 0.0
      %2141 = vmatprep.subr.mxu0 0.0
      %2142 = vmatpush1.msra.mxu0 0.0
      %2143 = vmatprep.subr.mxu0 0.0
      %2144 = vmatpush1.msra.mxu0 0.0
      %2145 = vmatprep.subr.mxu0 0.0
      %2146 = vmatpush1.msra.mxu0 0.0
      %2147 = vmatprep.subr.mxu0 0.0
      %2148 = vmatpush1.msra.mxu0 0.0
      %2149 = vmatprep.subr.mxu0 0.0
      %2150 = vmatpush1.msra.mxu0 0.0
      %2151 = vmatprep.subr.mxu0 0.0
      %2152 = vmatpush1.msra.mxu0 0.0
      %2153 = vmatprep.subr.mxu0 0.0
      %2154 = vmatpush1.msra.mxu0 0.0
      %2155 = vmatprep.subr.mxu0 0.0
      %2156 = vmatpush1.msra.mxu0 0.0
      %2157 = vmatprep.subr.mxu0 0.0
      %2158 = vmatpush1.msra.mxu0 0.0
      %2159 = vmatprep.subr.mxu0 0.0
      %2160 = vmatpush1.msra.mxu0 0.0
      %2161 = vmatprep.mubr.f32.mxu0 0.0
      %2162 = vmatmul.mubr.f32.gmra.mrb[0].mxu0 %v721
      %v2163 = vpop.f32.mrb[0].mxu0
      %v2164 = vadd.f32 0.0, %v2163
      %v2165 = vpop.f32.mrb[0].mxu0
      %2166 = vdwg.mxu0
      %2167 = vmatprep.subr.mxu0 0.0
      %2168 = vmatpush1.msra.mxu0 %v1676
      %2169 = vmatprep.subr.mxu0 0.0
      %2170 = vmatpush1.msra.mxu0 0.0
      %2171 = vmatprep.subr.mxu0 0.0
      %2172 = vmatpush1.msra.mxu0 0.0
      %2173 = vmatprep.subr.mxu0 0.0
      %2174 = vmatpush1.msra.mxu0 0.0
      %2175 = vmatprep.subr.mxu0 0.0
      %2176 = vmatpush1.msra.mxu0 0.0
      %2177 = vmatprep.subr.mxu0 0.0
      %2178 = vmatpush1.msra.mxu0 0.0
      %2179 = vmatprep.subr.mxu0 0.0
      %2180 = vmatpush1.msra.mxu0 0.0
      %2181 = vmatprep.subr.mxu0 0.0
      %2182 = vmatpush1.msra.mxu0 0.0
      %2183 = vmatprep.subr.mxu0 0.0
      %2184 = vmatpush1.msra.mxu0 0.0
      %2185 = vmatprep.subr.mxu0 0.0
      %2186 = vmatpush1.msra.mxu0 0.0
      %2187 = vmatprep.subr.mxu0 0.0
      %2188 = vmatpush1.msra.mxu0 0.0
      %2189 = vmatprep.subr.mxu0 0.0
      %2190 = vmatpush1.msra.mxu0 0.0
      %2191 = vmatprep.subr.mxu0 0.0
      %2192 = vmatpush1.msra.mxu0 0.0
      %2193 = vmatprep.subr.mxu0 0.0
      %2194 = vmatpush1.msra.mxu0 0.0
      %2195 = vmatprep.subr.mxu0 0.0
      %2196 = vmatpush1.msra.mxu0 0.0
      %2197 = vmatprep.subr.mxu0 0.0
      %2198 = vmatpush1.msra.mxu0 0.0
      %2199 = vmatprep.subr.mxu0 0.0
      %2200 = vmatpush1.msra.mxu0 0.0
      %2201 = vmatprep.subr.mxu0 0.0
      %2202 = vmatpush1.msra.mxu0 0.0
      %2203 = vmatprep.subr.mxu0 0.0
      %2204 = vmatpush1.msra.mxu0 0.0
      %2205 = vmatprep.subr.mxu0 0.0
      %2206 = vmatpush1.msra.mxu0 0.0
      %2207 = vmatprep.subr.mxu0 0.0
      %2208 = vmatpush1.msra.mxu0 0.0
      %2209 = vmatprep.subr.mxu0 0.0
      %2210 = vmatpush1.msra.mxu0 0.0
      %2211 = vmatprep.subr.mxu0 0.0
      %2212 = vmatpush1.msra.mxu0 0.0
      %2213 = vmatprep.subr.mxu0 0.0
      %2214 = vmatpush1.msra.mxu0 0.0
      %2215 = vmatprep.subr.mxu0 0.0
      %2216 = vmatpush1.msra.mxu0 0.0
      %2217 = vmatprep.subr.mxu0 0.0
      %2218 = vmatpush1.msra.mxu0 0.0
      %2219 = vmatprep.subr.mxu0 0.0
      %2220 = vmatpush1.msra.mxu0 0.0
      %2221 = vmatprep.subr.mxu0 0.0
      %2222 = vmatpush1.msra.mxu0 0.0
      %2223 = vmatprep.subr.mxu0 0.0
      %2224 = vmatpush1.msra.mxu0 0.0
      %2225 = vmatprep.subr.mxu0 0.0
      %2226 = vmatpush1.msra.mxu0 0.0
      %2227 = vmatprep.subr.mxu0 0.0
      %2228 = vmatpush1.msra.mxu0 0.0
      %2229 = vmatprep.subr.mxu0 0.0
      %2230 = vmatpush1.msra.mxu0 0.0
      %2231 = vmatprep.mubr.f32.mxu0 0.0
      %2232 = vmatmul.mubr.f32.gmra.mrb[0].mxu0 %v794
      %v2233 = vpop.f32.mrb[0].mxu0
      %v2234 = vadd.f32 0.0, %v2233
      %v2235 = vpop.f32.mrb[0].mxu0
      %2236 = vdwg.mxu0
      %2237 = vmatprep.subr.mxu0 0.0
      %2238 = vmatpush1.msra.mxu0 %v1744
      %2239 = vmatprep.subr.mxu0 0.0
      %2240 = vmatpush1.msra.mxu0 0.0
      %2241 = vmatprep.subr.mxu0 0.0
      %2242 = vmatpush1.msra.mxu0 0.0
      %2243 = vmatprep.subr.mxu0 0.0
      %2244 = vmatpush1.msra.mxu0 0.0
      %2245 = vmatprep.subr.mxu0 0.0
      %2246 = vmatpush1.msra.mxu0 0.0
      %2247 = vmatprep.subr.mxu0 0.0
      %2248 = vmatpush1.msra.mxu0 0.0
      %2249 = vmatprep.subr.mxu0 0.0
      %2250 = vmatpush1.msra.mxu0 0.0
      %2251 = vmatprep.subr.mxu0 0.0
      %2252 = vmatpush1.msra.mxu0 0.0
      %2253 = vmatprep.subr.mxu0 0.0
      %2254 = vmatpush1.msra.mxu0 0.0
      %2255 = vmatprep.subr.mxu0 0.0
      %2256 = vmatpush1.msra.mxu0 0.0
      %2257 = vmatprep.subr.mxu0 0.0
      %2258 = vmatpush1.msra.mxu0 0.0
      %2259 = vmatprep.subr.mxu0 0.0
      %2260 = vmatpush1.msra.mxu0 0.0
      %2261 = vmatprep.subr.mxu0 0.0
      %2262 = vmatpush1.msra.mxu0 0.0
      %2263 = vmatprep.subr.mxu0 0.0
      %2264 = vmatpush1.msra.mxu0 0.0
      %2265 = vmatprep.subr.mxu0 0.0
      %2266 = vmatpush1.msra.mxu0 0.0
      %2267 = vmatprep.subr.mxu0 0.0
      %2268 = vmatpush1.msra.mxu0 0.0
      %2269 = vmatprep.subr.mxu0 0.0
      %2270 = vmatpush1.msra.mxu0 0.0
      %2271 = vmatprep.subr.mxu0 0.0
      %2272 = vmatpush1.msra.mxu0 0.0
      %2273 = vmatprep.subr.mxu0 0.0
      %2274 = vmatpush1.msra.mxu0 0.0
      %2275 = vmatprep.subr.mxu0 0.0
      %2276 = vmatpush1.msra.mxu0 0.0
      %2277 = vmatprep.subr.mxu0 0.0
      %2278 = vmatpush1.msra.mxu0 0.0
      %2279 = vmatprep.subr.mxu0 0.0
      %2280 = vmatpush1.msra.mxu0 0.0
      %2281 = vmatprep.subr.mxu0 0.0
      %2282 = vmatpush1.msra.mxu0 0.0
      %2283 = vmatprep.subr.mxu0 0.0
      %2284 = vmatpush1.msra.mxu0 0.0
      %2285 = vmatprep.subr.mxu0 0.0
      %2286 = vmatpush1.msra.mxu0 0.0
      %2287 = vmatprep.subr.mxu0 0.0
      %2288 = vmatpush1.msra.mxu0 0.0
      %2289 = vmatprep.subr.mxu0 0.0
      %2290 = vmatpush1.msra.mxu0 0.0
      %2291 = vmatprep.subr.mxu0 0.0
      %2292 = vmatpush1.msra.mxu0 0.0
      %2293 = vmatprep.subr.mxu0 0.0
      %2294 = vmatpush1.msra.mxu0 0.0
      %2295 = vmatprep.subr.mxu0 0.0
      %2296 = vmatpush1.msra.mxu0 0.0
      %2297 = vmatprep.subr.mxu0 0.0
      %2298 = vmatpush1.msra.mxu0 0.0
      %2299 = vmatprep.subr.mxu0 0.0
      %2300 = vmatpush1.msra.mxu0 0.0
      %2301 = vmatprep.mubr.f32.mxu0 0.0
      %2302 = vmatmul.mubr.f32.gmra.mrb[0].mxu0 %v283
      %v2303 = vpop.f32.mrb[0].mxu0
      %v2304 = vadd.f32 0.0, %v2303
      %v2305 = vpop.f32.mrb[0].mxu0
      %2306 = vdwg.mxu0
      %2307 = vmatprep.subr.mxu0 0.0
      %2308 = vmatpush1.msra.mxu0 %v1814
      %2309 = vmatprep.subr.mxu0 0.0
      %2310 = vmatpush1.msra.mxu0 0.0
      %2311 = vmatprep.subr.mxu0 0.0
      %2312 = vmatpush1.msra.mxu0 0.0
      %2313 = vmatprep.subr.mxu0 0.0
      %2314 = vmatpush1.msra.mxu0 0.0
      %2315 = vmatprep.subr.mxu0 0.0
      %2316 = vmatpush1.msra.mxu0 0.0
      %2317 = vmatprep.subr.mxu0 0.0
      %2318 = vmatpush1.msra.mxu0 0.0
      %2319 = vmatprep.subr.mxu0 0.0
      %2320 = vmatpush1.msra.mxu0 0.0
      %2321 = vmatprep.subr.mxu0 0.0
      %2322 = vmatpush1.msra.mxu0 0.0
      %2323 = vmatprep.subr.mxu0 0.0
      %2324 = vmatpush1.msra.mxu0 0.0
      %2325 = vmatprep.subr.mxu0 0.0
      %2326 = vmatpush1.msra.mxu0 0.0
      %2327 = vmatprep.subr.mxu0 0.0
      %2328 = vmatpush1.msra.mxu0 0.0
      %2329 = vmatprep.subr.mxu0 0.0
      %2330 = vmatpush1.msra.mxu0 0.0
      %2331 = vmatprep.subr.mxu0 0.0
      %2332 = vmatpush1.msra.mxu0 0.0
      %2333 = vmatprep.subr.mxu0 0.0
      %2334 = vmatpush1.msra.mxu0 0.0
      %2335 = vmatprep.subr.mxu0 0.0
      %2336 = vmatpush1.msra.mxu0 0.0
      %2337 = vmatprep.subr.mxu0 0.0
      %2338 = vmatpush1.msra.mxu0 0.0
      %2339 = vmatprep.subr.mxu0 0.0
      %2340 = vmatpush1.msra.mxu0 0.0
      %2341 = vmatprep.subr.mxu0 0.0
      %2342 = vmatpush1.msra.mxu0 0.0
      %2343 = vmatprep.subr.mxu0 0.0
      %2344 = vmatpush1.msra.mxu0 0.0
      %2345 = vmatprep.subr.mxu0 0.0
      %2346 = vmatpush1.msra.mxu0 0.0
      %2347 = vmatprep.subr.mxu0 0.0
      %2348 = vmatpush1.msra.mxu0 0.0
      %2349 = vmatprep.subr.mxu0 0.0
      %2350 = vmatpush1.msra.mxu0 0.0
      %2351 = vmatprep.subr.mxu0 0.0
      %2352 = vmatpush1.msra.mxu0 0.0
      %2353 = vmatprep.subr.mxu0 0.0
      %2354 = vmatpush1.msra.mxu0 0.0
      %2355 = vmatprep.subr.mxu0 0.0
      %2356 = vmatpush1.msra.mxu0 0.0
      %2357 = vmatprep.subr.mxu0 0.0
      %2358 = vmatpush1.msra.mxu0 0.0
      %2359 = vmatprep.subr.mxu0 0.0
      %2360 = vmatpush1.msra.mxu0 0.0
      %2361 = vmatprep.subr.mxu0 0.0
      %2362 = vmatpush1.msra.mxu0 0.0
      %2363 = vmatprep.subr.mxu0 0.0
      %2364 = vmatpush1.msra.mxu0 0.0
      %2365 = vmatprep.subr.mxu0 0.0
      %2366 = vmatpush1.msra.mxu0 0.0
      %2367 = vmatprep.subr.mxu0 0.0
      %2368 = vmatpush1.msra.mxu0 0.0
      %2369 = vmatprep.subr.mxu0 0.0
      %2370 = vmatpush1.msra.mxu0 0.0
      %2371 = vmatprep.mubr.f32.mxu0 0.0
      %2372 = vmatmul.mubr.f32.gmra.mrb[0].mxu0 %v356
      %v2373 = vpop.f32.mrb[0].mxu0
      %v2374 = vadd.f32 0.0, %v2373
      %v2375 = vpop.f32.mrb[0].mxu0
      %2376 = vdwg.mxu0
      %2377 = vmatprep.subr.mxu0 0.0
      %2378 = vmatpush1.msra.mxu0 %v1884
      %2379 = vmatprep.subr.mxu0 0.0
      %2380 = vmatpush1.msra.mxu0 0.0
      %2381 = vmatprep.subr.mxu0 0.0
      %2382 = vmatpush1.msra.mxu0 0.0
      %2383 = vmatprep.subr.mxu0 0.0
      %2384 = vmatpush1.msra.mxu0 0.0
      %2385 = vmatprep.subr.mxu0 0.0
      %2386 = vmatpush1.msra.mxu0 0.0
      %2387 = vmatprep.subr.mxu0 0.0
      %2388 = vmatpush1.msra.mxu0 0.0
      %2389 = vmatprep.subr.mxu0 0.0
      %2390 = vmatpush1.msra.mxu0 0.0
      %2391 = vmatprep.subr.mxu0 0.0
      %2392 = vmatpush1.msra.mxu0 0.0
      %2393 = vmatprep.subr.mxu0 0.0
      %2394 = vmatpush1.msra.mxu0 0.0
      %2395 = vmatprep.subr.mxu0 0.0
      %2396 = vmatpush1.msra.mxu0 0.0
      %2397 = vmatprep.subr.mxu0 0.0
      %2398 = vmatpush1.msra.mxu0 0.0
      %2399 = vmatprep.subr.mxu0 0.0
      %2400 = vmatpush1.msra.mxu0 0.0
      %2401 = vmatprep.subr.mxu0 0.0
      %2402 = vmatpush1.msra.mxu0 0.0
      %2403 = vmatprep.subr.mxu0 0.0
      %2404 = vmatpush1.msra.mxu0 0.0
      %2405 = vmatprep.subr.mxu0 0.0
      %2406 = vmatpush1.msra.mxu0 0.0
      %2407 = vmatprep.subr.mxu0 0.0
      %2408 = vmatpush1.msra.mxu0 0.0
      %2409 = vmatprep.subr.mxu0 0.0
      %2410 = vmatpush1.msra.mxu0 0.0
      %2411 = vmatprep.subr.mxu0 0.0
      %2412 = vmatpush1.msra.mxu0 0.0
      %2413 = vmatprep.subr.mxu0 0.0
      %2414 = vmatpush1.msra.mxu0 0.0
      %2415 = vmatprep.subr.mxu0 0.0
      %2416 = vmatpush1.msra.mxu0 0.0
      %2417 = vmatprep.subr.mxu0 0.0
      %2418 = vmatpush1.msra.mxu0 0.0
      %2419 = vmatprep.subr.mxu0 0.0
      %2420 = vmatpush1.msra.mxu0 0.0
      %2421 = vmatprep.subr.mxu0 0.0
      %2422 = vmatpush1.msra.mxu0 0.0
      %2423 = vmatprep.subr.mxu0 0.0
      %2424 = vmatpush1.msra.mxu0 0.0
      %2425 = vmatprep.subr.mxu0 0.0
      %2426 = vmatpush1.msra.mxu0 0.0
      %2427 = vmatprep.subr.mxu0 0.0
      %2428 = vmatpush1.msra.mxu0 0.0
      %2429 = vmatprep.subr.mxu0 0.0
      %2430 = vmatpush1.msra.mxu0 0.0
      %2431 = vmatprep.subr.mxu0 0.0
      %2432 = vmatpush1.msra.mxu0 0.0
      %2433 = vmatprep.subr.mxu0 0.0
      %2434 = vmatpush1.msra.mxu0 0.0
      %2435 = vmatprep.subr.mxu0 0.0
      %2436 = vmatpush1.msra.mxu0 0.0
      %2437 = vmatprep.subr.mxu0 0.0
      %2438 = vmatpush1.msra.mxu0 0.0
      %2439 = vmatprep.subr.mxu0 0.0
      %2440 = vmatpush1.msra.mxu0 0.0
      %2441 = vmatprep.mubr.f32.mxu0 0.0
      %2442 = vmatmul.mubr.f32.gmra.mrb[0].mxu0 %v429
      %v2443 = vpop.f32.mrb[0].mxu0
      %v2444 = vadd.f32 0.0, %v2443
      %v2445 = vpop.f32.mrb[0].mxu0
      %2446 = vdwg.mxu0
      %2447 = vmatprep.subr.mxu0 0.0
      %2448 = vmatpush1.msra.mxu0 %v1954
      %2449 = vmatprep.subr.mxu0 0.0
      %2450 = vmatpush1.msra.mxu0 0.0
      %2451 = vmatprep.subr.mxu0 0.0
      %2452 = vmatpush1.msra.mxu0 0.0
      %2453 = vmatprep.subr.mxu0 0.0
      %2454 = vmatpush1.msra.mxu0 0.0
      %2455 = vmatprep.subr.mxu0 0.0
      %2456 = vmatpush1.msra.mxu0 0.0
      %2457 = vmatprep.subr.mxu0 0.0
      %2458 = vmatpush1.msra.mxu0 0.0
      %2459 = vmatprep.subr.mxu0 0.0
      %2460 = vmatpush1.msra.mxu0 0.0
      %2461 = vmatprep.subr.mxu0 0.0
      %2462 = vmatpush1.msra.mxu0 0.0
      %2463 = vmatprep.subr.mxu0 0.0
      %2464 = vmatpush1.msra.mxu0 0.0
      %2465 = vmatprep.subr.mxu0 0.0
      %2466 = vmatpush1.msra.mxu0 0.0
      %2467 = vmatprep.subr.mxu0 0.0
      %2468 = vmatpush1.msra.mxu0 0.0
      %2469 = vmatprep.subr.mxu0 0.0
      %2470 = vmatpush1.msra.mxu0 0.0
      %2471 = vmatprep.subr.mxu0 0.0
      %2472 = vmatpush1.msra.mxu0 0.0
      %2473 = vmatprep.subr.mxu0 0.0
      %2474 = vmatpush1.msra.mxu0 0.0
      %2475 = vmatprep.subr.mxu0 0.0
      %2476 = vmatpush1.msra.mxu0 0.0
      %2477 = vmatprep.subr.mxu0 0.0
      %2478 = vmatpush1.msra.mxu0 0.0
      %2479 = vmatprep.subr.mxu0 0.0
      %2480 = vmatpush1.msra.mxu0 0.0
      %2481 = vmatprep.subr.mxu0 0.0
      %2482 = vmatpush1.msra.mxu0 0.0
      %2483 = vmatprep.subr.mxu0 0.0
      %2484 = vmatpush1.msra.mxu0 0.0
      %2485 = vmatprep.subr.mxu0 0.0
      %2486 = vmatpush1.msra.mxu0 0.0
      %2487 = vmatprep.subr.mxu0 0.0
      %2488 = vmatpush1.msra.mxu0 0.0
      %2489 = vmatprep.subr.mxu0 0.0
      %2490 = vmatpush1.msra.mxu0 0.0
      %2491 = vmatprep.subr.mxu0 0.0
      %2492 = vmatpush1.msra.mxu0 0.0
      %2493 = vmatprep.subr.mxu0 0.0
      %2494 = vmatpush1.msra.mxu0 0.0
      %2495 = vmatprep.subr.mxu0 0.0
      %2496 = vmatpush1.msra.mxu0 0.0
      %2497 = vmatprep.subr.mxu0 0.0
      %2498 = vmatpush1.msra.mxu0 0.0
      %2499 = vmatprep.subr.mxu0 0.0
      %2500 = vmatpush1.msra.mxu0 0.0
      %2501 = vmatprep.subr.mxu0 0.0
      %2502 = vmatpush1.msra.mxu0 0.0
      %2503 = vmatprep.subr.mxu0 0.0
      %2504 = vmatpush1.msra.mxu0 0.0
      %2505 = vmatprep.subr.mxu0 0.0
      %2506 = vmatpush1.msra.mxu0 0.0
      %2507 = vmatprep.subr.mxu0 0.0
      %2508 = vmatpush1.msra.mxu0 0.0
      %2509 = vmatprep.subr.mxu0 0.0
      %2510 = vmatpush1.msra.mxu0 0.0
      %2511 = vmatprep.mubr.f32.mxu0 0.0
      %2512 = vmatmul.mubr.f32.gmra.mrb[0].mxu0 %v502
      %v2513 = vpop.f32.mrb[0].mxu0
      %v2514 = vadd.f32 0.0, %v2513
      %v2515 = vpop.f32.mrb[0].mxu0
      %2516 = vdwg.mxu0
      %2517 = vmatprep.subr.mxu0 0.0
      %2518 = vmatpush1.msra.mxu0 %v2024
      %2519 = vmatprep.subr.mxu0 0.0
      %2520 = vmatpush1.msra.mxu0 0.0
      %2521 = vmatprep.subr.mxu0 0.0
      %2522 = vmatpush1.msra.mxu0 0.0
      %2523 = vmatprep.subr.mxu0 0.0
      %2524 = vmatpush1.msra.mxu0 0.0
      %2525 = vmatprep.subr.mxu0 0.0
      %2526 = vmatpush1.msra.mxu0 0.0
      %2527 = vmatprep.subr.mxu0 0.0
      %2528 = vmatpush1.msra.mxu0 0.0
      %2529 = vmatprep.subr.mxu0 0.0
      %2530 = vmatpush1.msra.mxu0 0.0
      %2531 = vmatprep.subr.mxu0 0.0
      %2532 = vmatpush1.msra.mxu0 0.0
      %2533 = vmatprep.subr.mxu0 0.0
      %2534 = vmatpush1.msra.mxu0 0.0
      %2535 = vmatprep.subr.mxu0 0.0
      %2536 = vmatpush1.msra.mxu0 0.0
      %2537 = vmatprep.subr.mxu0 0.0
      %2538 = vmatpush1.msra.mxu0 0.0
      %2539 = vmatprep.subr.mxu0 0.0
      %2540 = vmatpush1.msra.mxu0 0.0
      %2541 = vmatprep.subr.mxu0 0.0
      %2542 = vmatpush1.msra.mxu0 0.0
      %2543 = vmatprep.subr.mxu0 0.0
      %2544 = vmatpush1.msra.mxu0 0.0
      %2545 = vmatprep.subr.mxu0 0.0
      %2546 = vmatpush1.msra.mxu0 0.0
      %2547 = vmatprep.subr.mxu0 0.0
      %2548 = vmatpush1.msra.mxu0 0.0
      %2549 = vmatprep.subr.mxu0 0.0
      %2550 = vmatpush1.msra.mxu0 0.0
      %2551 = vmatprep.subr.mxu0 0.0
      %2552 = vmatpush1.msra.mxu0 0.0
      %2553 = vmatprep.subr.mxu0 0.0
      %2554 = vmatpush1.msra.mxu0 0.0
      %2555 = vmatprep.subr.mxu0 0.0
      %2556 = vmatpush1.msra.mxu0 0.0
      %2557 = vmatprep.subr.mxu0 0.0
      %2558 = vmatpush1.msra.mxu0 0.0
      %2559 = vmatprep.subr.mxu0 0.0
      %2560 = vmatpush1.msra.mxu0 0.0
      %2561 = vmatprep.subr.mxu0 0.0
      %2562 = vmatpush1.msra.mxu0 0.0
      %2563 = vmatprep.subr.mxu0 0.0
      %2564 = vmatpush1.msra.mxu0 0.0
      %2565 = vmatprep.subr.mxu0 0.0
      %2566 = vmatpush1.msra.mxu0 0.0
      %2567 = vmatprep.subr.mxu0 0.0
      %2568 = vmatpush1.msra.mxu0 0.0
      %2569 = vmatprep.subr.mxu0 0.0
      %2570 = vmatpush1.msra.mxu0 0.0
      %2571 = vmatprep.subr.mxu0 0.0
      %2572 = vmatpush1.msra.mxu0 0.0
      %2573 = vmatprep.subr.mxu0 0.0
      %2574 = vmatpush1.msra.mxu0 0.0
      %2575 = vmatprep.subr.mxu0 0.0
      %2576 = vmatpush1.msra.mxu0 0.0
      %2577 = vmatprep.subr.mxu0 0.0
      %2578 = vmatpush1.msra.mxu0 0.0
      %2579 = vmatprep.subr.mxu0 0.0
      %2580 = vmatpush1.msra.mxu0 0.0
      %2581 = vmatprep.mubr.f32.mxu0 0.0
      %2582 = vmatmul.mubr.f32.gmra.mrb[0].mxu0 %v575
      %v2583 = vpop.f32.mrb[0].mxu0
      %v2584 = vadd.f32 0.0, %v2583
      %v2585 = vpop.f32.mrb[0].mxu0
      %2586 = vdwg.mxu0
      %2587 = vmatprep.subr.mxu0 0.0
      %2588 = vmatpush1.msra.mxu0 %v2094
      %2589 = vmatprep.subr.mxu0 0.0
      %2590 = vmatpush1.msra.mxu0 0.0
      %2591 = vmatprep.subr.mxu0 0.0
      %2592 = vmatpush1.msra.mxu0 0.0
      %2593 = vmatprep.subr.mxu0 0.0
      %2594 = vmatpush1.msra.mxu0 0.0
      %2595 = vmatprep.subr.mxu0 0.0
      %2596 = vmatpush1.msra.mxu0 0.0
      %2597 = vmatprep.subr.mxu0 0.0
      %2598 = vmatpush1.msra.mxu0 0.0
      %2599 = vmatprep.subr.mxu0 0.0
      %2600 = vmatpush1.msra.mxu0 0.0
      %2601 = vmatprep.subr.mxu0 0.0
      %2602 = vmatpush1.msra.mxu0 0.0
      %2603 = vmatprep.subr.mxu0 0.0
      %2604 = vmatpush1.msra.mxu0 0.0
      %2605 = vmatprep.subr.mxu0 0.0
      %2606 = vmatpush1.msra.mxu0 0.0
      %2607 = vmatprep.subr.mxu0 0.0
      %2608 = vmatpush1.msra.mxu0 0.0
      %2609 = vmatprep.subr.mxu0 0.0
      %2610 = vmatpush1.msra.mxu0 0.0
      %2611 = vmatprep.subr.mxu0 0.0
      %2612 = vmatpush1.msra.mxu0 0.0
      %2613 = vmatprep.subr.mxu0 0.0
      %2614 = vmatpush1.msra.mxu0 0.0
      %2615 = vmatprep.subr.mxu0 0.0
      %2616 = vmatpush1.msra.mxu0 0.0
      %2617 = vmatprep.subr.mxu0 0.0
      %2618 = vmatpush1.msra.mxu0 0.0
      %2619 = vmatprep.subr.mxu0 0.0
      %2620 = vmatpush1.msra.mxu0 0.0
      %2621 = vmatprep.subr.mxu0 0.0
      %2622 = vmatpush1.msra.mxu0 0.0
      %2623 = vmatprep.subr.mxu0 0.0
      %2624 = vmatpush1.msra.mxu0 0.0
      %2625 = vmatprep.subr.mxu0 0.0
      %2626 = vmatpush1.msra.mxu0 0.0
      %2627 = vmatprep.subr.mxu0 0.0
      %2628 = vmatpush1.msra.mxu0 0.0
      %2629 = vmatprep.subr.mxu0 0.0
      %2630 = vmatpush1.msra.mxu0 0.0
      %2631 = vmatprep.subr.mxu0 0.0
      %2632 = vmatpush1.msra.mxu0 0.0
      %2633 = vmatprep.subr.mxu0 0.0
      %2634 = vmatpush1.msra.mxu0 0.0
      %2635 = vmatprep.subr.mxu0 0.0
      %2636 = vmatpush1.msra.mxu0 0.0
      %2637 = vmatprep.subr.mxu0 0.0
      %2638 = vmatpush1.msra.mxu0 0.0
      %2639 = vmatprep.subr.mxu0 0.0
      %2640 = vmatpush1.msra.mxu0 0.0
      %2641 = vmatprep.subr.mxu0 0.0
      %2642 = vmatpush1.msra.mxu0 0.0
      %2643 = vmatprep.subr.mxu0 0.0
      %2644 = vmatpush1.msra.mxu0 0.0
      %2645 = vmatprep.subr.mxu0 0.0
      %2646 = vmatpush1.msra.mxu0 0.0
      %2647 = vmatprep.subr.mxu0 0.0
      %2648 = vmatpush1.msra.mxu0 0.0
      %2649 = vmatprep.subr.mxu0 0.0
      %2650 = vmatpush1.msra.mxu0 0.0
      %2651 = vmatprep.mubr.f32.mxu0 0.0
      %2652 = vmatmul.mubr.f32.gmra.mrb[0].mxu0 %v648
      %v2653 = vpop.f32.mrb[0].mxu0
      %v2654 = vadd.f32 0.0, %v2653
      %v2655 = vpop.f32.mrb[0].mxu0
      %2656 = vdwg.mxu0
      %2657 = vmatprep.subr.mxu0 0.0
      %2658 = vmatpush1.msra.mxu0 %v2164
      %2659 = vmatprep.subr.mxu0 0.0
      %2660 = vmatpush1.msra.mxu0 0.0
      %2661 = vmatprep.subr.mxu0 0.0
      %2662 = vmatpush1.msra.mxu0 0.0
      %2663 = vmatprep.subr.mxu0 0.0
      %2664 = vmatpush1.msra.mxu0 0.0
      %2665 = vmatprep.subr.mxu0 0.0
      %2666 = vmatpush1.msra.mxu0 0.0
      %2667 = vmatprep.subr.mxu0 0.0
      %2668 = vmatpush1.msra.mxu0 0.0
      %2669 = vmatprep.subr.mxu0 0.0
      %2670 = vmatpush1.msra.mxu0 0.0
      %2671 = vmatprep.subr.mxu0 0.0
      %2672 = vmatpush1.msra.mxu0 0.0
      %2673 = vmatprep.subr.mxu0 0.0
      %2674 = vmatpush1.msra.mxu0 0.0
      %2675 = vmatprep.subr.mxu0 0.0
      %2676 = vmatpush1.msra.mxu0 0.0
      %2677 = vmatprep.subr.mxu0 0.0
      %2678 = vmatpush1.msra.mxu0 0.0
      %2679 = vmatprep.subr.mxu0 0.0
      %2680 = vmatpush1.msra.mxu0 0.0
      %2681 = vmatprep.subr.mxu0 0.0
      %2682 = vmatpush1.msra.mxu0 0.0
      %2683 = vmatprep.subr.mxu0 0.0
      %2684 = vmatpush1.msra.mxu0 0.0
      %2685 = vmatprep.subr.mxu0 0.0
      %2686 = vmatpush1.msra.mxu0 0.0
      %2687 = vmatprep.subr.mxu0 0.0
      %2688 = vmatpush1.msra.mxu0 0.0
      %2689 = vmatprep.subr.mxu0 0.0
      %2690 = vmatpush1.msra.mxu0 0.0
      %2691 = vmatprep.subr.mxu0 0.0
      %2692 = vmatpush1.msra.mxu0 0.0
      %2693 = vmatprep.subr.mxu0 0.0
      %2694 = vmatpush1.msra.mxu0 0.0
      %2695 = vmatprep.subr.mxu0 0.0
      %2696 = vmatpush1.msra.mxu0 0.0
      %2697 = vmatprep.subr.mxu0 0.0
      %2698 = vmatpush1.msra.mxu0 0.0
      %2699 = vmatprep.subr.mxu0 0.0
      %2700 = vmatpush1.msra.mxu0 0.0
      %2701 = vmatprep.subr.mxu0 0.0
      %2702 = vmatpush1.msra.mxu0 0.0
      %2703 = vmatprep.subr.mxu0 0.0
      %2704 = vmatpush1.msra.mxu0 0.0
      %2705 = vmatprep.subr.mxu0 0.0
      %2706 = vmatpush1.msra.mxu0 0.0
      %2707 = vmatprep.subr.mxu0 0.0
      %2708 = vmatpush1.msra.mxu0 0.0
      %2709 = vmatprep.subr.mxu0 0.0
      %2710 = vmatpush1.msra.mxu0 0.0
      %2711 = vmatprep.subr.mxu0 0.0
      %2712 = vmatpush1.msra.mxu0 0.0
      %2713 = vmatprep.subr.mxu0 0.0
      %2714 = vmatpush1.msra.mxu0 0.0
      %2715 = vmatprep.subr.mxu0 0.0
      %2716 = vmatpush1.msra.mxu0 0.0
      %2717 = vmatprep.subr.mxu0 0.0
      %2718 = vmatpush1.msra.mxu0 0.0
      %2719 = vmatprep.subr.mxu0 0.0
      %2720 = vmatpush1.msra.mxu0 0.0
      %2721 = vmatprep.mubr.f32.mxu0 0.0
      %2722 = vmatmul.mubr.f32.gmra.mrb[0].mxu0 %v721
      %v2723 = vpop.f32.mrb[0].mxu0
      %v2724 = vadd.f32 0.0, %v2723
      %v2725 = vpop.f32.mrb[0].mxu0
      %2726 = vdwg.mxu0
      %2727 = vmatprep.subr.mxu0 0.0
      %2728 = vmatpush1.msra.mxu0 %v2234
      %2729 = vmatprep.subr.mxu0 0.0
      %2730 = vmatpush1.msra.mxu0 0.0
      %2731 = vmatprep.subr.mxu0 0.0
      %2732 = vmatpush1.msra.mxu0 0.0
      %2733 = vmatprep.subr.mxu0 0.0
      %2734 = vmatpush1.msra.mxu0 0.0
      %2735 = vmatprep.subr.mxu0 0.0
      %2736 = vmatpush1.msra.mxu0 0.0
      %2737 = vmatprep.subr.mxu0 0.0
      %2738 = vmatpush1.msra.mxu0 0.0
      %2739 = vmatprep.subr.mxu0 0.0
      %2740 = vmatpush1.msra.mxu0 0.0
      %2741 = vmatprep.subr.mxu0 0.0
      %2742 = vmatpush1.msra.mxu0 0.0
      %2743 = vmatprep.subr.mxu0 0.0
      %2744 = vmatpush1.msra.mxu0 0.0
      %2745 = vmatprep.subr.mxu0 0.0
      %2746 = vmatpush1.msra.mxu0 0.0
      %2747 = vmatprep.subr.mxu0 0.0
      %2748 = vmatpush1.msra.mxu0 0.0
      %2749 = vmatprep.subr.mxu0 0.0
      %2750 = vmatpush1.msra.mxu0 0.0
      %2751 = vmatprep.subr.mxu0 0.0
      %2752 = vmatpush1.msra.mxu0 0.0
      %2753 = vmatprep.subr.mxu0 0.0
      %2754 = vmatpush1.msra.mxu0 0.0
      %2755 = vmatprep.subr.mxu0 0.0
      %2756 = vmatpush1.msra.mxu0 0.0
      %2757 = vmatprep.subr.mxu0 0.0
      %2758 = vmatpush1.msra.mxu0 0.0
      %2759 = vmatprep.subr.mxu0 0.0
      %2760 = vmatpush1.msra.mxu0 0.0
      %2761 = vmatprep.subr.mxu0 0.0
      %2762 = vmatpush1.msra.mxu0 0.0
      %2763 = vmatprep.subr.mxu0 0.0
      %2764 = vmatpush1.msra.mxu0 0.0
      %2765 = vmatprep.subr.mxu0 0.0
      %2766 = vmatpush1.msra.mxu0 0.0
      %2767 = vmatprep.subr.mxu0 0.0
      %2768 = vmatpush1.msra.mxu0 0.0
      %2769 = vmatprep.subr.mxu0 0.0
      %2770 = vmatpush1.msra.mxu0 0.0
      %2771 = vmatprep.subr.mxu0 0.0
      %2772 = vmatpush1.msra.mxu0 0.0
      %2773 = vmatprep.subr.mxu0 0.0
      %2774 = vmatpush1.msra.mxu0 0.0
      %2775 = vmatprep.subr.mxu0 0.0
      %2776 = vmatpush1.msra.mxu0 0.0
      %2777 = vmatprep.subr.mxu0 0.0
      %2778 = vmatpush1.msra.mxu0 0.0
      %2779 = vmatprep.subr.mxu0 0.0
      %2780 = vmatpush1.msra.mxu0 0.0
      %2781 = vmatprep.subr.mxu0 0.0
      %2782 = vmatpush1.msra.mxu0 0.0
      %2783 = vmatprep.subr.mxu0 0.0
      %2784 = vmatpush1.msra.mxu0 0.0
      %2785 = vmatprep.subr.mxu0 0.0
      %2786 = vmatpush1.msra.mxu0 0.0
      %2787 = vmatprep.subr.mxu0 0.0
      %2788 = vmatpush1.msra.mxu0 0.0
      %2789 = vmatprep.subr.mxu0 0.0
      %2790 = vmatpush1.msra.mxu0 0.0
      %2791 = vmatprep.mubr.f32.mxu0 0.0
      %2792 = vmatmul.mubr.f32.gmra.mrb[0].mxu0 %v794
      %v2793 = vpop.f32.mrb[0].mxu0
      %v2794 = vadd.f32 0.0, %v2793
      %v2795 = vpop.f32.mrb[0].mxu0
      %2796 = vdwg.mxu0
      %v2797 = vmul.f32 %v2304, 2.0
      %v2798 = vmul.f32 %v2374, 2.0
      %v2799 = vmul.f32 %v2444, 2.0
      %v2800 = vmul.f32 %v2514, 2.0
      %v2801 = vmul.f32 %v2584, 2.0
      %v2802 = vmul.f32 %v2654, 2.0
      %v2803 = vmul.f32 %v2724, 2.0
      %v2804 = vmul.f32 %v2794, 2.0
      %v2805 = vsub.f32 %v2797, %v1669
      %v2806 = vsub.f32 %v2798, %v1670
      %v2807 = vsub.f32 %v2799, %v1671
      %v2808 = vsub.f32 %v2800, %v1672
      %v2809 = vsub.f32 %v2801, %v1673
      %v2810 = vsub.f32 %v2802, %v1674
      %v2811 = vsub.f32 %v2803, %v1675
      %v2812 = vsub.f32 %v2804, %v1676
      %2821 = vrot.lane.b32.xlu0 %v1744, 16
      %v2822 = vpop.permute.xlu0 %2821
      %2823 = vrot.lane.b32.xlu0 %v1814, 16
      %v2824 = vpop.permute.xlu0 %2823
      %2825 = vrot.lane.b32.xlu0 %v1884, 16
      %v2826 = vpop.permute.xlu0 %2825
      %2827 = vrot.lane.b32.xlu0 %v1954, 16
      %v2828 = vpop.permute.xlu0 %2827
      %2829 = vrot.lane.b32.xlu0 %v2024, 16
      %v2830 = vpop.permute.xlu0 %2829
      %2831 = vrot.lane.b32.xlu0 %v2094, 16
      %v2832 = vpop.permute.xlu0 %2831
      %2833 = vrot.lane.b32.xlu0 %v2164, 16
      %v2834 = vpop.permute.xlu0 %2833
      %2835 = vrot.lane.b32.xlu0 %v2234, 16
      %v2836 = vpop.permute.xlu0 %2835
      %2853 = vrot.lane.b32.xlu0 %v2805, 32
      %v2854 = vpop.permute.xlu0 %2853
      %2855 = vrot.lane.b32.xlu0 %v2806, 32
      %v2856 = vpop.permute.xlu0 %2855
      %2857 = vrot.lane.b32.xlu0 %v2807, 32
      %v2858 = vpop.permute.xlu0 %2857
      %2859 = vrot.lane.b32.xlu0 %v2808, 32
      %v2860 = vpop.permute.xlu0 %2859
      %2861 = vrot.lane.b32.xlu0 %v2809, 32
      %v2862 = vpop.permute.xlu0 %2861
      %2863 = vrot.lane.b32.xlu0 %v2810, 32
      %v2864 = vpop.permute.xlu0 %2863
      %2865 = vrot.lane.b32.xlu0 %v2811, 32
      %v2866 = vpop.permute.xlu0 %2865
      %2867 = vrot.lane.b32.xlu0 %v2812, 32
      %v2868 = vpop.permute.xlu0 %2867
      %vm2877 = vcmask 130048
      %v2878 = vsel %vm2877, %v1669, %v2822
      %v2879 = vsel %vm2877, %v1670, %v2824
      %v2880 = vsel %vm2877, %v1671, %v2826
      %v2881 = vsel %vm2877, %v1672, %v2828
      %v2882 = vsel %vm2877, %v1673, %v2830
      %v2883 = vsel %vm2877, %v1674, %v2832
      %v2884 = vsel %vm2877, %v1675, %v2834
      %v2885 = vsel %vm2877, %v1676, %v2836
      %vm2886 = vcmask 261120
      %v2887 = vsel %vm2886, %v2878, %v2854
      %v2888 = vsel %vm2886, %v2879, %v2856
      %v2889 = vsel %vm2886, %v2880, %v2858
      %v2890 = vsel %vm2886, %v2881, %v2860
      %v2891 = vsel %vm2886, %v2882, %v2862
      %v2892 = vsel %vm2886, %v2883, %v2864
      %v2893 = vsel %vm2886, %v2884, %v2866
      %v2894 = vsel %vm2886, %v2885, %v2868
      %v2895 = vlaneseq
      %v2896 = vshrl.u32 %v2895, 7
      %v2897 = vsub.s32 1, %v2896
      %v2898 = vrot.slane %v280, %v2897
      %vm2899 = vcmask 392192
      %v2901 = vsel %vm2899, %v2887, 0
      %v2904 = vsel %vm2899, %v2888, 0
      %v2907 = vsel %vm2899, %v2889, 0
      %v2910 = vsel %vm2899, %v2890, 0
      %v2913 = vsel %vm2899, %v2891, 0
      %v2916 = vsel %vm2899, %v2892, 0
      %v2919 = vsel %vm2899, %v2893, 0
      %v2922 = vsel %vm2899, %v2894, 0
      %2924 = vmatprep.subr.mxu0 0.0
      %2925 = vmatpush1.msra.mxu0 %v268
      %2926 = vmatprep.subr.mxu0 0.0
      %2927 = vmatpush1.msra.mxu0 %v269
      %2928 = vmatprep.subr.mxu0 0.0
      %2929 = vmatpush1.msra.mxu0 %v270
      %2930 = vmatprep.subr.mxu0 0.0
      %2931 = vmatpush1.msra.mxu0 %v271
      %2932 = vmatprep.subr.mxu0 0.0
      %2933 = vmatpush1.msra.mxu0 %v272
      %2934 = vmatprep.subr.mxu0 0.0
      %2935 = vmatpush1.msra.mxu0 %v273
      %2936 = vmatprep.subr.mxu0 0.0
      %2937 = vmatpush1.msra.mxu0 0.0
      %2938 = vmatprep.subr.mxu0 0.0
      %2939 = vmatpush1.msra.mxu0 0.0
      %2940 = vmatprep.subr.mxu0 0.0
      %2941 = vmatpush1.msra.mxu0 0.0
      %2942 = vmatprep.subr.mxu0 0.0
      %2943 = vmatpush1.msra.mxu0 0.0
      %2944 = vmatprep.subr.mxu0 0.0
      %2945 = vmatpush1.msra.mxu0 0.0
      %2946 = vmatprep.subr.mxu0 0.0
      %2947 = vmatpush1.msra.mxu0 0.0
      %2948 = vmatprep.subr.mxu0 0.0
      %2949 = vmatpush1.msra.mxu0 0.0
      %2950 = vmatprep.subr.mxu0 0.0
      %2951 = vmatpush1.msra.mxu0 0.0
      %2952 = vmatprep.subr.mxu0 0.0
      %2953 = vmatpush1.msra.mxu0 0.0
      %2954 = vmatprep.subr.mxu0 0.0
      %2955 = vmatpush1.msra.mxu0 0.0
      %2956 = vmatprep.subr.mxu0 0.0
      %2957 = vmatpush1.msra.mxu0 0.0
      %2958 = vmatprep.subr.mxu0 0.0
      %2959 = vmatpush1.msra.mxu0 0.0
      %2960 = vmatprep.subr.mxu0 0.0
      %2961 = vmatpush1.msra.mxu0 0.0
      %2962 = vmatprep.subr.mxu0 0.0
      %2963 = vmatpush1.msra.mxu0 0.0
      %2964 = vmatprep.subr.mxu0 0.0
      %2965 = vmatpush1.msra.mxu0 0.0
      %2966 = vmatprep.subr.mxu0 0.0
      %2967 = vmatpush1.msra.mxu0 0.0
      %2968 = vmatprep.subr.mxu0 0.0
      %2969 = vmatpush1.msra.mxu0 0.0
      %2970 = vmatprep.subr.mxu0 0.0
      %2971 = vmatpush1.msra.mxu0 0.0
      %2972 = vmatprep.subr.mxu0 0.0
      %2973 = vmatpush1.msra.mxu0 0.0
      %2974 = vmatprep.subr.mxu0 0.0
      %2975 = vmatpush1.msra.mxu0 0.0
      %2976 = vmatprep.subr.mxu0 0.0
      %2977 = vmatpush1.msra.mxu0 0.0
      %2978 = vmatprep.subr.mxu0 0.0
      %2979 = vmatpush1.msra.mxu0 0.0
      %2980 = vmatprep.subr.mxu0 0.0
      %2981 = vmatpush1.msra.mxu0 0.0
      %2982 = vmatprep.subr.mxu0 0.0
      %2983 = vmatpush1.msra.mxu0 0.0
      %2984 = vmatprep.subr.mxu0 0.0
      %2985 = vmatpush1.msra.mxu0 0.0
      %2986 = vmatprep.subr.mxu0 0.0
      %2987 = vmatpush1.msra.mxu0 0.0
      %2988 = vmatprep.mubr.f32.mxu0 0.0
      %2989 = vmatmul.mubr.f32.gmra.mrb[0].mxu0 %v2901
      %v2990 = vpop.f32.mrb[0].mxu0
      %v2991 = vadd.f32 %v2898, %v2990
      %v2992 = vpop.f32.mrb[0].mxu0
      %2993 = vmatprep.mubr.f32.mxu0 0.0
      %2994 = vmatmul.mubr.f32.gmra.mrb[0].mxu0 %v2904
      %v2995 = vpop.f32.mrb[0].mxu0
      %v2996 = vadd.f32 %v2898, %v2995
      %v2997 = vpop.f32.mrb[0].mxu0
      %2998 = vmatprep.mubr.f32.mxu0 0.0
      %2999 = vmatmul.mubr.f32.gmra.mrb[0].mxu0 %v2907
      %v3000 = vpop.f32.mrb[0].mxu0
      %v3001 = vadd.f32 %v2898, %v3000
      %v3002 = vpop.f32.mrb[0].mxu0
      %3003 = vmatprep.mubr.f32.mxu0 0.0
      %3004 = vmatmul.mubr.f32.gmra.mrb[0].mxu0 %v2910
      %v3005 = vpop.f32.mrb[0].mxu0
      %v3006 = vadd.f32 %v2898, %v3005
      %v3007 = vpop.f32.mrb[0].mxu0
      %3008 = vmatprep.mubr.f32.mxu0 0.0
      %3009 = vmatmul.mubr.f32.gmra.mrb[0].mxu0 %v2913
      %v3010 = vpop.f32.mrb[0].mxu0
      %v3011 = vadd.f32 %v2898, %v3010
      %v3012 = vpop.f32.mrb[0].mxu0
      %3013 = vmatprep.mubr.f32.mxu0 0.0
      %3014 = vmatmul.mubr.f32.gmra.mrb[0].mxu0 %v2916
      %v3015 = vpop.f32.mrb[0].mxu0
      %v3016 = vadd.f32 %v2898, %v3015
      %v3017 = vpop.f32.mrb[0].mxu0
      %3018 = vmatprep.mubr.f32.mxu0 0.0
      %3019 = vmatmul.mubr.f32.gmra.mrb[0].mxu0 %v2919
      %v3020 = vpop.f32.mrb[0].mxu0
      %v3021 = vadd.f32 %v2898, %v3020
      %v3022 = vpop.f32.mrb[0].mxu0
      %3023 = vmatprep.mubr.f32.mxu0 0.0
      %3024 = vmatmul.mubr.f32.gmra.mrb[0].mxu0 %v2922
      %v3025 = vpop.f32.mrb[0].mxu0
      %v3026 = vadd.f32 %v2898, %v3025
      %v3027 = vpop.f32.mrb[0].mxu0
      %3028 = vdwg.mxu0
      %v3029 = vmax.f32 %v2991, 0.0
      %v3030 = vmax.f32 %v2996, 0.0
      %v3031 = vmax.f32 %v3001, 0.0
      %v3032 = vmax.f32 %v3006, 0.0
      %v3033 = vmax.f32 %v3011, 0.0
      %v3034 = vmax.f32 %v3016, 0.0
      %v3035 = vmax.f32 %v3021, 0.0
      %v3036 = vmax.f32 %v3026, 0.0
      %3037 = vmatprep.subr.mxu0 0.0
      %3038 = vmatpush1.msra.mxu0 %v3029
      %3039 = vmatprep.subr.mxu0 0.0
      %3040 = vmatpush1.msra.mxu0 0.0
      %3041 = vmatprep.subr.mxu0 0.0
      %3042 = vmatpush1.msra.mxu0 0.0
      %3043 = vmatprep.subr.mxu0 0.0
      %3044 = vmatpush1.msra.mxu0 0.0
      %3045 = vmatprep.subr.mxu0 0.0
      %3046 = vmatpush1.msra.mxu0 0.0
      %3047 = vmatprep.subr.mxu0 0.0
      %3048 = vmatpush1.msra.mxu0 0.0
      %3049 = vmatprep.subr.mxu0 0.0
      %3050 = vmatpush1.msra.mxu0 0.0
      %3051 = vmatprep.subr.mxu0 0.0
      %3052 = vmatpush1.msra.mxu0 0.0
      %3053 = vmatprep.subr.mxu0 0.0
      %3054 = vmatpush1.msra.mxu0 0.0
      %3055 = vmatprep.subr.mxu0 0.0
      %3056 = vmatpush1.msra.mxu0 0.0
      %3057 = vmatprep.subr.mxu0 0.0
      %3058 = vmatpush1.msra.mxu0 0.0
      %3059 = vmatprep.subr.mxu0 0.0
      %3060 = vmatpush1.msra.mxu0 0.0
      %3061 = vmatprep.subr.mxu0 0.0
      %3062 = vmatpush1.msra.mxu0 0.0
      %3063 = vmatprep.subr.mxu0 0.0
      %3064 = vmatpush1.msra.mxu0 0.0
      %3065 = vmatprep.subr.mxu0 0.0
      %3066 = vmatpush1.msra.mxu0 0.0
      %3067 = vmatprep.subr.mxu0 0.0
      %3068 = vmatpush1.msra.mxu0 0.0
      %3069 = vmatprep.subr.mxu0 0.0
      %3070 = vmatpush1.msra.mxu0 0.0
      %3071 = vmatprep.subr.mxu0 0.0
      %3072 = vmatpush1.msra.mxu0 0.0
      %3073 = vmatprep.subr.mxu0 0.0
      %3074 = vmatpush1.msra.mxu0 0.0
      %3075 = vmatprep.subr.mxu0 0.0
      %3076 = vmatpush1.msra.mxu0 0.0
      %3077 = vmatprep.subr.mxu0 0.0
      %3078 = vmatpush1.msra.mxu0 0.0
      %3079 = vmatprep.subr.mxu0 0.0
      %3080 = vmatpush1.msra.mxu0 0.0
      %3081 = vmatprep.subr.mxu0 0.0
      %3082 = vmatpush1.msra.mxu0 0.0
      %3083 = vmatprep.subr.mxu0 0.0
      %3084 = vmatpush1.msra.mxu0 0.0
      %3085 = vmatprep.subr.mxu0 0.0
      %3086 = vmatpush1.msra.mxu0 0.0
      %3087 = vmatprep.subr.mxu0 0.0
      %3088 = vmatpush1.msra.mxu0 0.0
      %3089 = vmatprep.subr.mxu0 0.0
      %3090 = vmatpush1.msra.mxu0 0.0
      %3091 = vmatprep.subr.mxu0 0.0
      %3092 = vmatpush1.msra.mxu0 0.0
      %3093 = vmatprep.subr.mxu0 0.0
      %3094 = vmatpush1.msra.mxu0 0.0
      %3095 = vmatprep.subr.mxu0 0.0
      %3096 = vmatpush1.msra.mxu0 0.0
      %3097 = vmatprep.subr.mxu0 0.0
      %3098 = vmatpush1.msra.mxu0 0.0
      %3099 = vmatprep.subr.mxu0 0.0
      %3100 = vmatpush1.msra.mxu0 0.0
      %3101 = vmatprep.mubr.f32.mxu0 0.0
      %3102 = vmatmul.mubr.f32.gmra.mrb[0].mxu0 %v283
      %v3103 = vpop.f32.mrb[0].mxu0
      %v3104 = vadd.f32 0.0, %v3103
      %v3105 = vpop.f32.mrb[0].mxu0
      %3106 = vdwg.mxu0
      %3107 = vmatprep.subr.mxu0 0.0
      %3108 = vmatpush1.msra.mxu0 %v3030
      %3109 = vmatprep.subr.mxu0 0.0
      %3110 = vmatpush1.msra.mxu0 0.0
      %3111 = vmatprep.subr.mxu0 0.0
      %3112 = vmatpush1.msra.mxu0 0.0
      %3113 = vmatprep.subr.mxu0 0.0
      %3114 = vmatpush1.msra.mxu0 0.0
      %3115 = vmatprep.subr.mxu0 0.0
      %3116 = vmatpush1.msra.mxu0 0.0
      %3117 = vmatprep.subr.mxu0 0.0
      %3118 = vmatpush1.msra.mxu0 0.0
      %3119 = vmatprep.subr.mxu0 0.0
      %3120 = vmatpush1.msra.mxu0 0.0
      %3121 = vmatprep.subr.mxu0 0.0
      %3122 = vmatpush1.msra.mxu0 0.0
      %3123 = vmatprep.subr.mxu0 0.0
      %3124 = vmatpush1.msra.mxu0 0.0
      %3125 = vmatprep.subr.mxu0 0.0
      %3126 = vmatpush1.msra.mxu0 0.0
      %3127 = vmatprep.subr.mxu0 0.0
      %3128 = vmatpush1.msra.mxu0 0.0
      %3129 = vmatprep.subr.mxu0 0.0
      %3130 = vmatpush1.msra.mxu0 0.0
      %3131 = vmatprep.subr.mxu0 0.0
      %3132 = vmatpush1.msra.mxu0 0.0
      %3133 = vmatprep.subr.mxu0 0.0
      %3134 = vmatpush1.msra.mxu0 0.0
      %3135 = vmatprep.subr.mxu0 0.0
      %3136 = vmatpush1.msra.mxu0 0.0
      %3137 = vmatprep.subr.mxu0 0.0
      %3138 = vmatpush1.msra.mxu0 0.0
      %3139 = vmatprep.subr.mxu0 0.0
      %3140 = vmatpush1.msra.mxu0 0.0
      %3141 = vmatprep.subr.mxu0 0.0
      %3142 = vmatpush1.msra.mxu0 0.0
      %3143 = vmatprep.subr.mxu0 0.0
      %3144 = vmatpush1.msra.mxu0 0.0
      %3145 = vmatprep.subr.mxu0 0.0
      %3146 = vmatpush1.msra.mxu0 0.0
      %3147 = vmatprep.subr.mxu0 0.0
      %3148 = vmatpush1.msra.mxu0 0.0
      %3149 = vmatprep.subr.mxu0 0.0
      %3150 = vmatpush1.msra.mxu0 0.0
      %3151 = vmatprep.subr.mxu0 0.0
      %3152 = vmatpush1.msra.mxu0 0.0
      %3153 = vmatprep.subr.mxu0 0.0
      %3154 = vmatpush1.msra.mxu0 0.0
      %3155 = vmatprep.subr.mxu0 0.0
      %3156 = vmatpush1.msra.mxu0 0.0
      %3157 = vmatprep.subr.mxu0 0.0
      %3158 = vmatpush1.msra.mxu0 0.0
      %3159 = vmatprep.subr.mxu0 0.0
      %3160 = vmatpush1.msra.mxu0 0.0
      %3161 = vmatprep.subr.mxu0 0.0
      %3162 = vmatpush1.msra.mxu0 0.0
      %3163 = vmatprep.subr.mxu0 0.0
      %3164 = vmatpush1.msra.mxu0 0.0
      %3165 = vmatprep.subr.mxu0 0.0
      %3166 = vmatpush1.msra.mxu0 0.0
      %3167 = vmatprep.subr.mxu0 0.0
      %3168 = vmatpush1.msra.mxu0 0.0
      %3169 = vmatprep.subr.mxu0 0.0
      %3170 = vmatpush1.msra.mxu0 0.0
      %3171 = vmatprep.mubr.f32.mxu0 0.0
      %3172 = vmatmul.mubr.f32.gmra.mrb[0].mxu0 %v356
      %v3173 = vpop.f32.mrb[0].mxu0
      %v3174 = vadd.f32 0.0, %v3173
      %v3175 = vpop.f32.mrb[0].mxu0
      %3176 = vdwg.mxu0
      %3177 = vmatprep.subr.mxu0 0.0
      %3178 = vmatpush1.msra.mxu0 %v3031
      %3179 = vmatprep.subr.mxu0 0.0
      %3180 = vmatpush1.msra.mxu0 0.0
      %3181 = vmatprep.subr.mxu0 0.0
      %3182 = vmatpush1.msra.mxu0 0.0
      %3183 = vmatprep.subr.mxu0 0.0
      %3184 = vmatpush1.msra.mxu0 0.0
      %3185 = vmatprep.subr.mxu0 0.0
      %3186 = vmatpush1.msra.mxu0 0.0
      %3187 = vmatprep.subr.mxu0 0.0
      %3188 = vmatpush1.msra.mxu0 0.0
      %3189 = vmatprep.subr.mxu0 0.0
      %3190 = vmatpush1.msra.mxu0 0.0
      %3191 = vmatprep.subr.mxu0 0.0
      %3192 = vmatpush1.msra.mxu0 0.0
      %3193 = vmatprep.subr.mxu0 0.0
      %3194 = vmatpush1.msra.mxu0 0.0
      %3195 = vmatprep.subr.mxu0 0.0
      %3196 = vmatpush1.msra.mxu0 0.0
      %3197 = vmatprep.subr.mxu0 0.0
      %3198 = vmatpush1.msra.mxu0 0.0
      %3199 = vmatprep.subr.mxu0 0.0
      %3200 = vmatpush1.msra.mxu0 0.0
      %3201 = vmatprep.subr.mxu0 0.0
      %3202 = vmatpush1.msra.mxu0 0.0
      %3203 = vmatprep.subr.mxu0 0.0
      %3204 = vmatpush1.msra.mxu0 0.0
      %3205 = vmatprep.subr.mxu0 0.0
      %3206 = vmatpush1.msra.mxu0 0.0
      %3207 = vmatprep.subr.mxu0 0.0
      %3208 = vmatpush1.msra.mxu0 0.0
      %3209 = vmatprep.subr.mxu0 0.0
      %3210 = vmatpush1.msra.mxu0 0.0
      %3211 = vmatprep.subr.mxu0 0.0
      %3212 = vmatpush1.msra.mxu0 0.0
      %3213 = vmatprep.subr.mxu0 0.0
      %3214 = vmatpush1.msra.mxu0 0.0
      %3215 = vmatprep.subr.mxu0 0.0
      %3216 = vmatpush1.msra.mxu0 0.0
      %3217 = vmatprep.subr.mxu0 0.0
      %3218 = vmatpush1.msra.mxu0 0.0
      %3219 = vmatprep.subr.mxu0 0.0
      %3220 = vmatpush1.msra.mxu0 0.0
      %3221 = vmatprep.subr.mxu0 0.0
      %3222 = vmatpush1.msra.mxu0 0.0
      %3223 = vmatprep.subr.mxu0 0.0
      %3224 = vmatpush1.msra.mxu0 0.0
      %3225 = vmatprep.subr.mxu0 0.0
      %3226 = vmatpush1.msra.mxu0 0.0
      %3227 = vmatprep.subr.mxu0 0.0
      %3228 = vmatpush1.msra.mxu0 0.0
      %3229 = vmatprep.subr.mxu0 0.0
      %3230 = vmatpush1.msra.mxu0 0.0
      %3231 = vmatprep.subr.mxu0 0.0
      %3232 = vmatpush1.msra.mxu0 0.0
      %3233 = vmatprep.subr.mxu0 0.0
      %3234 = vmatpush1.msra.mxu0 0.0
      %3235 = vmatprep.subr.mxu0 0.0
      %3236 = vmatpush1.msra.mxu0 0.0
      %3237 = vmatprep.subr.mxu0 0.0
      %3238 = vmatpush1.msra.mxu0 0.0
      %3239 = vmatprep.subr.mxu0 0.0
      %3240 = vmatpush1.msra.mxu0 0.0
      %3241 = vmatprep.mubr.f32.mxu0 0.0
      %3242 = vmatmul.mubr.f32.gmra.mrb[0].mxu0 %v429
      %v3243 = vpop.f32.mrb[0].mxu0
      %v3244 = vadd.f32 0.0, %v3243
      %v3245 = vpop.f32.mrb[0].mxu0
      %3246 = vdwg.mxu0
      %3247 = vmatprep.subr.mxu0 0.0
      %3248 = vmatpush1.msra.mxu0 %v3032
      %3249 = vmatprep.subr.mxu0 0.0
      %3250 = vmatpush1.msra.mxu0 0.0
      %3251 = vmatprep.subr.mxu0 0.0
      %3252 = vmatpush1.msra.mxu0 0.0
      %3253 = vmatprep.subr.mxu0 0.0
      %3254 = vmatpush1.msra.mxu0 0.0
      %3255 = vmatprep.subr.mxu0 0.0
      %3256 = vmatpush1.msra.mxu0 0.0
      %3257 = vmatprep.subr.mxu0 0.0
      %3258 = vmatpush1.msra.mxu0 0.0
      %3259 = vmatprep.subr.mxu0 0.0
      %3260 = vmatpush1.msra.mxu0 0.0
      %3261 = vmatprep.subr.mxu0 0.0
      %3262 = vmatpush1.msra.mxu0 0.0
      %3263 = vmatprep.subr.mxu0 0.0
      %3264 = vmatpush1.msra.mxu0 0.0
      %3265 = vmatprep.subr.mxu0 0.0
      %3266 = vmatpush1.msra.mxu0 0.0
      %3267 = vmatprep.subr.mxu0 0.0
      %3268 = vmatpush1.msra.mxu0 0.0
      %3269 = vmatprep.subr.mxu0 0.0
      %3270 = vmatpush1.msra.mxu0 0.0
      %3271 = vmatprep.subr.mxu0 0.0
      %3272 = vmatpush1.msra.mxu0 0.0
      %3273 = vmatprep.subr.mxu0 0.0
      %3274 = vmatpush1.msra.mxu0 0.0
      %3275 = vmatprep.subr.mxu0 0.0
      %3276 = vmatpush1.msra.mxu0 0.0
      %3277 = vmatprep.subr.mxu0 0.0
      %3278 = vmatpush1.msra.mxu0 0.0
      %3279 = vmatprep.subr.mxu0 0.0
      %3280 = vmatpush1.msra.mxu0 0.0
      %3281 = vmatprep.subr.mxu0 0.0
      %3282 = vmatpush1.msra.mxu0 0.0
      %3283 = vmatprep.subr.mxu0 0.0
      %3284 = vmatpush1.msra.mxu0 0.0
      %3285 = vmatprep.subr.mxu0 0.0
      %3286 = vmatpush1.msra.mxu0 0.0
      %3287 = vmatprep.subr.mxu0 0.0
      %3288 = vmatpush1.msra.mxu0 0.0
      %3289 = vmatprep.subr.mxu0 0.0
      %3290 = vmatpush1.msra.mxu0 0.0
      %3291 = vmatprep.subr.mxu0 0.0
      %3292 = vmatpush1.msra.mxu0 0.0
      %3293 = vmatprep.subr.mxu0 0.0
      %3294 = vmatpush1.msra.mxu0 0.0
      %3295 = vmatprep.subr.mxu0 0.0
      %3296 = vmatpush1.msra.mxu0 0.0
      %3297 = vmatprep.subr.mxu0 0.0
      %3298 = vmatpush1.msra.mxu0 0.0
      %3299 = vmatprep.subr.mxu0 0.0
      %3300 = vmatpush1.msra.mxu0 0.0
      %3301 = vmatprep.subr.mxu0 0.0
      %3302 = vmatpush1.msra.mxu0 0.0
      %3303 = vmatprep.subr.mxu0 0.0
      %3304 = vmatpush1.msra.mxu0 0.0
      %3305 = vmatprep.subr.mxu0 0.0
      %3306 = vmatpush1.msra.mxu0 0.0
      %3307 = vmatprep.subr.mxu0 0.0
      %3308 = vmatpush1.msra.mxu0 0.0
      %3309 = vmatprep.subr.mxu0 0.0
      %3310 = vmatpush1.msra.mxu0 0.0
      %3311 = vmatprep.mubr.f32.mxu0 0.0
      %3312 = vmatmul.mubr.f32.gmra.mrb[0].mxu0 %v502
      %v3313 = vpop.f32.mrb[0].mxu0
      %v3314 = vadd.f32 0.0, %v3313
      %v3315 = vpop.f32.mrb[0].mxu0
      %3316 = vdwg.mxu0
      %3317 = vmatprep.subr.mxu0 0.0
      %3318 = vmatpush1.msra.mxu0 %v3033
      %3319 = vmatprep.subr.mxu0 0.0
      %3320 = vmatpush1.msra.mxu0 0.0
      %3321 = vmatprep.subr.mxu0 0.0
      %3322 = vmatpush1.msra.mxu0 0.0
      %3323 = vmatprep.subr.mxu0 0.0
      %3324 = vmatpush1.msra.mxu0 0.0
      %3325 = vmatprep.subr.mxu0 0.0
      %3326 = vmatpush1.msra.mxu0 0.0
      %3327 = vmatprep.subr.mxu0 0.0
      %3328 = vmatpush1.msra.mxu0 0.0
      %3329 = vmatprep.subr.mxu0 0.0
      %3330 = vmatpush1.msra.mxu0 0.0
      %3331 = vmatprep.subr.mxu0 0.0
      %3332 = vmatpush1.msra.mxu0 0.0
      %3333 = vmatprep.subr.mxu0 0.0
      %3334 = vmatpush1.msra.mxu0 0.0
      %3335 = vmatprep.subr.mxu0 0.0
      %3336 = vmatpush1.msra.mxu0 0.0
      %3337 = vmatprep.subr.mxu0 0.0
      %3338 = vmatpush1.msra.mxu0 0.0
      %3339 = vmatprep.subr.mxu0 0.0
      %3340 = vmatpush1.msra.mxu0 0.0
      %3341 = vmatprep.subr.mxu0 0.0
      %3342 = vmatpush1.msra.mxu0 0.0
      %3343 = vmatprep.subr.mxu0 0.0
      %3344 = vmatpush1.msra.mxu0 0.0
      %3345 = vmatprep.subr.mxu0 0.0
      %3346 = vmatpush1.msra.mxu0 0.0
      %3347 = vmatprep.subr.mxu0 0.0
      %3348 = vmatpush1.msra.mxu0 0.0
      %3349 = vmatprep.subr.mxu0 0.0
      %3350 = vmatpush1.msra.mxu0 0.0
      %3351 = vmatprep.subr.mxu0 0.0
      %3352 = vmatpush1.msra.mxu0 0.0
      %3353 = vmatprep.subr.mxu0 0.0
      %3354 = vmatpush1.msra.mxu0 0.0
      %3355 = vmatprep.subr.mxu0 0.0
      %3356 = vmatpush1.msra.mxu0 0.0
      %3357 = vmatprep.subr.mxu0 0.0
      %3358 = vmatpush1.msra.mxu0 0.0
      %3359 = vmatprep.subr.mxu0 0.0
      %3360 = vmatpush1.msra.mxu0 0.0
      %3361 = vmatprep.subr.mxu0 0.0
      %3362 = vmatpush1.msra.mxu0 0.0
      %3363 = vmatprep.subr.mxu0 0.0
      %3364 = vmatpush1.msra.mxu0 0.0
      %3365 = vmatprep.subr.mxu0 0.0
      %3366 = vmatpush1.msra.mxu0 0.0
      %3367 = vmatprep.subr.mxu0 0.0
      %3368 = vmatpush1.msra.mxu0 0.0
      %3369 = vmatprep.subr.mxu0 0.0
      %3370 = vmatpush1.msra.mxu0 0.0
      %3371 = vmatprep.subr.mxu0 0.0
      %3372 = vmatpush1.msra.mxu0 0.0
      %3373 = vmatprep.subr.mxu0 0.0
      %3374 = vmatpush1.msra.mxu0 0.0
      %3375 = vmatprep.subr.mxu0 0.0
      %3376 = vmatpush1.msra.mxu0 0.0
      %3377 = vmatprep.subr.mxu0 0.0
      %3378 = vmatpush1.msra.mxu0 0.0
      %3379 = vmatprep.subr.mxu0 0.0
      %3380 = vmatpush1.msra.mxu0 0.0
      %3381 = vmatprep.mubr.f32.mxu0 0.0
      %3382 = vmatmul.mubr.f32.gmra.mrb[0].mxu0 %v575
      %v3383 = vpop.f32.mrb[0].mxu0
      %v3384 = vadd.f32 0.0, %v3383
      %v3385 = vpop.f32.mrb[0].mxu0
      %3386 = vdwg.mxu0
      %3387 = vmatprep.subr.mxu0 0.0
      %3388 = vmatpush1.msra.mxu0 %v3034
      %3389 = vmatprep.subr.mxu0 0.0
      %3390 = vmatpush1.msra.mxu0 0.0
      %3391 = vmatprep.subr.mxu0 0.0
      %3392 = vmatpush1.msra.mxu0 0.0
      %3393 = vmatprep.subr.mxu0 0.0
      %3394 = vmatpush1.msra.mxu0 0.0
      %3395 = vmatprep.subr.mxu0 0.0
      %3396 = vmatpush1.msra.mxu0 0.0
      %3397 = vmatprep.subr.mxu0 0.0
      %3398 = vmatpush1.msra.mxu0 0.0
      %3399 = vmatprep.subr.mxu0 0.0
      %3400 = vmatpush1.msra.mxu0 0.0
      %3401 = vmatprep.subr.mxu0 0.0
      %3402 = vmatpush1.msra.mxu0 0.0
      %3403 = vmatprep.subr.mxu0 0.0
      %3404 = vmatpush1.msra.mxu0 0.0
      %3405 = vmatprep.subr.mxu0 0.0
      %3406 = vmatpush1.msra.mxu0 0.0
      %3407 = vmatprep.subr.mxu0 0.0
      %3408 = vmatpush1.msra.mxu0 0.0
      %3409 = vmatprep.subr.mxu0 0.0
      %3410 = vmatpush1.msra.mxu0 0.0
      %3411 = vmatprep.subr.mxu0 0.0
      %3412 = vmatpush1.msra.mxu0 0.0
      %3413 = vmatprep.subr.mxu0 0.0
      %3414 = vmatpush1.msra.mxu0 0.0
      %3415 = vmatprep.subr.mxu0 0.0
      %3416 = vmatpush1.msra.mxu0 0.0
      %3417 = vmatprep.subr.mxu0 0.0
      %3418 = vmatpush1.msra.mxu0 0.0
      %3419 = vmatprep.subr.mxu0 0.0
      %3420 = vmatpush1.msra.mxu0 0.0
      %3421 = vmatprep.subr.mxu0 0.0
      %3422 = vmatpush1.msra.mxu0 0.0
      %3423 = vmatprep.subr.mxu0 0.0
      %3424 = vmatpush1.msra.mxu0 0.0
      %3425 = vmatprep.subr.mxu0 0.0
      %3426 = vmatpush1.msra.mxu0 0.0
      %3427 = vmatprep.subr.mxu0 0.0
      %3428 = vmatpush1.msra.mxu0 0.0
      %3429 = vmatprep.subr.mxu0 0.0
      %3430 = vmatpush1.msra.mxu0 0.0
      %3431 = vmatprep.subr.mxu0 0.0
      %3432 = vmatpush1.msra.mxu0 0.0
      %3433 = vmatprep.subr.mxu0 0.0
      %3434 = vmatpush1.msra.mxu0 0.0
      %3435 = vmatprep.subr.mxu0 0.0
      %3436 = vmatpush1.msra.mxu0 0.0
      %3437 = vmatprep.subr.mxu0 0.0
      %3438 = vmatpush1.msra.mxu0 0.0
      %3439 = vmatprep.subr.mxu0 0.0
      %3440 = vmatpush1.msra.mxu0 0.0
      %3441 = vmatprep.subr.mxu0 0.0
      %3442 = vmatpush1.msra.mxu0 0.0
      %3443 = vmatprep.subr.mxu0 0.0
      %3444 = vmatpush1.msra.mxu0 0.0
      %3445 = vmatprep.subr.mxu0 0.0
      %3446 = vmatpush1.msra.mxu0 0.0
      %3447 = vmatprep.subr.mxu0 0.0
      %3448 = vmatpush1.msra.mxu0 0.0
      %3449 = vmatprep.subr.mxu0 0.0
      %3450 = vmatpush1.msra.mxu0 0.0
      %3451 = vmatprep.mubr.f32.mxu0 0.0
      %3452 = vmatmul.mubr.f32.gmra.mrb[0].mxu0 %v648
      %v3453 = vpop.f32.mrb[0].mxu0
      %v3454 = vadd.f32 0.0, %v3453
      %v3455 = vpop.f32.mrb[0].mxu0
      %3456 = vdwg.mxu0
      %3457 = vmatprep.subr.mxu0 0.0
      %3458 = vmatpush1.msra.mxu0 %v3035
      %3459 = vmatprep.subr.mxu0 0.0
      %3460 = vmatpush1.msra.mxu0 0.0
      %3461 = vmatprep.subr.mxu0 0.0
      %3462 = vmatpush1.msra.mxu0 0.0
      %3463 = vmatprep.subr.mxu0 0.0
      %3464 = vmatpush1.msra.mxu0 0.0
      %3465 = vmatprep.subr.mxu0 0.0
      %3466 = vmatpush1.msra.mxu0 0.0
      %3467 = vmatprep.subr.mxu0 0.0
      %3468 = vmatpush1.msra.mxu0 0.0
      %3469 = vmatprep.subr.mxu0 0.0
      %3470 = vmatpush1.msra.mxu0 0.0
      %3471 = vmatprep.subr.mxu0 0.0
      %3472 = vmatpush1.msra.mxu0 0.0
      %3473 = vmatprep.subr.mxu0 0.0
      %3474 = vmatpush1.msra.mxu0 0.0
      %3475 = vmatprep.subr.mxu0 0.0
      %3476 = vmatpush1.msra.mxu0 0.0
      %3477 = vmatprep.subr.mxu0 0.0
      %3478 = vmatpush1.msra.mxu0 0.0
      %3479 = vmatprep.subr.mxu0 0.0
      %3480 = vmatpush1.msra.mxu0 0.0
      %3481 = vmatprep.subr.mxu0 0.0
      %3482 = vmatpush1.msra.mxu0 0.0
      %3483 = vmatprep.subr.mxu0 0.0
      %3484 = vmatpush1.msra.mxu0 0.0
      %3485 = vmatprep.subr.mxu0 0.0
      %3486 = vmatpush1.msra.mxu0 0.0
      %3487 = vmatprep.subr.mxu0 0.0
      %3488 = vmatpush1.msra.mxu0 0.0
      %3489 = vmatprep.subr.mxu0 0.0
      %3490 = vmatpush1.msra.mxu0 0.0
      %3491 = vmatprep.subr.mxu0 0.0
      %3492 = vmatpush1.msra.mxu0 0.0
      %3493 = vmatprep.subr.mxu0 0.0
      %3494 = vmatpush1.msra.mxu0 0.0
      %3495 = vmatprep.subr.mxu0 0.0
      %3496 = vmatpush1.msra.mxu0 0.0
      %3497 = vmatprep.subr.mxu0 0.0
      %3498 = vmatpush1.msra.mxu0 0.0
      %3499 = vmatprep.subr.mxu0 0.0
      %3500 = vmatpush1.msra.mxu0 0.0
      %3501 = vmatprep.subr.mxu0 0.0
      %3502 = vmatpush1.msra.mxu0 0.0
      %3503 = vmatprep.subr.mxu0 0.0
      %3504 = vmatpush1.msra.mxu0 0.0
      %3505 = vmatprep.subr.mxu0 0.0
      %3506 = vmatpush1.msra.mxu0 0.0
      %3507 = vmatprep.subr.mxu0 0.0
      %3508 = vmatpush1.msra.mxu0 0.0
      %3509 = vmatprep.subr.mxu0 0.0
      %3510 = vmatpush1.msra.mxu0 0.0
      %3511 = vmatprep.subr.mxu0 0.0
      %3512 = vmatpush1.msra.mxu0 0.0
      %3513 = vmatprep.subr.mxu0 0.0
      %3514 = vmatpush1.msra.mxu0 0.0
      %3515 = vmatprep.subr.mxu0 0.0
      %3516 = vmatpush1.msra.mxu0 0.0
      %3517 = vmatprep.subr.mxu0 0.0
      %3518 = vmatpush1.msra.mxu0 0.0
      %3519 = vmatprep.subr.mxu0 0.0
      %3520 = vmatpush1.msra.mxu0 0.0
      %3521 = vmatprep.mubr.f32.mxu0 0.0
      %3522 = vmatmul.mubr.f32.gmra.mrb[0].mxu0 %v721
      %v3523 = vpop.f32.mrb[0].mxu0
      %v3524 = vadd.f32 0.0, %v3523
      %v3525 = vpop.f32.mrb[0].mxu0
      %3526 = vdwg.mxu0
      %3527 = vmatprep.subr.mxu0 0.0
      %3528 = vmatpush1.msra.mxu0 %v3036
      %3529 = vmatprep.subr.mxu0 0.0
      %3530 = vmatpush1.msra.mxu0 0.0
      %3531 = vmatprep.subr.mxu0 0.0
      %3532 = vmatpush1.msra.mxu0 0.0
      %3533 = vmatprep.subr.mxu0 0.0
      %3534 = vmatpush1.msra.mxu0 0.0
      %3535 = vmatprep.subr.mxu0 0.0
      %3536 = vmatpush1.msra.mxu0 0.0
      %3537 = vmatprep.subr.mxu0 0.0
      %3538 = vmatpush1.msra.mxu0 0.0
      %3539 = vmatprep.subr.mxu0 0.0
      %3540 = vmatpush1.msra.mxu0 0.0
      %3541 = vmatprep.subr.mxu0 0.0
      %3542 = vmatpush1.msra.mxu0 0.0
      %3543 = vmatprep.subr.mxu0 0.0
      %3544 = vmatpush1.msra.mxu0 0.0
      %3545 = vmatprep.subr.mxu0 0.0
      %3546 = vmatpush1.msra.mxu0 0.0
      %3547 = vmatprep.subr.mxu0 0.0
      %3548 = vmatpush1.msra.mxu0 0.0
      %3549 = vmatprep.subr.mxu0 0.0
      %3550 = vmatpush1.msra.mxu0 0.0
      %3551 = vmatprep.subr.mxu0 0.0
      %3552 = vmatpush1.msra.mxu0 0.0
      %3553 = vmatprep.subr.mxu0 0.0
      %3554 = vmatpush1.msra.mxu0 0.0
      %3555 = vmatprep.subr.mxu0 0.0
      %3556 = vmatpush1.msra.mxu0 0.0
      %3557 = vmatprep.subr.mxu0 0.0
      %3558 = vmatpush1.msra.mxu0 0.0
      %3559 = vmatprep.subr.mxu0 0.0
      %3560 = vmatpush1.msra.mxu0 0.0
      %3561 = vmatprep.subr.mxu0 0.0
      %3562 = vmatpush1.msra.mxu0 0.0
      %3563 = vmatprep.subr.mxu0 0.0
      %3564 = vmatpush1.msra.mxu0 0.0
      %3565 = vmatprep.subr.mxu0 0.0
      %3566 = vmatpush1.msra.mxu0 0.0
      %3567 = vmatprep.subr.mxu0 0.0
      %3568 = vmatpush1.msra.mxu0 0.0
      %3569 = vmatprep.subr.mxu0 0.0
      %3570 = vmatpush1.msra.mxu0 0.0
      %3571 = vmatprep.subr.mxu0 0.0
      %3572 = vmatpush1.msra.mxu0 0.0
      %3573 = vmatprep.subr.mxu0 0.0
      %3574 = vmatpush1.msra.mxu0 0.0
      %3575 = vmatprep.subr.mxu0 0.0
      %3576 = vmatpush1.msra.mxu0 0.0
      %3577 = vmatprep.subr.mxu0 0.0
      %3578 = vmatpush1.msra.mxu0 0.0
      %3579 = vmatprep.subr.mxu0 0.0
      %3580 = vmatpush1.msra.mxu0 0.0
      %3581 = vmatprep.subr.mxu0 0.0
      %3582 = vmatpush1.msra.mxu0 0.0
      %3583 = vmatprep.subr.mxu0 0.0
      %3584 = vmatpush1.msra.mxu0 0.0
      %3585 = vmatprep.subr.mxu0 0.0
      %3586 = vmatpush1.msra.mxu0 0.0
      %3587 = vmatprep.subr.mxu0 0.0
      %3588 = vmatpush1.msra.mxu0 0.0
      %3589 = vmatprep.subr.mxu0 0.0
      %3590 = vmatpush1.msra.mxu0 0.0
      %3591 = vmatprep.mubr.f32.mxu0 0.0
      %3592 = vmatmul.mubr.f32.gmra.mrb[0].mxu0 %v794
      %v3593 = vpop.f32.mrb[0].mxu0
      %v3594 = vadd.f32 0.0, %v3593
      %v3595 = vpop.f32.mrb[0].mxu0
      %3596 = vdwg.mxu0
      %3597 = vmatprep.subr.mxu0 0.0
      %3598 = vmatpush1.msra.mxu0 %v3104
      %3599 = vmatprep.subr.mxu0 0.0
      %3600 = vmatpush1.msra.mxu0 0.0
      %3601 = vmatprep.subr.mxu0 0.0
      %3602 = vmatpush1.msra.mxu0 0.0
      %3603 = vmatprep.subr.mxu0 0.0
      %3604 = vmatpush1.msra.mxu0 0.0
      %3605 = vmatprep.subr.mxu0 0.0
      %3606 = vmatpush1.msra.mxu0 0.0
      %3607 = vmatprep.subr.mxu0 0.0
      %3608 = vmatpush1.msra.mxu0 0.0
      %3609 = vmatprep.subr.mxu0 0.0
      %3610 = vmatpush1.msra.mxu0 0.0
      %3611 = vmatprep.subr.mxu0 0.0
      %3612 = vmatpush1.msra.mxu0 0.0
      %3613 = vmatprep.subr.mxu0 0.0
      %3614 = vmatpush1.msra.mxu0 0.0
      %3615 = vmatprep.subr.mxu0 0.0
      %3616 = vmatpush1.msra.mxu0 0.0
      %3617 = vmatprep.subr.mxu0 0.0
      %3618 = vmatpush1.msra.mxu0 0.0
      %3619 = vmatprep.subr.mxu0 0.0
      %3620 = vmatpush1.msra.mxu0 0.0
      %3621 = vmatprep.subr.mxu0 0.0
      %3622 = vmatpush1.msra.mxu0 0.0
      %3623 = vmatprep.subr.mxu0 0.0
      %3624 = vmatpush1.msra.mxu0 0.0
      %3625 = vmatprep.subr.mxu0 0.0
      %3626 = vmatpush1.msra.mxu0 0.0
      %3627 = vmatprep.subr.mxu0 0.0
      %3628 = vmatpush1.msra.mxu0 0.0
      %3629 = vmatprep.subr.mxu0 0.0
      %3630 = vmatpush1.msra.mxu0 0.0
      %3631 = vmatprep.subr.mxu0 0.0
      %3632 = vmatpush1.msra.mxu0 0.0
      %3633 = vmatprep.subr.mxu0 0.0
      %3634 = vmatpush1.msra.mxu0 0.0
      %3635 = vmatprep.subr.mxu0 0.0
      %3636 = vmatpush1.msra.mxu0 0.0
      %3637 = vmatprep.subr.mxu0 0.0
      %3638 = vmatpush1.msra.mxu0 0.0
      %3639 = vmatprep.subr.mxu0 0.0
      %3640 = vmatpush1.msra.mxu0 0.0
      %3641 = vmatprep.subr.mxu0 0.0
      %3642 = vmatpush1.msra.mxu0 0.0
      %3643 = vmatprep.subr.mxu0 0.0
      %3644 = vmatpush1.msra.mxu0 0.0
      %3645 = vmatprep.subr.mxu0 0.0
      %3646 = vmatpush1.msra.mxu0 0.0
      %3647 = vmatprep.subr.mxu0 0.0
      %3648 = vmatpush1.msra.mxu0 0.0
      %3649 = vmatprep.subr.mxu0 0.0
      %3650 = vmatpush1.msra.mxu0 0.0
      %3651 = vmatprep.subr.mxu0 0.0
      %3652 = vmatpush1.msra.mxu0 0.0
      %3653 = vmatprep.subr.mxu0 0.0
      %3654 = vmatpush1.msra.mxu0 0.0
      %3655 = vmatprep.subr.mxu0 0.0
      %3656 = vmatpush1.msra.mxu0 0.0
      %3657 = vmatprep.subr.mxu0 0.0
      %3658 = vmatpush1.msra.mxu0 0.0
      %3659 = vmatprep.subr.mxu0 0.0
      %3660 = vmatpush1.msra.mxu0 0.0
      %3661 = vmatprep.mubr.f32.mxu0 0.0
      %3662 = vmatmul.mubr.f32.gmra.mrb[0].mxu0 %v283
      %v3663 = vpop.f32.mrb[0].mxu0
      %v3664 = vadd.f32 0.0, %v3663
      %v3665 = vpop.f32.mrb[0].mxu0
      %3666 = vdwg.mxu0
      %3667 = vmatprep.subr.mxu0 0.0
      %3668 = vmatpush1.msra.mxu0 %v3174
      %3669 = vmatprep.subr.mxu0 0.0
      %3670 = vmatpush1.msra.mxu0 0.0
      %3671 = vmatprep.subr.mxu0 0.0
      %3672 = vmatpush1.msra.mxu0 0.0
      %3673 = vmatprep.subr.mxu0 0.0
      %3674 = vmatpush1.msra.mxu0 0.0
      %3675 = vmatprep.subr.mxu0 0.0
      %3676 = vmatpush1.msra.mxu0 0.0
      %3677 = vmatprep.subr.mxu0 0.0
      %3678 = vmatpush1.msra.mxu0 0.0
      %3679 = vmatprep.subr.mxu0 0.0
      %3680 = vmatpush1.msra.mxu0 0.0
      %3681 = vmatprep.subr.mxu0 0.0
      %3682 = vmatpush1.msra.mxu0 0.0
      %3683 = vmatprep.subr.mxu0 0.0
      %3684 = vmatpush1.msra.mxu0 0.0
      %3685 = vmatprep.subr.mxu0 0.0
      %3686 = vmatpush1.msra.mxu0 0.0
      %3687 = vmatprep.subr.mxu0 0.0
      %3688 = vmatpush1.msra.mxu0 0.0
      %3689 = vmatprep.subr.mxu0 0.0
      %3690 = vmatpush1.msra.mxu0 0.0
      %3691 = vmatprep.subr.mxu0 0.0
      %3692 = vmatpush1.msra.mxu0 0.0
      %3693 = vmatprep.subr.mxu0 0.0
      %3694 = vmatpush1.msra.mxu0 0.0
      %3695 = vmatprep.subr.mxu0 0.0
      %3696 = vmatpush1.msra.mxu0 0.0
      %3697 = vmatprep.subr.mxu0 0.0
      %3698 = vmatpush1.msra.mxu0 0.0
      %3699 = vmatprep.subr.mxu0 0.0
      %3700 = vmatpush1.msra.mxu0 0.0
      %3701 = vmatprep.subr.mxu0 0.0
      %3702 = vmatpush1.msra.mxu0 0.0
      %3703 = vmatprep.subr.mxu0 0.0
      %3704 = vmatpush1.msra.mxu0 0.0
      %3705 = vmatprep.subr.mxu0 0.0
      %3706 = vmatpush1.msra.mxu0 0.0
      %3707 = vmatprep.subr.mxu0 0.0
      %3708 = vmatpush1.msra.mxu0 0.0
      %3709 = vmatprep.subr.mxu0 0.0
      %3710 = vmatpush1.msra.mxu0 0.0
      %3711 = vmatprep.subr.mxu0 0.0
      %3712 = vmatpush1.msra.mxu0 0.0
      %3713 = vmatprep.subr.mxu0 0.0
      %3714 = vmatpush1.msra.mxu0 0.0
      %3715 = vmatprep.subr.mxu0 0.0
      %3716 = vmatpush1.msra.mxu0 0.0
      %3717 = vmatprep.subr.mxu0 0.0
      %3718 = vmatpush1.msra.mxu0 0.0
      %3719 = vmatprep.subr.mxu0 0.0
      %3720 = vmatpush1.msra.mxu0 0.0
      %3721 = vmatprep.subr.mxu0 0.0
      %3722 = vmatpush1.msra.mxu0 0.0
      %3723 = vmatprep.subr.mxu0 0.0
      %3724 = vmatpush1.msra.mxu0 0.0
      %3725 = vmatprep.subr.mxu0 0.0
      %3726 = vmatpush1.msra.mxu0 0.0
      %3727 = vmatprep.subr.mxu0 0.0
      %3728 = vmatpush1.msra.mxu0 0.0
      %3729 = vmatprep.subr.mxu0 0.0
      %3730 = vmatpush1.msra.mxu0 0.0
      %3731 = vmatprep.mubr.f32.mxu0 0.0
      %3732 = vmatmul.mubr.f32.gmra.mrb[0].mxu0 %v356
      %v3733 = vpop.f32.mrb[0].mxu0
      %v3734 = vadd.f32 0.0, %v3733
      %v3735 = vpop.f32.mrb[0].mxu0
      %3736 = vdwg.mxu0
      %3737 = vmatprep.subr.mxu0 0.0
      %3738 = vmatpush1.msra.mxu0 %v3244
      %3739 = vmatprep.subr.mxu0 0.0
      %3740 = vmatpush1.msra.mxu0 0.0
      %3741 = vmatprep.subr.mxu0 0.0
      %3742 = vmatpush1.msra.mxu0 0.0
      %3743 = vmatprep.subr.mxu0 0.0
      %3744 = vmatpush1.msra.mxu0 0.0
      %3745 = vmatprep.subr.mxu0 0.0
      %3746 = vmatpush1.msra.mxu0 0.0
      %3747 = vmatprep.subr.mxu0 0.0
      %3748 = vmatpush1.msra.mxu0 0.0
      %3749 = vmatprep.subr.mxu0 0.0
      %3750 = vmatpush1.msra.mxu0 0.0
      %3751 = vmatprep.subr.mxu0 0.0
      %3752 = vmatpush1.msra.mxu0 0.0
      %3753 = vmatprep.subr.mxu0 0.0
      %3754 = vmatpush1.msra.mxu0 0.0
      %3755 = vmatprep.subr.mxu0 0.0
      %3756 = vmatpush1.msra.mxu0 0.0
      %3757 = vmatprep.subr.mxu0 0.0
      %3758 = vmatpush1.msra.mxu0 0.0
      %3759 = vmatprep.subr.mxu0 0.0
      %3760 = vmatpush1.msra.mxu0 0.0
      %3761 = vmatprep.subr.mxu0 0.0
      %3762 = vmatpush1.msra.mxu0 0.0
      %3763 = vmatprep.subr.mxu0 0.0
      %3764 = vmatpush1.msra.mxu0 0.0
      %3765 = vmatprep.subr.mxu0 0.0
      %3766 = vmatpush1.msra.mxu0 0.0
      %3767 = vmatprep.subr.mxu0 0.0
      %3768 = vmatpush1.msra.mxu0 0.0
      %3769 = vmatprep.subr.mxu0 0.0
      %3770 = vmatpush1.msra.mxu0 0.0
      %3771 = vmatprep.subr.mxu0 0.0
      %3772 = vmatpush1.msra.mxu0 0.0
      %3773 = vmatprep.subr.mxu0 0.0
      %3774 = vmatpush1.msra.mxu0 0.0
      %3775 = vmatprep.subr.mxu0 0.0
      %3776 = vmatpush1.msra.mxu0 0.0
      %3777 = vmatprep.subr.mxu0 0.0
      %3778 = vmatpush1.msra.mxu0 0.0
      %3779 = vmatprep.subr.mxu0 0.0
      %3780 = vmatpush1.msra.mxu0 0.0
      %3781 = vmatprep.subr.mxu0 0.0
      %3782 = vmatpush1.msra.mxu0 0.0
      %3783 = vmatprep.subr.mxu0 0.0
      %3784 = vmatpush1.msra.mxu0 0.0
      %3785 = vmatprep.subr.mxu0 0.0
      %3786 = vmatpush1.msra.mxu0 0.0
      %3787 = vmatprep.subr.mxu0 0.0
      %3788 = vmatpush1.msra.mxu0 0.0
      %3789 = vmatprep.subr.mxu0 0.0
      %3790 = vmatpush1.msra.mxu0 0.0
      %3791 = vmatprep.subr.mxu0 0.0
      %3792 = vmatpush1.msra.mxu0 0.0
      %3793 = vmatprep.subr.mxu0 0.0
      %3794 = vmatpush1.msra.mxu0 0.0
      %3795 = vmatprep.subr.mxu0 0.0
      %3796 = vmatpush1.msra.mxu0 0.0
      %3797 = vmatprep.subr.mxu0 0.0
      %3798 = vmatpush1.msra.mxu0 0.0
      %3799 = vmatprep.subr.mxu0 0.0
      %3800 = vmatpush1.msra.mxu0 0.0
      %3801 = vmatprep.mubr.f32.mxu0 0.0
      %3802 = vmatmul.mubr.f32.gmra.mrb[0].mxu0 %v429
      %v3803 = vpop.f32.mrb[0].mxu0
      %v3804 = vadd.f32 0.0, %v3803
      %v3805 = vpop.f32.mrb[0].mxu0
      %3806 = vdwg.mxu0
      %3807 = vmatprep.subr.mxu0 0.0
      %3808 = vmatpush1.msra.mxu0 %v3314
      %3809 = vmatprep.subr.mxu0 0.0
      %3810 = vmatpush1.msra.mxu0 0.0
      %3811 = vmatprep.subr.mxu0 0.0
      %3812 = vmatpush1.msra.mxu0 0.0
      %3813 = vmatprep.subr.mxu0 0.0
      %3814 = vmatpush1.msra.mxu0 0.0
      %3815 = vmatprep.subr.mxu0 0.0
      %3816 = vmatpush1.msra.mxu0 0.0
      %3817 = vmatprep.subr.mxu0 0.0
      %3818 = vmatpush1.msra.mxu0 0.0
      %3819 = vmatprep.subr.mxu0 0.0
      %3820 = vmatpush1.msra.mxu0 0.0
      %3821 = vmatprep.subr.mxu0 0.0
      %3822 = vmatpush1.msra.mxu0 0.0
      %3823 = vmatprep.subr.mxu0 0.0
      %3824 = vmatpush1.msra.mxu0 0.0
      %3825 = vmatprep.subr.mxu0 0.0
      %3826 = vmatpush1.msra.mxu0 0.0
      %3827 = vmatprep.subr.mxu0 0.0
      %3828 = vmatpush1.msra.mxu0 0.0
      %3829 = vmatprep.subr.mxu0 0.0
      %3830 = vmatpush1.msra.mxu0 0.0
      %3831 = vmatprep.subr.mxu0 0.0
      %3832 = vmatpush1.msra.mxu0 0.0
      %3833 = vmatprep.subr.mxu0 0.0
      %3834 = vmatpush1.msra.mxu0 0.0
      %3835 = vmatprep.subr.mxu0 0.0
      %3836 = vmatpush1.msra.mxu0 0.0
      %3837 = vmatprep.subr.mxu0 0.0
      %3838 = vmatpush1.msra.mxu0 0.0
      %3839 = vmatprep.subr.mxu0 0.0
      %3840 = vmatpush1.msra.mxu0 0.0
      %3841 = vmatprep.subr.mxu0 0.0
      %3842 = vmatpush1.msra.mxu0 0.0
      %3843 = vmatprep.subr.mxu0 0.0
      %3844 = vmatpush1.msra.mxu0 0.0
      %3845 = vmatprep.subr.mxu0 0.0
      %3846 = vmatpush1.msra.mxu0 0.0
      %3847 = vmatprep.subr.mxu0 0.0
      %3848 = vmatpush1.msra.mxu0 0.0
      %3849 = vmatprep.subr.mxu0 0.0
      %3850 = vmatpush1.msra.mxu0 0.0
      %3851 = vmatprep.subr.mxu0 0.0
      %3852 = vmatpush1.msra.mxu0 0.0
      %3853 = vmatprep.subr.mxu0 0.0
      %3854 = vmatpush1.msra.mxu0 0.0
      %3855 = vmatprep.subr.mxu0 0.0
      %3856 = vmatpush1.msra.mxu0 0.0
      %3857 = vmatprep.subr.mxu0 0.0
      %3858 = vmatpush1.msra.mxu0 0.0
      %3859 = vmatprep.subr.mxu0 0.0
      %3860 = vmatpush1.msra.mxu0 0.0
      %3861 = vmatprep.subr.mxu0 0.0
      %3862 = vmatpush1.msra.mxu0 0.0
      %3863 = vmatprep.subr.mxu0 0.0
      %3864 = vmatpush1.msra.mxu0 0.0
      %3865 = vmatprep.subr.mxu0 0.0
      %3866 = vmatpush1.msra.mxu0 0.0
      %3867 = vmatprep.subr.mxu0 0.0
      %3868 = vmatpush1.msra.mxu0 0.0
      %3869 = vmatprep.subr.mxu0 0.0
      %3870 = vmatpush1.msra.mxu0 0.0
      %3871 = vmatprep.mubr.f32.mxu0 0.0
      %3872 = vmatmul.mubr.f32.gmra.mrb[0].mxu0 %v502
      %v3873 = vpop.f32.mrb[0].mxu0
      %v3874 = vadd.f32 0.0, %v3873
      %v3875 = vpop.f32.mrb[0].mxu0
      %3876 = vdwg.mxu0
      %3877 = vmatprep.subr.mxu0 0.0
      %3878 = vmatpush1.msra.mxu0 %v3384
      %3879 = vmatprep.subr.mxu0 0.0
      %3880 = vmatpush1.msra.mxu0 0.0
      %3881 = vmatprep.subr.mxu0 0.0
      %3882 = vmatpush1.msra.mxu0 0.0
      %3883 = vmatprep.subr.mxu0 0.0
      %3884 = vmatpush1.msra.mxu0 0.0
      %3885 = vmatprep.subr.mxu0 0.0
      %3886 = vmatpush1.msra.mxu0 0.0
      %3887 = vmatprep.subr.mxu0 0.0
      %3888 = vmatpush1.msra.mxu0 0.0
      %3889 = vmatprep.subr.mxu0 0.0
      %3890 = vmatpush1.msra.mxu0 0.0
      %3891 = vmatprep.subr.mxu0 0.0
      %3892 = vmatpush1.msra.mxu0 0.0
      %3893 = vmatprep.subr.mxu0 0.0
      %3894 = vmatpush1.msra.mxu0 0.0
      %3895 = vmatprep.subr.mxu0 0.0
      %3896 = vmatpush1.msra.mxu0 0.0
      %3897 = vmatprep.subr.mxu0 0.0
      %3898 = vmatpush1.msra.mxu0 0.0
      %3899 = vmatprep.subr.mxu0 0.0
      %3900 = vmatpush1.msra.mxu0 0.0
      %3901 = vmatprep.subr.mxu0 0.0
      %3902 = vmatpush1.msra.mxu0 0.0
      %3903 = vmatprep.subr.mxu0 0.0
      %3904 = vmatpush1.msra.mxu0 0.0
      %3905 = vmatprep.subr.mxu0 0.0
      %3906 = vmatpush1.msra.mxu0 0.0
      %3907 = vmatprep.subr.mxu0 0.0
      %3908 = vmatpush1.msra.mxu0 0.0
      %3909 = vmatprep.subr.mxu0 0.0
      %3910 = vmatpush1.msra.mxu0 0.0
      %3911 = vmatprep.subr.mxu0 0.0
      %3912 = vmatpush1.msra.mxu0 0.0
      %3913 = vmatprep.subr.mxu0 0.0
      %3914 = vmatpush1.msra.mxu0 0.0
      %3915 = vmatprep.subr.mxu0 0.0
      %3916 = vmatpush1.msra.mxu0 0.0
      %3917 = vmatprep.subr.mxu0 0.0
      %3918 = vmatpush1.msra.mxu0 0.0
      %3919 = vmatprep.subr.mxu0 0.0
      %3920 = vmatpush1.msra.mxu0 0.0
      %3921 = vmatprep.subr.mxu0 0.0
      %3922 = vmatpush1.msra.mxu0 0.0
      %3923 = vmatprep.subr.mxu0 0.0
      %3924 = vmatpush1.msra.mxu0 0.0
      %3925 = vmatprep.subr.mxu0 0.0
      %3926 = vmatpush1.msra.mxu0 0.0
      %3927 = vmatprep.subr.mxu0 0.0
      %3928 = vmatpush1.msra.mxu0 0.0
      %3929 = vmatprep.subr.mxu0 0.0
      %3930 = vmatpush1.msra.mxu0 0.0
      %3931 = vmatprep.subr.mxu0 0.0
      %3932 = vmatpush1.msra.mxu0 0.0
      %3933 = vmatprep.subr.mxu0 0.0
      %3934 = vmatpush1.msra.mxu0 0.0
      %3935 = vmatprep.subr.mxu0 0.0
      %3936 = vmatpush1.msra.mxu0 0.0
      %3937 = vmatprep.subr.mxu0 0.0
      %3938 = vmatpush1.msra.mxu0 0.0
      %3939 = vmatprep.subr.mxu0 0.0
      %3940 = vmatpush1.msra.mxu0 0.0
      %3941 = vmatprep.mubr.f32.mxu0 0.0
      %3942 = vmatmul.mubr.f32.gmra.mrb[0].mxu0 %v575
      %v3943 = vpop.f32.mrb[0].mxu0
      %v3944 = vadd.f32 0.0, %v3943
      %v3945 = vpop.f32.mrb[0].mxu0
      %3946 = vdwg.mxu0
      %3947 = vmatprep.subr.mxu0 0.0
      %3948 = vmatpush1.msra.mxu0 %v3454
      %3949 = vmatprep.subr.mxu0 0.0
      %3950 = vmatpush1.msra.mxu0 0.0
      %3951 = vmatprep.subr.mxu0 0.0
      %3952 = vmatpush1.msra.mxu0 0.0
      %3953 = vmatprep.subr.mxu0 0.0
      %3954 = vmatpush1.msra.mxu0 0.0
      %3955 = vmatprep.subr.mxu0 0.0
      %3956 = vmatpush1.msra.mxu0 0.0
      %3957 = vmatprep.subr.mxu0 0.0
      %3958 = vmatpush1.msra.mxu0 0.0
      %3959 = vmatprep.subr.mxu0 0.0
      %3960 = vmatpush1.msra.mxu0 0.0
      %3961 = vmatprep.subr.mxu0 0.0
      %3962 = vmatpush1.msra.mxu0 0.0
      %3963 = vmatprep.subr.mxu0 0.0
      %3964 = vmatpush1.msra.mxu0 0.0
      %3965 = vmatprep.subr.mxu0 0.0
      %3966 = vmatpush1.msra.mxu0 0.0
      %3967 = vmatprep.subr.mxu0 0.0
      %3968 = vmatpush1.msra.mxu0 0.0
      %3969 = vmatprep.subr.mxu0 0.0
      %3970 = vmatpush1.msra.mxu0 0.0
      %3971 = vmatprep.subr.mxu0 0.0
      %3972 = vmatpush1.msra.mxu0 0.0
      %3973 = vmatprep.subr.mxu0 0.0
      %3974 = vmatpush1.msra.mxu0 0.0
      %3975 = vmatprep.subr.mxu0 0.0
      %3976 = vmatpush1.msra.mxu0 0.0
      %3977 = vmatprep.subr.mxu0 0.0
      %3978 = vmatpush1.msra.mxu0 0.0
      %3979 = vmatprep.subr.mxu0 0.0
      %3980 = vmatpush1.msra.mxu0 0.0
      %3981 = vmatprep.subr.mxu0 0.0
      %3982 = vmatpush1.msra.mxu0 0.0
      %3983 = vmatprep.subr.mxu0 0.0
      %3984 = vmatpush1.msra.mxu0 0.0
      %3985 = vmatprep.subr.mxu0 0.0
      %3986 = vmatpush1.msra.mxu0 0.0
      %3987 = vmatprep.subr.mxu0 0.0
      %3988 = vmatpush1.msra.mxu0 0.0
      %3989 = vmatprep.subr.mxu0 0.0
      %3990 = vmatpush1.msra.mxu0 0.0
      %3991 = vmatprep.subr.mxu0 0.0
      %3992 = vmatpush1.msra.mxu0 0.0
      %3993 = vmatprep.subr.mxu0 0.0
      %3994 = vmatpush1.msra.mxu0 0.0
      %3995 = vmatprep.subr.mxu0 0.0
      %3996 = vmatpush1.msra.mxu0 0.0
      %3997 = vmatprep.subr.mxu0 0.0
      %3998 = vmatpush1.msra.mxu0 0.0
      %3999 = vmatprep.subr.mxu0 0.0
      %4000 = vmatpush1.msra.mxu0 0.0
      %4001 = vmatprep.subr.mxu0 0.0
      %4002 = vmatpush1.msra.mxu0 0.0
      %4003 = vmatprep.subr.mxu0 0.0
      %4004 = vmatpush1.msra.mxu0 0.0
      %4005 = vmatprep.subr.mxu0 0.0
      %4006 = vmatpush1.msra.mxu0 0.0
      %4007 = vmatprep.subr.mxu0 0.0
      %4008 = vmatpush1.msra.mxu0 0.0
      %4009 = vmatprep.subr.mxu0 0.0
      %4010 = vmatpush1.msra.mxu0 0.0
      %4011 = vmatprep.mubr.f32.mxu0 0.0
      %4012 = vmatmul.mubr.f32.gmra.mrb[0].mxu0 %v648
      %v4013 = vpop.f32.mrb[0].mxu0
      %v4014 = vadd.f32 0.0, %v4013
      %v4015 = vpop.f32.mrb[0].mxu0
      %4016 = vdwg.mxu0
      %4017 = vmatprep.subr.mxu0 0.0
      %4018 = vmatpush1.msra.mxu0 %v3524
      %4019 = vmatprep.subr.mxu0 0.0
      %4020 = vmatpush1.msra.mxu0 0.0
      %4021 = vmatprep.subr.mxu0 0.0
      %4022 = vmatpush1.msra.mxu0 0.0
      %4023 = vmatprep.subr.mxu0 0.0
      %4024 = vmatpush1.msra.mxu0 0.0
      %4025 = vmatprep.subr.mxu0 0.0
      %4026 = vmatpush1.msra.mxu0 0.0
      %4027 = vmatprep.subr.mxu0 0.0
      %4028 = vmatpush1.msra.mxu0 0.0
      %4029 = vmatprep.subr.mxu0 0.0
      %4030 = vmatpush1.msra.mxu0 0.0
      %4031 = vmatprep.subr.mxu0 0.0
      %4032 = vmatpush1.msra.mxu0 0.0
      %4033 = vmatprep.subr.mxu0 0.0
      %4034 = vmatpush1.msra.mxu0 0.0
      %4035 = vmatprep.subr.mxu0 0.0
      %4036 = vmatpush1.msra.mxu0 0.0
      %4037 = vmatprep.subr.mxu0 0.0
      %4038 = vmatpush1.msra.mxu0 0.0
      %4039 = vmatprep.subr.mxu0 0.0
      %4040 = vmatpush1.msra.mxu0 0.0
      %4041 = vmatprep.subr.mxu0 0.0
      %4042 = vmatpush1.msra.mxu0 0.0
      %4043 = vmatprep.subr.mxu0 0.0
      %4044 = vmatpush1.msra.mxu0 0.0
      %4045 = vmatprep.subr.mxu0 0.0
      %4046 = vmatpush1.msra.mxu0 0.0
      %4047 = vmatprep.subr.mxu0 0.0
      %4048 = vmatpush1.msra.mxu0 0.0
      %4049 = vmatprep.subr.mxu0 0.0
      %4050 = vmatpush1.msra.mxu0 0.0
      %4051 = vmatprep.subr.mxu0 0.0
      %4052 = vmatpush1.msra.mxu0 0.0
      %4053 = vmatprep.subr.mxu0 0.0
      %4054 = vmatpush1.msra.mxu0 0.0
      %4055 = vmatprep.subr.mxu0 0.0
      %4056 = vmatpush1.msra.mxu0 0.0
      %4057 = vmatprep.subr.mxu0 0.0
      %4058 = vmatpush1.msra.mxu0 0.0
      %4059 = vmatprep.subr.mxu0 0.0
      %4060 = vmatpush1.msra.mxu0 0.0
      %4061 = vmatprep.subr.mxu0 0.0
      %4062 = vmatpush1.msra.mxu0 0.0
      %4063 = vmatprep.subr.mxu0 0.0
      %4064 = vmatpush1.msra.mxu0 0.0
      %4065 = vmatprep.subr.mxu0 0.0
      %4066 = vmatpush1.msra.mxu0 0.0
      %4067 = vmatprep.subr.mxu0 0.0
      %4068 = vmatpush1.msra.mxu0 0.0
      %4069 = vmatprep.subr.mxu0 0.0
      %4070 = vmatpush1.msra.mxu0 0.0
      %4071 = vmatprep.subr.mxu0 0.0
      %4072 = vmatpush1.msra.mxu0 0.0
      %4073 = vmatprep.subr.mxu0 0.0
      %4074 = vmatpush1.msra.mxu0 0.0
      %4075 = vmatprep.subr.mxu0 0.0
      %4076 = vmatpush1.msra.mxu0 0.0
      %4077 = vmatprep.subr.mxu0 0.0
      %4078 = vmatpush1.msra.mxu0 0.0
      %4079 = vmatprep.subr.mxu0 0.0
      %4080 = vmatpush1.msra.mxu0 0.0
      %4081 = vmatprep.mubr.f32.mxu0 0.0
      %4082 = vmatmul.mubr.f32.gmra.mrb[0].mxu0 %v721
      %v4083 = vpop.f32.mrb[0].mxu0
      %v4084 = vadd.f32 0.0, %v4083
      %v4085 = vpop.f32.mrb[0].mxu0
      %4086 = vdwg.mxu0
      %4087 = vmatprep.subr.mxu0 0.0
      %4088 = vmatpush1.msra.mxu0 %v3594
      %4089 = vmatprep.subr.mxu0 0.0
      %4090 = vmatpush1.msra.mxu0 0.0
      %4091 = vmatprep.subr.mxu0 0.0
      %4092 = vmatpush1.msra.mxu0 0.0
      %4093 = vmatprep.subr.mxu0 0.0
      %4094 = vmatpush1.msra.mxu0 0.0
      %4095 = vmatprep.subr.mxu0 0.0
      %4096 = vmatpush1.msra.mxu0 0.0
      %4097 = vmatprep.subr.mxu0 0.0
      %4098 = vmatpush1.msra.mxu0 0.0
      %4099 = vmatprep.subr.mxu0 0.0
      %4100 = vmatpush1.msra.mxu0 0.0
      %4101 = vmatprep.subr.mxu0 0.0
      %4102 = vmatpush1.msra.mxu0 0.0
      %4103 = vmatprep.subr.mxu0 0.0
      %4104 = vmatpush1.msra.mxu0 0.0
      %4105 = vmatprep.subr.mxu0 0.0
      %4106 = vmatpush1.msra.mxu0 0.0
      %4107 = vmatprep.subr.mxu0 0.0
      %4108 = vmatpush1.msra.mxu0 0.0
      %4109 = vmatprep.subr.mxu0 0.0
      %4110 = vmatpush1.msra.mxu0 0.0
      %4111 = vmatprep.subr.mxu0 0.0
      %4112 = vmatpush1.msra.mxu0 0.0
      %4113 = vmatprep.subr.mxu0 0.0
      %4114 = vmatpush1.msra.mxu0 0.0
      %4115 = vmatprep.subr.mxu0 0.0
      %4116 = vmatpush1.msra.mxu0 0.0
      %4117 = vmatprep.subr.mxu0 0.0
      %4118 = vmatpush1.msra.mxu0 0.0
      %4119 = vmatprep.subr.mxu0 0.0
      %4120 = vmatpush1.msra.mxu0 0.0
      %4121 = vmatprep.subr.mxu0 0.0
      %4122 = vmatpush1.msra.mxu0 0.0
      %4123 = vmatprep.subr.mxu0 0.0
      %4124 = vmatpush1.msra.mxu0 0.0
      %4125 = vmatprep.subr.mxu0 0.0
      %4126 = vmatpush1.msra.mxu0 0.0
      %4127 = vmatprep.subr.mxu0 0.0
      %4128 = vmatpush1.msra.mxu0 0.0
      %4129 = vmatprep.subr.mxu0 0.0
      %4130 = vmatpush1.msra.mxu0 0.0
      %4131 = vmatprep.subr.mxu0 0.0
      %4132 = vmatpush1.msra.mxu0 0.0
      %4133 = vmatprep.subr.mxu0 0.0
      %4134 = vmatpush1.msra.mxu0 0.0
      %4135 = vmatprep.subr.mxu0 0.0
      %4136 = vmatpush1.msra.mxu0 0.0
      %4137 = vmatprep.subr.mxu0 0.0
      %4138 = vmatpush1.msra.mxu0 0.0
      %4139 = vmatprep.subr.mxu0 0.0
      %4140 = vmatpush1.msra.mxu0 0.0
      %4141 = vmatprep.subr.mxu0 0.0
      %4142 = vmatpush1.msra.mxu0 0.0
      %4143 = vmatprep.subr.mxu0 0.0
      %4144 = vmatpush1.msra.mxu0 0.0
      %4145 = vmatprep.subr.mxu0 0.0
      %4146 = vmatpush1.msra.mxu0 0.0
      %4147 = vmatprep.subr.mxu0 0.0
      %4148 = vmatpush1.msra.mxu0 0.0
      %4149 = vmatprep.subr.mxu0 0.0
      %4150 = vmatpush1.msra.mxu0 0.0
      %4151 = vmatprep.mubr.f32.mxu0 0.0
      %4152 = vmatmul.mubr.f32.gmra.mrb[0].mxu0 %v794
      %v4153 = vpop.f32.mrb[0].mxu0
      %v4154 = vadd.f32 0.0, %v4153
      %v4155 = vpop.f32.mrb[0].mxu0
      %4156 = vdwg.mxu0
      %v4157 = vmul.f32 %v3664, 2.0
      %v4158 = vmul.f32 %v3734, 2.0
      %v4159 = vmul.f32 %v3804, 2.0
      %v4160 = vmul.f32 %v3874, 2.0
      %v4161 = vmul.f32 %v3944, 2.0
      %v4162 = vmul.f32 %v4014, 2.0
      %v4163 = vmul.f32 %v4084, 2.0
      %v4164 = vmul.f32 %v4154, 2.0
      %v4165 = vsub.f32 %v4157, %v3029
      %v4166 = vsub.f32 %v4158, %v3030
      %v4167 = vsub.f32 %v4159, %v3031
      %v4168 = vsub.f32 %v4160, %v3032
      %v4169 = vsub.f32 %v4161, %v3033
      %v4170 = vsub.f32 %v4162, %v3034
      %v4171 = vsub.f32 %v4163, %v3035
      %v4172 = vsub.f32 %v4164, %v3036
      %4181 = vrot.lane.b32.xlu0 %v3104, 16
      %v4182 = vpop.permute.xlu0 %4181
      %4183 = vrot.lane.b32.xlu0 %v3174, 16
      %v4184 = vpop.permute.xlu0 %4183
      %4185 = vrot.lane.b32.xlu0 %v3244, 16
      %v4186 = vpop.permute.xlu0 %4185
      %4187 = vrot.lane.b32.xlu0 %v3314, 16
      %v4188 = vpop.permute.xlu0 %4187
      %4189 = vrot.lane.b32.xlu0 %v3384, 16
      %v4190 = vpop.permute.xlu0 %4189
      %4191 = vrot.lane.b32.xlu0 %v3454, 16
      %v4192 = vpop.permute.xlu0 %4191
      %4193 = vrot.lane.b32.xlu0 %v3524, 16
      %v4194 = vpop.permute.xlu0 %4193
      %4195 = vrot.lane.b32.xlu0 %v3594, 16
      %v4196 = vpop.permute.xlu0 %4195
      %4213 = vrot.lane.b32.xlu0 %v4165, 32
      %v4214 = vpop.permute.xlu0 %4213
      %4215 = vrot.lane.b32.xlu0 %v4166, 32
      %v4216 = vpop.permute.xlu0 %4215
      %4217 = vrot.lane.b32.xlu0 %v4167, 32
      %v4218 = vpop.permute.xlu0 %4217
      %4219 = vrot.lane.b32.xlu0 %v4168, 32
      %v4220 = vpop.permute.xlu0 %4219
      %4221 = vrot.lane.b32.xlu0 %v4169, 32
      %v4222 = vpop.permute.xlu0 %4221
      %4223 = vrot.lane.b32.xlu0 %v4170, 32
      %v4224 = vpop.permute.xlu0 %4223
      %4225 = vrot.lane.b32.xlu0 %v4171, 32
      %v4226 = vpop.permute.xlu0 %4225
      %4227 = vrot.lane.b32.xlu0 %v4172, 32
      %v4228 = vpop.permute.xlu0 %4227
      %v4237 = vsel %vm2877, %v3029, %v4182
      %v4238 = vsel %vm2877, %v3030, %v4184
      %v4239 = vsel %vm2877, %v3031, %v4186
      %v4240 = vsel %vm2877, %v3032, %v4188
      %v4241 = vsel %vm2877, %v3033, %v4190
      %v4242 = vsel %vm2877, %v3034, %v4192
      %v4243 = vsel %vm2877, %v3035, %v4194
      %v4244 = vsel %vm2877, %v3036, %v4196
      %v4245 = vsel %vm2886, %v4237, %v4214
      %v4246 = vsel %vm2886, %v4238, %v4216
      %v4247 = vsel %vm2886, %v4239, %v4218
      %v4248 = vsel %vm2886, %v4240, %v4220
      %v4249 = vsel %vm2886, %v4241, %v4222
      %v4250 = vsel %vm2886, %v4242, %v4224
      %v4251 = vsel %vm2886, %v4243, %v4226
      %v4252 = vsel %vm2886, %v4244, %v4228
      %v4254 = vsel %vm2899, %v4245, 0
      %v4257 = vsel %vm2899, %v4246, 0
      %v4260 = vsel %vm2899, %v4247, 0
      %v4263 = vsel %vm2899, %v4248, 0
      %v4266 = vsel %vm2899, %v4249, 0
      %v4269 = vsel %vm2899, %v4250, 0
      %v4272 = vsel %vm2899, %v4251, 0
      %v4275 = vsel %vm2899, %v4252, 0
      %4277 = vmatprep.subr.mxu0 0.0
      %4278 = vmatpush1.msra.mxu0 %v274
      %4279 = vmatprep.subr.mxu0 0.0
      %4280 = vmatpush1.msra.mxu0 %v275
      %4281 = vmatprep.subr.mxu0 0.0
      %4282 = vmatpush1.msra.mxu0 %v276
      %4283 = vmatprep.subr.mxu0 0.0
      %4284 = vmatpush1.msra.mxu0 %v277
      %4285 = vmatprep.subr.mxu0 0.0
      %4286 = vmatpush1.msra.mxu0 %v278
      %4287 = vmatprep.subr.mxu0 0.0
      %4288 = vmatpush1.msra.mxu0 %v279
      %4289 = vmatprep.subr.mxu0 0.0
      %4290 = vmatpush1.msra.mxu0 0.0
      %4291 = vmatprep.subr.mxu0 0.0
      %4292 = vmatpush1.msra.mxu0 0.0
      %4293 = vmatprep.subr.mxu0 0.0
      %4294 = vmatpush1.msra.mxu0 0.0
      %4295 = vmatprep.subr.mxu0 0.0
      %4296 = vmatpush1.msra.mxu0 0.0
      %4297 = vmatprep.subr.mxu0 0.0
      %4298 = vmatpush1.msra.mxu0 0.0
      %4299 = vmatprep.subr.mxu0 0.0
      %4300 = vmatpush1.msra.mxu0 0.0
      %4301 = vmatprep.subr.mxu0 0.0
      %4302 = vmatpush1.msra.mxu0 0.0
      %4303 = vmatprep.subr.mxu0 0.0
      %4304 = vmatpush1.msra.mxu0 0.0
      %4305 = vmatprep.subr.mxu0 0.0
      %4306 = vmatpush1.msra.mxu0 0.0
      %4307 = vmatprep.subr.mxu0 0.0
      %4308 = vmatpush1.msra.mxu0 0.0
      %4309 = vmatprep.subr.mxu0 0.0
      %4310 = vmatpush1.msra.mxu0 0.0
      %4311 = vmatprep.subr.mxu0 0.0
      %4312 = vmatpush1.msra.mxu0 0.0
      %4313 = vmatprep.subr.mxu0 0.0
      %4314 = vmatpush1.msra.mxu0 0.0
      %4315 = vmatprep.subr.mxu0 0.0
      %4316 = vmatpush1.msra.mxu0 0.0
      %4317 = vmatprep.subr.mxu0 0.0
      %4318 = vmatpush1.msra.mxu0 0.0
      %4319 = vmatprep.subr.mxu0 0.0
      %4320 = vmatpush1.msra.mxu0 0.0
      %4321 = vmatprep.subr.mxu0 0.0
      %4322 = vmatpush1.msra.mxu0 0.0
      %4323 = vmatprep.subr.mxu0 0.0
      %4324 = vmatpush1.msra.mxu0 0.0
      %4325 = vmatprep.subr.mxu0 0.0
      %4326 = vmatpush1.msra.mxu0 0.0
      %4327 = vmatprep.subr.mxu0 0.0
      %4328 = vmatpush1.msra.mxu0 0.0
      %4329 = vmatprep.subr.mxu0 0.0
      %4330 = vmatpush1.msra.mxu0 0.0
      %4331 = vmatprep.subr.mxu0 0.0
      %4332 = vmatpush1.msra.mxu0 0.0
      %4333 = vmatprep.subr.mxu0 0.0
      %4334 = vmatpush1.msra.mxu0 0.0
      %4335 = vmatprep.subr.mxu0 0.0
      %4336 = vmatpush1.msra.mxu0 0.0
      %4337 = vmatprep.subr.mxu0 0.0
      %4338 = vmatpush1.msra.mxu0 0.0
      %4339 = vmatprep.subr.mxu0 0.0
      %4340 = vmatpush1.msra.mxu0 0.0
      %4341 = vmatprep.mubr.f32.mxu0 0.0
      %4342 = vmatmul.mubr.f32.gmra.mrb[0].mxu0 %v4254
      %v4343 = vpop.f32.mrb[0].mxu0
      %v4344 = vadd.f32 0.0, %v4343
      %v4345 = vpop.f32.mrb[0].mxu0
      %4346 = vmatprep.mubr.f32.mxu0 0.0
      %4347 = vmatmul.mubr.f32.gmra.mrb[0].mxu0 %v4257
      %v4348 = vpop.f32.mrb[0].mxu0
      %v4349 = vadd.f32 0.0, %v4348
      %v4350 = vpop.f32.mrb[0].mxu0
      %4351 = vmatprep.mubr.f32.mxu0 0.0
      %4352 = vmatmul.mubr.f32.gmra.mrb[0].mxu0 %v4260
      %v4353 = vpop.f32.mrb[0].mxu0
      %v4354 = vadd.f32 0.0, %v4353
      %v4355 = vpop.f32.mrb[0].mxu0
      %4356 = vmatprep.mubr.f32.mxu0 0.0
      %4357 = vmatmul.mubr.f32.gmra.mrb[0].mxu0 %v4263
      %v4358 = vpop.f32.mrb[0].mxu0
      %v4359 = vadd.f32 0.0, %v4358
      %v4360 = vpop.f32.mrb[0].mxu0
      %4361 = vmatprep.mubr.f32.mxu0 0.0
      %4362 = vmatmul.mubr.f32.gmra.mrb[0].mxu0 %v4266
      %v4363 = vpop.f32.mrb[0].mxu0
      %v4364 = vadd.f32 0.0, %v4363
      %v4365 = vpop.f32.mrb[0].mxu0
      %4366 = vmatprep.mubr.f32.mxu0 0.0
      %4367 = vmatmul.mubr.f32.gmra.mrb[0].mxu0 %v4269
      %v4368 = vpop.f32.mrb[0].mxu0
      %v4369 = vadd.f32 0.0, %v4368
      %v4370 = vpop.f32.mrb[0].mxu0
      %4371 = vmatprep.mubr.f32.mxu0 0.0
      %4372 = vmatmul.mubr.f32.gmra.mrb[0].mxu0 %v4272
      %v4373 = vpop.f32.mrb[0].mxu0
      %v4374 = vadd.f32 0.0, %v4373
      %v4375 = vpop.f32.mrb[0].mxu0
      %4376 = vmatprep.mubr.f32.mxu0 0.0
      %4377 = vmatmul.mubr.f32.gmra.mrb[0].mxu0 %v4275
      %v4378 = vpop.f32.mrb[0].mxu0
      %v4379 = vadd.f32 0.0, %v4378
      %v4380 = vpop.f32.mrb[0].mxu0
      %4381 = vdwg.mxu0
      %v4383 = vrot.slane %v280, 2
      %s4384 = vtos %v4383
      %v4385 = vstv %s4384
      %v4387 = vadd.f32 %v4344, %v4385
      %v4388 = vadd.f32 %v4349, %v4385
      %v4389 = vadd.f32 %v4354, %v4385
      %v4390 = vadd.f32 %v4359, %v4385
      %v4391 = vadd.f32 %v4364, %v4385
      %v4392 = vadd.f32 %v4369, %v4385
      %v4393 = vadd.f32 %v4374, %v4385
      %v4394 = vadd.f32 %v4379, %v4385
      %4403 = vset.pattern.permute.xlu0 0
      %4404 = vperm.xlu0 %4403, %v4387
      %v4405 = vpop.permute.xlu0 %4404
      %4406 = vset.pattern.permute.xlu0 0
      %4407 = vperm.xlu0 %4406, %v4388
      %v4408 = vpop.permute.xlu0 %4407
      %4409 = vset.pattern.permute.xlu0 0
      %4410 = vperm.xlu0 %4409, %v4389
      %v4411 = vpop.permute.xlu0 %4410
      %4412 = vset.pattern.permute.xlu0 0
      %4413 = vperm.xlu0 %4412, %v4390
      %v4414 = vpop.permute.xlu0 %4413
      %4415 = vset.pattern.permute.xlu0 0
      %4416 = vperm.xlu0 %4415, %v4391
      %v4417 = vpop.permute.xlu0 %4416
      %4418 = vset.pattern.permute.xlu0 0
      %4419 = vperm.xlu0 %4418, %v4392
      %v4420 = vpop.permute.xlu0 %4419
      %4421 = vset.pattern.permute.xlu0 0
      %4422 = vperm.xlu0 %4421, %v4393
      %v4423 = vpop.permute.xlu0 %4422
      %4424 = vset.pattern.permute.xlu0 0
      %4425 = vperm.xlu0 %4424, %v4394
      %v4426 = vpop.permute.xlu0 %4425
      %v4427 = vlaneseq
      %v4428 = vand.u32 %v4427, 127
      %v4429 = vlaneseq
      %v4430 = vshrl.u32 %v4429, 7
      %v4431 = vsub.s32 %v4428, %v4430
      %v4432 = vrot.slane %v4405, %v4431
      %v4433 = vlaneseq
      %v4434 = vshrl.u32 %v4433, 7
      %v4435 = vsub.s32 %v4428, %v4434
      %v4436 = vrot.slane %v4408, %v4435
      %v4437 = vlaneseq
      %v4438 = vshrl.u32 %v4437, 7
      %v4439 = vsub.s32 %v4428, %v4438
      %v4440 = vrot.slane %v4411, %v4439
      %v4441 = vlaneseq
      %v4442 = vshrl.u32 %v4441, 7
      %v4443 = vsub.s32 %v4428, %v4442
      %v4444 = vrot.slane %v4414, %v4443
      %v4445 = vlaneseq
      %v4446 = vshrl.u32 %v4445, 7
      %v4447 = vsub.s32 %v4428, %v4446
      %v4448 = vrot.slane %v4417, %v4447
      %v4449 = vlaneseq
      %v4450 = vshrl.u32 %v4449, 7
      %v4451 = vsub.s32 %v4428, %v4450
      %v4452 = vrot.slane %v4420, %v4451
      %v4453 = vlaneseq
      %v4454 = vshrl.u32 %v4453, 7
      %v4455 = vsub.s32 %v4428, %v4454
      %v4456 = vrot.slane %v4423, %v4455
      %v4457 = vlaneseq
      %v4458 = vshrl.u32 %v4457, 7
      %v4459 = vsub.s32 %v4428, %v4458
      %v4460 = vrot.slane %v4426, %v4459
      %vm4461 = vcmask 1041409
      %v4462 = vsel %vm4461, %v4436, %v4432
      %vm4463 = vcmask 1042434
      %v4464 = vsel %vm4463, %v4440, %v4462
      %vm4465 = vcmask 1043459
      %v4466 = vsel %vm4465, %v4444, %v4464
      %vm4467 = vcmask 1044484
      %v4468 = vsel %vm4467, %v4448, %v4466
      %vm4469 = vcmask 1045509
      %v4470 = vsel %vm4469, %v4452, %v4468
      %vm4471 = vcmask 1046534
      %v4472 = vsel %vm4471, %v4456, %v4470
      %vm4473 = vcmask 1047559
      %v4474 = vsel %vm4473, %v4460, %v4472
      %v4476 = vsel %vm281, %v4474, -inf
      %4477 = vmax.xlane.f32.xlu0 %v4476
      %v4478 = vpop.xlane.xlu0 %4477
      %v4480 = vlaneseq
      %v4481 = vshrl.u32 %v4480, 7
      %v4482 = vsub.s32 0, %v4481
      %v4483 = vrot.slane %v4478, %v4482
      %v4484 = vlaneseq
      %v4485 = vshrl.u32 %v4484, 7
      %v4486 = vsub.s32 1, %v4485
      %v4487 = vrot.slane %v4478, %v4486
      %v4488 = vlaneseq
      %v4489 = vshrl.u32 %v4488, 7
      %v4490 = vsub.s32 2, %v4489
      %v4491 = vrot.slane %v4478, %v4490
      %v4492 = vlaneseq
      %v4493 = vshrl.u32 %v4492, 7
      %v4494 = vsub.s32 3, %v4493
      %v4495 = vrot.slane %v4478, %v4494
      %v4496 = vlaneseq
      %v4497 = vshrl.u32 %v4496, 7
      %v4498 = vsub.s32 4, %v4497
      %v4499 = vrot.slane %v4478, %v4498
      %v4500 = vlaneseq
      %v4501 = vshrl.u32 %v4500, 7
      %v4502 = vsub.s32 5, %v4501
      %v4503 = vrot.slane %v4478, %v4502
      %v4504 = vlaneseq
      %v4505 = vshrl.u32 %v4504, 7
      %v4506 = vsub.s32 6, %v4505
      %v4507 = vrot.slane %v4478, %v4506
      %v4508 = vlaneseq
      %v4509 = vshrl.u32 %v4508, 7
      %v4510 = vsub.s32 7, %v4509
      %v4511 = vrot.slane %v4478, %v4510
      %v4520 = vsub.f32 %v4387, %v4483
      %v4521 = vsub.f32 %v4388, %v4487
      %v4522 = vsub.f32 %v4389, %v4491
      %v4523 = vsub.f32 %v4390, %v4495
      %v4524 = vsub.f32 %v4391, %v4499
      %v4525 = vsub.f32 %v4392, %v4503
      %v4526 = vsub.f32 %v4393, %v4507
      %v4527 = vsub.f32 %v4394, %v4511
      %v4528 = vmul.f32 %v4520, 1.442695
      %v4529 = vpow.pop %v4528
      %v4530 = vmul.f32 %v4521, 1.442695
      %v4531 = vpow.pop %v4530
      %v4532 = vmul.f32 %v4522, 1.442695
      %v4533 = vpow.pop %v4532
      %v4534 = vmul.f32 %v4523, 1.442695
      %v4535 = vpow.pop %v4534
      %v4536 = vmul.f32 %v4524, 1.442695
      %v4537 = vpow.pop %v4536
      %v4538 = vmul.f32 %v4525, 1.442695
      %v4539 = vpow.pop %v4538
      %v4540 = vmul.f32 %v4526, 1.442695
      %v4541 = vpow.pop %v4540
      %v4542 = vmul.f32 %v4527, 1.442695
      %v4543 = vpow.pop %v4542
      %4552 = vset.pattern.permute.xlu0 0
      %4553 = vperm.xlu0 %4552, %v4529
      %v4554 = vpop.permute.xlu0 %4553
      %4555 = vset.pattern.permute.xlu0 0
      %4556 = vperm.xlu0 %4555, %v4531
      %v4557 = vpop.permute.xlu0 %4556
      %4558 = vset.pattern.permute.xlu0 0
      %4559 = vperm.xlu0 %4558, %v4533
      %v4560 = vpop.permute.xlu0 %4559
      %4561 = vset.pattern.permute.xlu0 0
      %4562 = vperm.xlu0 %4561, %v4535
      %v4563 = vpop.permute.xlu0 %4562
      %4564 = vset.pattern.permute.xlu0 0
      %4565 = vperm.xlu0 %4564, %v4537
      %v4566 = vpop.permute.xlu0 %4565
      %4567 = vset.pattern.permute.xlu0 0
      %4568 = vperm.xlu0 %4567, %v4539
      %v4569 = vpop.permute.xlu0 %4568
      %4570 = vset.pattern.permute.xlu0 0
      %4571 = vperm.xlu0 %4570, %v4541
      %v4572 = vpop.permute.xlu0 %4571
      %4573 = vset.pattern.permute.xlu0 0
      %4574 = vperm.xlu0 %4573, %v4543
      %v4575 = vpop.permute.xlu0 %4574
      %v4576 = vlaneseq
      %v4577 = vshrl.u32 %v4576, 7
      %v4578 = vsub.s32 %v4428, %v4577
      %v4579 = vrot.slane %v4554, %v4578
      %v4580 = vlaneseq
      %v4581 = vshrl.u32 %v4580, 7
      %v4582 = vsub.s32 %v4428, %v4581
      %v4583 = vrot.slane %v4557, %v4582
      %v4584 = vlaneseq
      %v4585 = vshrl.u32 %v4584, 7
      %v4586 = vsub.s32 %v4428, %v4585
      %v4587 = vrot.slane %v4560, %v4586
      %v4588 = vlaneseq
      %v4589 = vshrl.u32 %v4588, 7
      %v4590 = vsub.s32 %v4428, %v4589
      %v4591 = vrot.slane %v4563, %v4590
      %v4592 = vlaneseq
      %v4593 = vshrl.u32 %v4592, 7
      %v4594 = vsub.s32 %v4428, %v4593
      %v4595 = vrot.slane %v4566, %v4594
      %v4596 = vlaneseq
      %v4597 = vshrl.u32 %v4596, 7
      %v4598 = vsub.s32 %v4428, %v4597
      %v4599 = vrot.slane %v4569, %v4598
      %v4600 = vlaneseq
      %v4601 = vshrl.u32 %v4600, 7
      %v4602 = vsub.s32 %v4428, %v4601
      %v4603 = vrot.slane %v4572, %v4602
      %v4604 = vlaneseq
      %v4605 = vshrl.u32 %v4604, 7
      %v4606 = vsub.s32 %v4428, %v4605
      %v4607 = vrot.slane %v4575, %v4606
      %v4608 = vsel %vm4461, %v4583, %v4579
      %v4609 = vsel %vm4463, %v4587, %v4608
      %v4610 = vsel %vm4465, %v4591, %v4609
      %v4611 = vsel %vm4467, %v4595, %v4610
      %v4612 = vsel %vm4469, %v4599, %v4611
      %v4613 = vsel %vm4471, %v4603, %v4612
      %v4614 = vsel %vm4473, %v4607, %v4613
      %v4616 = vsel %vm281, %v4614, 0.0
      %4617 = vadd.xlane.f32.xlu0 %v4616
      %v4618 = vpop.xlane.xlu0 %4617
      %v4620 = vlaneseq
      %v4621 = vshrl.u32 %v4620, 7
      %v4622 = vsub.s32 0, %v4621
      %v4623 = vrot.slane %v4618, %v4622
      %v4624 = vlaneseq
      %v4625 = vshrl.u32 %v4624, 7
      %v4626 = vsub.s32 1, %v4625
      %v4627 = vrot.slane %v4618, %v4626
      %v4628 = vlaneseq
      %v4629 = vshrl.u32 %v4628, 7
      %v4630 = vsub.s32 2, %v4629
      %v4631 = vrot.slane %v4618, %v4630
      %v4632 = vlaneseq
      %v4633 = vshrl.u32 %v4632, 7
      %v4634 = vsub.s32 3, %v4633
      %v4635 = vrot.slane %v4618, %v4634
      %v4636 = vlaneseq
      %v4637 = vshrl.u32 %v4636, 7
      %v4638 = vsub.s32 4, %v4637
      %v4639 = vrot.slane %v4618, %v4638
      %v4640 = vlaneseq
      %v4641 = vshrl.u32 %v4640, 7
      %v4642 = vsub.s32 5, %v4641
      %v4643 = vrot.slane %v4618, %v4642
      %v4644 = vlaneseq
      %v4645 = vshrl.u32 %v4644, 7
      %v4646 = vsub.s32 6, %v4645
      %v4647 = vrot.slane %v4618, %v4646
      %v4648 = vlaneseq
      %v4649 = vshrl.u32 %v4648, 7
      %v4650 = vsub.s32 7, %v4649
      %v4651 = vrot.slane %v4618, %v4650
      %v4660 = vrcp.pop %v4623
      %v4661 = vmul.f32 %v4529, %v4660
      %v4662 = vrcp.pop %v4627
      %v4663 = vmul.f32 %v4531, %v4662
      %v4664 = vrcp.pop %v4631
      %v4665 = vmul.f32 %v4533, %v4664
      %v4666 = vrcp.pop %v4635
      %v4667 = vmul.f32 %v4535, %v4666
      %v4668 = vrcp.pop %v4639
      %v4669 = vmul.f32 %v4537, %v4668
      %v4670 = vrcp.pop %v4643
      %v4671 = vmul.f32 %v4539, %v4670
      %v4672 = vrcp.pop %v4647
      %v4673 = vmul.f32 %v4541, %v4672
      %v4674 = vrcp.pop %v4651
      %v4675 = vmul.f32 %v4543, %v4674
      %4684 = vset.pattern.permute.xlu0 1
      %4685 = vperm.xlu0 %4684, %v4344
      %v4686 = vpop.permute.xlu0 %4685
      %4687 = vset.pattern.permute.xlu0 1
      %4688 = vperm.xlu0 %4687, %v4349
      %v4689 = vpop.permute.xlu0 %4688
      %4690 = vset.pattern.permute.xlu0 1
      %4691 = vperm.xlu0 %4690, %v4354
      %v4692 = vpop.permute.xlu0 %4691
      %4693 = vset.pattern.permute.xlu0 1
      %4694 = vperm.xlu0 %4693, %v4359
      %v4695 = vpop.permute.xlu0 %4694
      %4696 = vset.pattern.permute.xlu0 1
      %4697 = vperm.xlu0 %4696, %v4364
      %v4698 = vpop.permute.xlu0 %4697
      %4699 = vset.pattern.permute.xlu0 1
      %4700 = vperm.xlu0 %4699, %v4369
      %v4701 = vpop.permute.xlu0 %4700
      %4702 = vset.pattern.permute.xlu0 1
      %4703 = vperm.xlu0 %4702, %v4374
      %v4704 = vpop.permute.xlu0 %4703
      %4705 = vset.pattern.permute.xlu0 1
      %4706 = vperm.xlu0 %4705, %v4379
      %v4707 = vpop.permute.xlu0 %4706
      %v4708 = vlaneseq
      %v4709 = vshrl.u32 %v4708, 7
      %v4710 = vsub.s32 %v4428, %v4709
      %v4711 = vrot.slane %v4686, %v4710
      %v4712 = vlaneseq
      %v4713 = vshrl.u32 %v4712, 7
      %v4714 = vsub.s32 %v4428, %v4713
      %v4715 = vrot.slane %v4689, %v4714
      %v4716 = vlaneseq
      %v4717 = vshrl.u32 %v4716, 7
      %v4718 = vsub.s32 %v4428, %v4717
      %v4719 = vrot.slane %v4692, %v4718
      %v4720 = vlaneseq
      %v4721 = vshrl.u32 %v4720, 7
      %v4722 = vsub.s32 %v4428, %v4721
      %v4723 = vrot.slane %v4695, %v4722
      %v4724 = vlaneseq
      %v4725 = vshrl.u32 %v4724, 7
      %v4726 = vsub.s32 %v4428, %v4725
      %v4727 = vrot.slane %v4698, %v4726
      %v4728 = vlaneseq
      %v4729 = vshrl.u32 %v4728, 7
      %v4730 = vsub.s32 %v4428, %v4729
      %v4731 = vrot.slane %v4701, %v4730
      %v4732 = vlaneseq
      %v4733 = vshrl.u32 %v4732, 7
      %v4734 = vsub.s32 %v4428, %v4733
      %v4735 = vrot.slane %v4704, %v4734
      %v4736 = vlaneseq
      %v4737 = vshrl.u32 %v4736, 7
      %v4738 = vsub.s32 %v4428, %v4737
      %v4739 = vrot.slane %v4707, %v4738
      %v4740 = vsel %vm4461, %v4715, %v4711
      %v4741 = vsel %vm4463, %v4719, %v4740
      %v4742 = vsel %vm4465, %v4723, %v4741
      %v4743 = vsel %vm4467, %v4727, %v4742
      %v4744 = vsel %vm4469, %v4731, %v4743
      %v4745 = vsel %vm4471, %v4735, %v4744
      %v4746 = vsel %vm4473, %v4739, %v4745
      %v4748 = vsel %vm281, %v4746, 0.0
      %4749 = vadd.xlane.f32.xlu0 %v4748
      %v4750 = vpop.xlane.xlu0 %4749
      %v4751 = vrcp.pop 8.0
      %v4752 = vmul.f32 %v4750, %v4751
      %v4753 = vlaneseq
      %v4754 = vshrl.u32 %v4753, 7
      %v4755 = vsub.s32 2, %v4754
      %v4756 = vrot.slane %v280, %v4755
      %v4757 = vadd.f32 %v4752, %v4756
      %4766 = vset.pattern.permute.xlu0 0
      %4767 = vperm.xlu0 %4766, %v4661
      %v4768 = vpop.permute.xlu0 %4767
      %4769 = vset.pattern.permute.xlu0 0
      %4770 = vperm.xlu0 %4769, %v4663
      %v4771 = vpop.permute.xlu0 %4770
      %4772 = vset.pattern.permute.xlu0 0
      %4773 = vperm.xlu0 %4772, %v4665
      %v4774 = vpop.permute.xlu0 %4773
      %4775 = vset.pattern.permute.xlu0 0
      %4776 = vperm.xlu0 %4775, %v4667
      %v4777 = vpop.permute.xlu0 %4776
      %4778 = vset.pattern.permute.xlu0 0
      %4779 = vperm.xlu0 %4778, %v4669
      %v4780 = vpop.permute.xlu0 %4779
      %4781 = vset.pattern.permute.xlu0 0
      %4782 = vperm.xlu0 %4781, %v4671
      %v4783 = vpop.permute.xlu0 %4782
      %4784 = vset.pattern.permute.xlu0 0
      %4785 = vperm.xlu0 %4784, %v4673
      %v4786 = vpop.permute.xlu0 %4785
      %4787 = vset.pattern.permute.xlu0 0
      %4788 = vperm.xlu0 %4787, %v4675
      %v4789 = vpop.permute.xlu0 %4788
      %v4790 = vlaneseq
      %v4791 = vshrl.u32 %v4790, 7
      %v4792 = vsub.s32 %v4428, %v4791
      %v4793 = vrot.slane %v4768, %v4792
      %v4794 = vlaneseq
      %v4795 = vshrl.u32 %v4794, 7
      %v4796 = vsub.s32 %v4428, %v4795
      %v4797 = vrot.slane %v4771, %v4796
      %v4798 = vlaneseq
      %v4799 = vshrl.u32 %v4798, 7
      %v4800 = vsub.s32 %v4428, %v4799
      %v4801 = vrot.slane %v4774, %v4800
      %v4802 = vlaneseq
      %v4803 = vshrl.u32 %v4802, 7
      %v4804 = vsub.s32 %v4428, %v4803
      %v4805 = vrot.slane %v4777, %v4804
      %v4806 = vlaneseq
      %v4807 = vshrl.u32 %v4806, 7
      %v4808 = vsub.s32 %v4428, %v4807
      %v4809 = vrot.slane %v4780, %v4808
      %v4810 = vlaneseq
      %v4811 = vshrl.u32 %v4810, 7
      %v4812 = vsub.s32 %v4428, %v4811
      %v4813 = vrot.slane %v4783, %v4812
      %v4814 = vlaneseq
      %v4815 = vshrl.u32 %v4814, 7
      %v4816 = vsub.s32 %v4428, %v4815
      %v4817 = vrot.slane %v4786, %v4816
      %v4818 = vlaneseq
      %v4819 = vshrl.u32 %v4818, 7
      %v4820 = vsub.s32 %v4428, %v4819
      %v4821 = vrot.slane %v4789, %v4820
      %v4822 = vsel %vm4461, %v4797, %v4793
      %v4823 = vsel %vm4463, %v4801, %v4822
      %v4824 = vsel %vm4465, %v4805, %v4823
      %v4825 = vsel %vm4467, %v4809, %v4824
      %v4826 = vsel %vm4469, %v4813, %v4825
      %v4827 = vsel %vm4471, %v4817, %v4826
      %v4828 = vsel %vm4473, %v4821, %v4827
      %4831 = vrot.lane.b32.xlu0 %v4757, 7
      %v4832 = vpop.permute.xlu0 %4831
      %v4834 = vsel %vm281, %v4828, %v4832
      %vm4835 = vcmask 72704
      %v4836 = vsel %vm4835, %v4834, 0.0
      %4837 = vst [vmem:[%s241] sm:$0xff] %v4836
      %p4838 = scmp.lt.s32.totalorder %s15, 7
      %s4839 = scalar_select %p4838, %s15, 7
      %s4840 = smul.addr %s4839, 8
      %s4841 = scalar_lea.vmem %s4, %s4840
      // Predicated region
      $region37: #{gnn_forward.1} parent=35 // pred_check
        %p4842 = pneg %p132
      $region38: #{gnn_forward.1} parent=35 // pred_check_branch
        %4844 = sbr.rel (%p4842) target = $region40
      $region39: #{gnn_forward.1} parent=35 // pred_region
        _
      $region40: #{gnn_forward.1} parent=35 // pred_fallthru
        _
    $region36: #{gnn_forward.1} parent=5 // pred_fallthru
      _
    %p4845 = scmp.le.s32.totalorder 2, %s10
    // Predicated region
    $region41: #{gnn_forward.1} parent=5 // pred_check
      %p4846 = pneg %p4845
    $region42: #{gnn_forward.1} parent=5 // pred_check_branch
      %4848 = sbr.rel (%p4846) target = $region44
    $region43: #{gnn_forward.1} parent=5 // pred_region
      %s4849 = ssub.s32 %s10, 2
      // Predicated region
      $region45: #{gnn_forward.1} parent=43 // pred_check
        %p4850 = pneg %p138
      $region46: #{gnn_forward.1} parent=43 // pred_check_branch
        %4852 = sbr.rel (%p4850) target = $region48
      $region47: #{gnn_forward.1} parent=43 // pred_region
        %p4853 = scmp.lt.s32.totalorder %s16, 7
        %s4854 = scalar_select %p4853, %s16, 7
        %s4855 = smul.addr %s4854, 8
        %s4856 = scalar_lea.vmem %s4, %s4855
      $region48: #{gnn_forward.1} parent=43 // pred_fallthru
        _
    $region44: #{gnn_forward.1} parent=5 // pred_fallthru
      _
  $region6: #{gnn_forward.1} parent=0 // loop_footer
    %s14 = sadd.s32 1, %s10
  $region7: #{gnn_forward.1} parent=0 // loop_footer_branch
    %9 = sbr.rel target = $region3
  $region8: #{gnn_forward.1} parent=0 // loop_exit
    _

</llo_original>
